<compile_context>
chip_gen: v6e
topology: v6e:2x2x1
jax: 0.10.0
libtpu: 0.0.40
codegen_flags: <defaults>
</compile_context>

<pallas_src>
import functools

import jax
import jax.numpy as jnp
import numpy as np
from jax.experimental import pallas as pl
from jax.experimental.pallas import tpu as pltpu


def _round_up(x, m):
    return ((x + m - 1) // m) * m


@functools.lru_cache(maxsize=1)
def _vmem_capacity_bytes():
    """Physical VMEM per core; used only to pick tile sizes / VMEM limits."""
    try:
        return int(pltpu.get_tpu_info().vmem_capacity_bytes)
    except Exception:
        return 64 << 20          # conservative (v7x-sized) fallback


def _mosaic_params(dimension_semantics, vmem_bytes_estimate):
    limit = min(int(1.5 * vmem_bytes_estimate) + (16 << 20),
                _vmem_capacity_bytes())
    return pltpu.CompilerParams(dimension_semantics=dimension_semantics,
                                vmem_limit_bytes=limit)


# ---------------------------------------------------------------------------
# Parallel tiled matmul + bias:  y[M, N] = x[M, K] @ w[K, N] + b[1, N]
# K-blocked with a f32 VMEM accumulator; M/N axes fully parallel.
# ---------------------------------------------------------------------------
def _matmul_bias_kernel(x_ref, w_ref, b_ref, o_ref, acc_ref):
    @pl.when(pl.program_id(2) == 0)
    def _():
        acc_ref[...] = jnp.zeros_like(acc_ref)

    acc_ref[...] += jnp.dot(x_ref[...], w_ref[...],
                            preferred_element_type=jnp.float32)

    @pl.when(pl.program_id(2) == pl.num_programs(2) - 1)
    def _():
        o_ref[...] = (acc_ref[...] + b_ref[...]).astype(o_ref.dtype)


def matmul_bias(x, w, b, *, out_dtype=jnp.float32, tm=None, tn=512, tk=512):
    M, K = x.shape
    Kw, N = w.shape
    assert K == Kw and b.shape == (1, N)

    if tm is None:
        # 128 MiB parts (v5e/v6e) take a taller row tile; 64 MiB v7x stays at
        # 512 (safe together with the explicit K blocking below).
        tm = 1024 if _vmem_capacity_bytes() >= (96 << 20) else 512

    tm = min(tm, _round_up(M, 8))        # sublane-aligned row tile
    tn = min(tn, _round_up(N, 128))      # lane-aligned column tile
    tk = min(tk, _round_up(K, 128))      # lane-aligned contraction tile
    Mp, Np, Kp = _round_up(M, tm), _round_up(N, tn), _round_up(K, tk)

    if (Mp, Kp) != (M, K):
        x = jnp.pad(x, ((0, Mp - M), (0, Kp - K)))
    if (Kp, Np) != (K, N):
        w = jnp.pad(w, ((0, Kp - K), (0, Np - N)))
    if Np != N:
        b = jnp.pad(b, ((0, 0), (0, Np - N)))

    bx = jnp.dtype(x.dtype).itemsize
    bw = jnp.dtype(w.dtype).itemsize
    bo = jnp.dtype(out_dtype).itemsize
    vmem_est = (2 * (tm * tk * bx + tk * tn * bw + 8 * tn * 4)
                + 2 * tm * tn * bo + tm * tn * 4)

    out = pl.pallas_call(
        _matmul_bias_kernel,
        out_shape=jax.ShapeDtypeStruct((Mp, Np), out_dtype),
        grid=(Mp // tm, Np // tn, Kp // tk),
        in_specs=[
            pl.BlockSpec((tm, tk), lambda i, j, k: (i, k)),
            pl.BlockSpec((tk, tn), lambda i, j, k: (k, j)),
            pl.BlockSpec((1, tn), lambda i, j, k: (0, j)),
        ],
        out_specs=pl.BlockSpec((tm, tn), lambda i, j, k: (i, j)),
        scratch_shapes=[pltpu.VMEM((tm, tn), jnp.float32)],
        compiler_params=_mosaic_params(("parallel", "parallel", "arbitrary"),
                                       vmem_est),
    )(x, w, b)
    return out[:M, :N]


# ---------------------------------------------------------------------------
# Sequential GRU recurrence (hidden->hidden part only).
# Grid = (batch blocks [parallel], time blocks [arbitrary, innermost]).
# ---------------------------------------------------------------------------
def _gru_recurrence_kernel(gx_ref, h0_ref, w_rz_ref, w_n_ref, b_n_ref,
                           h_out_ref, h_scratch):
    """gx_ref    : (tt, bt, 3*Hp)  precomputed x@W_ih^T + folded biases,
                                   gate order [r, z, n], 128-aligned slots
       h0_ref    : (bt, Hp) f32    initial hidden state for this batch block
       w_rz_ref  : (Hp, 2*Hp)      hidden->[r|z] weights (transposed)
       w_n_ref   : (Hp, Hp)        hidden->n weights (transposed)
       b_n_ref   : (1, Hp) f32     b_hh_n (must stay inside the r*(...) term)
       h_out_ref : (tt, bt, Hp)    hidden states for this block
       h_scratch : VMEM (bt, Hp) f32  state carried across time blocks
    """
    bt, Hp = h0_ref.shape
    tt = gx_ref.shape[0]

    @pl.when(pl.program_id(1) == 0)          # first time block of this batch
    def _():
        h_scratch[...] = h0_ref[...]

    # Constant per grid step — load once, outside the unrolled loop.
    w_rz = w_rz_ref[...]
    w_n = w_n_ref[...]
    # Hoist the bias broadcast (JAX does not CSE broadcast_in_dim).
    b_n = jnp.broadcast_to(b_n_ref[...], (bt, Hp))

    h = h_scratch[...]
    # Fully unrolled static loop over the time block; static leading-axis
    # indices are free.  Gate math stays in f32 (v5e VPU/EUP have no bf16).
    for i in range(tt):
        gx = gx_ref[i].astype(jnp.float32)
        hc = h.astype(w_rz.dtype)
        # Split the h->gates matmul so the r/z sigmoids (EUP) overlap with the
        # MXU computing the n-gate product.
        g_rz = jnp.dot(hc, w_rz, preferred_element_type=jnp.float32)
        g_n = jnp.dot(hc, w_n, preferred_element_type=jnp.float32)
        r = jax.nn.sigmoid(gx[:, 0 * Hp:1 * Hp] + g_rz[:, 0 * Hp:1 * Hp])
        z = jax.nn.sigmoid(gx[:, 1 * Hp:2 * Hp] + g_rz[:, 1 * Hp:2 * Hp])
        n = jnp.tanh(gx[:, 2 * Hp:3 * Hp] + r * (g_n + b_n))
        h = n + z * (h - n)                  # == (1-z)*n + z*h, one fewer vmul
        h_out_ref[i] = h.astype(h_out_ref.dtype)

    h_scratch[...] = h


def gru_recurrence(gx_all, h0, w_rz_t, w_n_t, b_n, *, tt, bt, out_dtype,
                   single_buffer_constants=True):
    Tp, Bp, G = gx_all.shape
    Hp = h0.shape[-1]
    # Single-buffer the constant-index weight blocks (saves VMEM on v7x).
    const_kw = ({"pipeline_mode": pl.Buffered(1)}
                if single_buffer_constants else {})

    bg = jnp.dtype(gx_all.dtype).itemsize
    bw = jnp.dtype(w_rz_t.dtype).itemsize
    bo = jnp.dtype(out_dtype).itemsize
    nbuf = 1 if single_buffer_constants else 2
    vmem_est = (2 * tt * bt * G * bg + 2 * tt * bt * Hp * bo
                + 2 * bt * Hp * 4 + nbuf * (3 * Hp * Hp * bw + 8 * Hp * 4)
                + bt * Hp * 4)

    return pl.pallas_call(
        _gru_recurrence_kernel,
        out_shape=jax.ShapeDtypeStruct((Tp, Bp, Hp), out_dtype),
        grid=(Bp // bt, Tp // tt),
        in_specs=[
            pl.BlockSpec((tt, bt, G), lambda b, t: (t, b, 0)),
            pl.BlockSpec((bt, Hp), lambda b, t: (b, 0)),
            pl.BlockSpec((Hp, 2 * Hp), lambda b, t: (0, 0), **const_kw),
            pl.BlockSpec((Hp, Hp), lambda b, t: (0, 0), **const_kw),
            pl.BlockSpec((1, Hp), lambda b, t: (0, 0), **const_kw),
        ],
        out_specs=pl.BlockSpec((tt, bt, Hp), lambda b, t: (t, b, 0)),
        scratch_shapes=[pltpu.VMEM((bt, Hp), jnp.float32)],
        compiler_params=_mosaic_params(
            # Batch blocks are independent -> "parallel" (uses both v7x
            # TensorCores).  Time MUST stay "arbitrary" (innermost): the
            # hidden state is carried across time blocks in h_scratch.
            ("parallel", "arbitrary"), vmem_est),
    )(gx_all, h0, w_rz_t, w_n_t, b_n)


# ---------------------------------------------------------------------------
# Full training-mode forward.
# ---------------------------------------------------------------------------
def decoder_forward(params, hidden, sequence, *, weight_dtype=jnp.bfloat16,
                    time_block=32, batch_block=128,
                    single_buffer_constants=True):
    """Training-mode Decoder forward.  Returns logits of shape (B, T, V)."""
    B, T = sequence.shape
    E = params["char_emb"].shape[1]
    H = params["w_hh"].shape[1]
    V = params["w_c"].shape[0]
    f32 = jnp.float32
    wbytes = jnp.dtype(weight_dtype).itemsize

    # bf16 packs 16 rows per sublane group -> pad batch to 16 so the bf16
    # recurrence operands / h_out stores are full sublane tiles; 8 for f32.
    align = 16 if wbytes < 4 else 8
    Hp = _round_up(H, 128)      # lane-dense hidden; each gate gets a 128-slot
    Vp = _round_up(V, 128)
    tt = max(1, min(time_block, T))
    Tp = _round_up(T, tt)
    Bp = _round_up(B, align)
    bt = min(batch_block, Bp)
    Bp = _round_up(Bp, bt)

    # ---- pack / pad weights (gate blocks land in 128-aligned Hp slots) -----
    def to_gate_slots(m, rows):                 # (rows, 3H) -> (rows, 3Hp)
        return jnp.pad(m.reshape(rows, 3, H),
                       ((0, 0), (0, 0), (0, Hp - H))).reshape(rows, 3 * Hp)

    # Fold b_hh_r / b_hh_z into the input-side bias; only b_hh_n must stay on
    # the recurrence because of the r * (W_hn h + b_hn) term.
    b_ih, b_hh = params["b_ih"], params["b_hh"]
    b_gx = jnp.concatenate([b_ih[:H] + b_hh[:H],
                            b_ih[H:2 * H] + b_hh[H:2 * H],
                            b_ih[2 * H:]])
    b_gx_p = to_gate_slots(b_gx.reshape(1, 3 * H), 1).astype(f32)   # (1, 3Hp)
    b_hh_n = jnp.pad(b_hh[2 * H:], (0, Hp - H)).reshape(1, Hp).astype(f32)

    w_ih_tp = to_gate_slots(params["w_ih"].T, E).astype(weight_dtype)  # (E,3Hp)
    w_hh_t3 = jnp.pad(params["w_hh"].T.reshape(H, 3, H),
                      ((0, Hp - H), (0, 0), (0, Hp - H)))           # (Hp,3,Hp)
    w_hh_rz_t = w_hh_t3[:, :2, :].reshape(Hp, 2 * Hp).astype(weight_dtype)
    w_hh_n_t = w_hh_t3[:, 2, :].astype(weight_dtype)                # (Hp, Hp)
    w_c_tp = jnp.pad(params["w_c"].T,
                     ((0, Hp - H), (0, Vp - V))).astype(weight_dtype)
    b_c_p = jnp.pad(params["b_c"], (0, Vp - V)).reshape(1, Vp).astype(f32)

    # ---- activations --------------------------------------------------------
    # Time-major gather; cast to the MXU dtype AFTER the gather so the full
    # (V, E) table is never cast / materialized in weight_dtype.
    emb_tm = params["char_emb"][sequence.T].astype(weight_dtype)    # (T, B, E)
    h0_p = jnp.pad(hidden[0].astype(f32), ((0, Bp - B), (0, Hp - H)))

    # ---- 1) input->gates over the REAL (T*B) rows only ----------------------
    # bf16 gx halves the HBM traffic written/re-read on the serial path.
    gx_dtype = weight_dtype if wbytes < 4 else f32
    gx = matmul_bias(emb_tm.reshape(T * B, E), w_ih_tp, b_gx_p,
                     out_dtype=gx_dtype)                            # (T*B, 3Hp)
    # Pad the (cheap) gx result into the time-major recurrence layout.
    gx_all = jnp.pad(gx.reshape(T, B, 3 * Hp),
                     ((0, Tp - T), (0, Bp - B), (0, 0)))            # (Tp,Bp,3Hp)

    # ---- 2) sequential GRU recurrence (hidden->hidden part only) ------------
    h_all = gru_recurrence(gx_all, h0_p, w_hh_rz_t, w_hh_n_t, b_hh_n,
                           tt=tt, bt=bt, out_dtype=weight_dtype,
                           single_buffer_constants=single_buffer_constants)

    # ---- 3) classifier over the REAL (T*B) rows only -------------------------
    h_real = h_all[:T, :B, :].reshape(T * B, Hp)
    logits = matmul_bias(h_real, w_c_tp, b_c_p, out_dtype=f32)      # (T*B, Vp)
    logits = logits.reshape(T, B, Vp)[:, :, :V]

    # Module contract is batch_first.
    return jnp.transpose(logits, (1, 0, 2))


decoder_forward_jit = jax.jit(
    decoder_forward,
    static_argnames=("weight_dtype", "time_block", "batch_block",
                     "single_buffer_constants"))


# ---------------------------------------------------------------------------
# Pure-JAX reference (for validation) and parameter init.
# ---------------------------------------------------------------------------
def decoder_forward_ref(params, hidden, sequence):
    emb = params["char_emb"][sequence]            # (B, T, E)
    h = hidden[0]
    H = h.shape[-1]

    def step(h, x):
        gx = x @ params["w_ih"].T + params["b_ih"]
        gh = h @ params["w_hh"].T + params["b_hh"]
        r = jax.nn.sigmoid(gx[:, :H] + gh[:, :H])
        z = jax.nn.sigmoid(gx[:, H:2 * H] + gh[:, H:2 * H])
        n = jnp.tanh(gx[:, 2 * H:] + r * gh[:, 2 * H:])
        h_new = (1.0 - z) * n + z * h
        return h_new, h_new

    _, outs = jax.lax.scan(step, h, jnp.transpose(emb, (1, 0, 2)))
    outs = jnp.transpose(outs, (1, 0, 2))         # (B, T, H)
    return outs @ params["w_c"].T + params["b_c"]


def init_params(key, vocab_len, emb_size, hidden_size):
    ks = jax.random.split(key, 7)
    s = 1.0 / np.sqrt(hidden_size)
    return {
        "char_emb": jax.random.normal(ks[0], (vocab_len, emb_size), jnp.float32),
        "w_ih": jax.random.uniform(ks[1], (3 * hidden_size, emb_size), jnp.float32, -s, s),
        "w_hh": jax.random.uniform(ks[2], (3 * hidden_size, hidden_size), jnp.float32, -s, s),
        "b_ih": jax.random.uniform(ks[3], (3 * hidden_size,), jnp.float32, -s, s),
        "b_hh": jax.random.uniform(ks[4], (3 * hidden_size,), jnp.float32, -s, s),
        "w_c": jax.random.uniform(ks[5], (vocab_len, hidden_size), jnp.float32, -s, s),
        "b_c": jax.random.uniform(ks[6], (vocab_len,), jnp.float32, -s, s),
    }


# TODO(synk): the eval-mode greedy-decode loop (`while char != eos_id`, argmax,
# re-embed, .item()) is data-dependent host-side control flow with no clean
# Pallas equivalent; only the training-mode forward is implemented here.

if __name__ == "__main__":
    vocab_len, emb_size, hidden_size = 16, 32, 32
    B, T = 2, 8

    key = jax.random.PRNGKey(0)
    k_params, k_seq, k_hid = jax.random.split(key, 3)

    params = init_params(k_params, vocab_len, emb_size, hidden_size)
    sequence = jax.random.randint(k_seq, (B, T), 0, vocab_len, dtype=jnp.int32)
    hidden = jax.random.normal(k_hid, (1, B, hidden_size), jnp.float32)

    ref = jax.block_until_ready(decoder_forward_ref(params, hidden, sequence))

    # f32-weight path: tight check against the pure-JAX reference.  If this
    # jax build rejects the pl.Buffered(1) single-buffering hint, silently
    # fall back to default double-buffering.
    sbc = True
    try:
        logits_f32 = jax.block_until_ready(
            decoder_forward_jit(params, hidden, sequence,
                                weight_dtype=jnp.float32,
                                single_buffer_constants=True))
    except Exception:
        sbc = False
        logits_f32 = jax.block_until_ready(
            decoder_forward_jit(params, hidden, sequence,
                                weight_dtype=jnp.float32,
                                single_buffer_constants=False))
    assert logits_f32.shape == (B, T, vocab_len)
    np.testing.assert_allclose(np.asarray(logits_f32), np.asarray(ref),
                               rtol=2e-3, atol=2e-3)

    # bf16 weights + bf16 gx (MXU fast path): looser tolerance vs the f32 ref.
    logits_bf16 = jax.block_until_ready(
        decoder_forward_jit(params, hidden, sequence,
                            weight_dtype=jnp.bfloat16,
                            single_buffer_constants=sbc))
    assert logits_bf16.shape == (B, T, vocab_len)
    np.testing.assert_allclose(np.asarray(logits_bf16), np.asarray(ref),
                               rtol=1e-1, atol=1e-1)

    print("KERNEL_OK")
</pallas_src>

<mosaic_0001>
module attributes {stable_mosaic.version = 11 : i64} {
  func.func @_matmul_bias_kernel(%arg0: i32, %arg1: i32, %arg2: i32, %arg3: memref<16x128xf32, #tpu.memory_space<vmem>>, %arg4: memref<128x384xf32, #tpu.memory_space<vmem>>, %arg5: memref<1x384xf32, #tpu.memory_space<vmem>>, %arg6: memref<16x384xf32, #tpu.memory_space<vmem>>, %arg7: memref<16x384xf32, #tpu.memory_space<vmem>>) attributes {dimension_semantics = [#tpu.dimension_semantics<parallel>, #tpu.dimension_semantics<parallel>, #tpu.dimension_semantics<arbitrary>], iteration_bounds = array<i64: 1, 1, 1>, scalar_prefetch = 0 : i64, scratch_operands = 1 : i64, tpu.core_type = #tpu.core_type<tc>, window_params = [{transform_indices = @transform_0, window_bounds = array<i64: 16, 128>}, {transform_indices = @transform_1, window_bounds = array<i64: 128, 384>}, {transform_indices = @transform_2, window_bounds = array<i64: 1, 384>}, {transform_indices = @transform_3, window_bounds = array<i64: 16, 384>}]} {
    %c0_i32 = arith.constant 0 : i32
    %0 = arith.cmpi eq, %arg2, %c0_i32 : i32
    %1 = arith.extui %0 : i1 to i32
    %c0_i32_0 = arith.constant 0 : i32
    %2 = arith.cmpi ne, %1, %c0_i32_0 : i32
    scf.if %2 {
      %cst_10 = arith.constant 0.000000e+00 : f32
      %12 = vector.broadcast %cst_10 : f32 to vector<16x384xf32>
      %c0_11 = arith.constant 0 : index
      %c0_12 = arith.constant 0 : index
      %13 = vector.load %arg7[%c0_11, %c0_12] : memref<16x384xf32, #tpu.memory_space<vmem>>, vector<16x384xf32>
      tpu.vector_store %arg7[%c0_11, %c0_12], %12 {strides = array<i32>} : memref<16x384xf32, #tpu.memory_space<vmem>>, vector<16x384xf32>,
    } else {
    }
    %c0 = arith.constant 0 : index
    %c0_1 = arith.constant 0 : index
    %3 = vector.load %arg7[%c0, %c0_1] : memref<16x384xf32, #tpu.memory_space<vmem>>, vector<16x384xf32>
    %c0_2 = arith.constant 0 : index
    %c0_3 = arith.constant 0 : index
    %4 = vector.load %arg3[%c0_2, %c0_3] : memref<16x128xf32, #tpu.memory_space<vmem>>, vector<16x128xf32>
    %c0_4 = arith.constant 0 : index
    %c0_5 = arith.constant 0 : index
    %5 = vector.load %arg4[%c0_4, %c0_5] : memref<128x384xf32, #tpu.memory_space<vmem>>, vector<128x384xf32>
    %cst = arith.constant dense<0.000000e+00> : vector<16x384xf32>
    %6 = tpu.matmul %4, %5, %cst {dimension_numbers = #tpu.dot_dimension_numbers<[1], [0], [0], [1], [0, 0, 1, 1], [], []>} : vector<16x128xf32>, vector<128x384xf32>, vector<16x384xf32> -> vector<16x384xf32>
    %7 = arith.addf %3, %6 : vector<16x384xf32>
    %c0_6 = arith.constant 0 : index
    %c0_7 = arith.constant 0 : index
    %8 = vector.load %arg7[%c0_6, %c0_7] : memref<16x384xf32, #tpu.memory_space<vmem>>, vector<16x384xf32>
    tpu.vector_store %arg7[%c0_6, %c0_7], %7 {strides = array<i32>} : memref<16x384xf32, #tpu.memory_space<vmem>>, vector<16x384xf32>,
    %c0_i32_8 = arith.constant 0 : i32
    %9 = arith.cmpi eq, %arg2, %c0_i32_8 : i32
    %10 = arith.extui %9 : i1 to i32
    %c0_i32_9 = arith.constant 0 : i32
    %11 = arith.cmpi ne, %10, %c0_i32_9 : i32
    scf.if %11 {
      %c0_10 = arith.constant 0 : index
      %c0_11 = arith.constant 0 : index
      %12 = vector.load %arg7[%c0_10, %c0_11] : memref<16x384xf32, #tpu.memory_space<vmem>>, vector<16x384xf32>
      %c0_12 = arith.constant 0 : index
      %c0_13 = arith.constant 0 : index
      %13 = vector.load %arg5[%c0_12, %c0_13] : memref<1x384xf32, #tpu.memory_space<vmem>>, vector<1x384xf32>
      %14 = vector.broadcast %13 : vector<1x384xf32> to vector<16x384xf32>
      %15 = arith.addf %12, %14 : vector<16x384xf32>
      %c0_14 = arith.constant 0 : index
      %c0_15 = arith.constant 0 : index
      %16 = vector.load %arg6[%c0_14, %c0_15] : memref<16x384xf32, #tpu.memory_space<vmem>>, vector<16x384xf32>
      tpu.vector_store %arg6[%c0_14, %c0_15], %15 {strides = array<i32>} : memref<16x384xf32, #tpu.memory_space<vmem>>, vector<16x384xf32>,
    } else {
    }
    return
  }
  func.func @transform_0(%arg0: i32, %arg1: i32, %arg2: i32) -> (i32, i32) {
    %c0_i32 = arith.constant 0 : i32
    return %arg0, %arg2 : i32, i32
  }
  func.func @transform_1(%arg0: i32, %arg1: i32, %arg2: i32) -> (i32, i32) {
    %c0_i32 = arith.constant 0 : i32
    return %arg2, %arg1 : i32, i32
  }
  func.func @transform_2(%arg0: i32, %arg1: i32, %arg2: i32) -> (i32, i32) {
    %c0_i32 = arith.constant 0 : i32
    %c0_i32_0 = arith.constant 0 : i32
    return %c0_i32, %arg1 : i32, i32
  }
  func.func @transform_3(%arg0: i32, %arg1: i32, %arg2: i32) -> (i32, i32) {
    %c0_i32 = arith.constant 0 : i32
    return %arg0, %arg1 : i32, i32
  }
}

module attributes {stable_mosaic.version = 11 : i64} {
  func.func @_gru_recurrence_kernel(%arg0: i32, %arg1: i32, %arg2: memref<8x8x384xf32, #tpu.memory_space<vmem>>, %arg3: memref<8x128xf32, #tpu.memory_space<vmem>>, %arg4: memref<128x256xf32, #tpu.memory_space<vmem>>, %arg5: memref<128x128xf32, #tpu.memory_space<vmem>>, %arg6: memref<1x128xf32, #tpu.memory_space<vmem>>, %arg7: memref<8x8x128xf32, #tpu.memory_space<vmem>>, %arg8: memref<8x128xf32, #tpu.memory_space<vmem>>) attributes {dimension_semantics = [#tpu.dimension_semantics<parallel>, #tpu.dimension_semantics<arbitrary>], iteration_bounds = array<i64: 1, 1>, scalar_prefetch = 0 : i64, scratch_operands = 1 : i64, tpu.core_type = #tpu.core_type<tc>, window_params = [{transform_indices = @transform_0, window_bounds = array<i64: 8, 8, 384>}, {transform_indices = @transform_1, window_bounds = array<i64: 8, 128>}, {pipeline_mode = #tpu.pipeline_mode<synchronous>, transform_indices = @transform_2, window_bounds = array<i64: 128, 256>}, {pipeline_mode = #tpu.pipeline_mode<synchronous>, transform_indices = @transform_3, window_bounds = array<i64: 128, 128>}, {pipeline_mode = #tpu.pipeline_mode<synchronous>, transform_indices = @transform_4, window_bounds = array<i64: 1, 128>}, {transform_indices = @transform_5, window_bounds = array<i64: 8, 8, 128>}]} {
    %c0_i32 = arith.constant 0 : i32
    %0 = arith.cmpi eq, %arg1, %c0_i32 : i32
    %1 = arith.extui %0 : i1 to i32
    %c0_i32_0 = arith.constant 0 : i32
    %2 = arith.cmpi ne, %1, %c0_i32_0 : i32
    scf.if %2 {
      %c0_82 = arith.constant 0 : index
      %c0_83 = arith.constant 0 : index
      %258 = vector.load %arg3[%c0_82, %c0_83] : memref<8x128xf32, #tpu.memory_space<vmem>>, vector<8x128xf32>
      %c0_84 = arith.constant 0 : index
      %c0_85 = arith.constant 0 : index
      %259 = vector.load %arg8[%c0_84, %c0_85] : memref<8x128xf32, #tpu.memory_space<vmem>>, vector<8x128xf32>
      tpu.vector_store %arg8[%c0_84, %c0_85], %258 {strides = array<i32>} : memref<8x128xf32, #tpu.memory_space<vmem>>, vector<8x128xf32>,
    } else {
    }
    %c0 = arith.constant 0 : index
    %c0_1 = arith.constant 0 : index
    %3 = vector.load %arg4[%c0, %c0_1] : memref<128x256xf32, #tpu.memory_space<vmem>>, vector<128x256xf32>
    %c0_2 = arith.constant 0 : index
    %c0_3 = arith.constant 0 : index
    %4 = vector.load %arg5[%c0_2, %c0_3] : memref<128x128xf32, #tpu.memory_space<vmem>>, vector<128x128xf32>
    %c0_4 = arith.constant 0 : index
    %c0_5 = arith.constant 0 : index
    %5 = vector.load %arg6[%c0_4, %c0_5] : memref<1x128xf32, #tpu.memory_space<vmem>>, vector<1x128xf32>
    %6 = vector.shape_cast %5 : vector<1x128xf32> to vector<1x128xf32>
    %7 = vector.broadcast %6 : vector<1x128xf32> to vector<8x128xf32>
    %c0_6 = arith.constant 0 : index
    %c0_7 = arith.constant 0 : index
    %8 = vector.load %arg8[%c0_6, %c0_7] : memref<8x128xf32, #tpu.memory_space<vmem>>, vector<8x128xf32>
    %c0_8 = arith.constant 0 : index
    %c0_9 = arith.constant 0 : index
    %c0_10 = arith.constant 0 : index
    %9 = vector.load %arg2[%c0_8, %c0_9, %c0_10] : memref<8x8x384xf32, #tpu.memory_space<vmem>>, vector<1x8x384xf32>
    %10 = vector.shape_cast %9 : vector<1x8x384xf32> to vector<8x384xf32>
    %cst = arith.constant dense<0.000000e+00> : vector<8x256xf32>
    %11 = tpu.matmul %8, %3, %cst {dimension_numbers = #tpu.dot_dimension_numbers<[1], [0], [0], [1], [0, 0, 1, 1], [], []>} : vector<8x128xf32>, vector<128x256xf32>, vector<8x256xf32> -> vector<8x256xf32>
    %cst_11 = arith.constant dense<0.000000e+00> : vector<8x128xf32>
    %12 = tpu.matmul %8, %4, %cst_11 {dimension_numbers = #tpu.dot_dimension_numbers<[1], [0], [0], [1], [0, 0, 1, 1], [], []>} : vector<8x128xf32>, vector<128x128xf32>, vector<8x128xf32> -> vector<8x128xf32>
    %13 = vector.extract_strided_slice %10 {offsets = [0, 0], sizes = [8, 128], strides = [1, 1]} : vector<8x384xf32> to vector<8x128xf32>
    %14 = vector.extract_strided_slice %11 {offsets = [0, 0], sizes = [8, 128], strides = [1, 1]} : vector<8x256xf32> to vector<8x128xf32>
    %15 = arith.addf %13, %14 : vector<8x128xf32>
    %16 = arith.negf %15 : vector<8x128xf32>
    %17 = math.exp %16 : vector<8x128xf32>
    %cst_12 = arith.constant 1.000000e+00 : f32
    %18 = vector.broadcast %cst_12 : f32 to vector<8x128xf32>
    %19 = arith.addf %18, %17 : vector<8x128xf32>
    %20 = arith.divf %18, %19 : vector<8x128xf32>
    %21 = vector.extract_strided_slice %10 {offsets = [0, 128], sizes = [8, 128], strides = [1, 1]} : vector<8x384xf32> to vector<8x128xf32>
    %22 = vector.extract_strided_slice %11 {offsets = [0, 128], sizes = [8, 128], strides = [1, 1]} : vector<8x256xf32> to vector<8x128xf32>
    %23 = arith.addf %21, %22 : vector<8x128xf32>
    %24 = arith.negf %23 : vector<8x128xf32>
    %25 = math.exp %24 : vector<8x128xf32>
    %cst_13 = arith.constant 1.000000e+00 : f32
    %26 = vector.broadcast %cst_13 : f32 to vector<8x128xf32>
    %27 = arith.addf %26, %25 : vector<8x128xf32>
    %28 = arith.divf %26, %27 : vector<8x128xf32>
    %29 = vector.extract_strided_slice %10 {offsets = [0, 256], sizes = [8, 128], strides = [1, 1]} : vector<8x384xf32> to vector<8x128xf32>
    %30 = arith.addf %12, %7 : vector<8x128xf32>
    %31 = arith.mulf %20, %30 : vector<8x128xf32>
    %32 = arith.addf %29, %31 : vector<8x128xf32>
    %33 = math.tanh %32 : vector<8x128xf32>
    %34 = arith.subf %8, %33 : vector<8x128xf32>
    %35 = arith.mulf %28, %34 : vector<8x128xf32>
    %36 = arith.addf %33, %35 : vector<8x128xf32>
    %c0_14 = arith.constant 0 : index
    %c0_15 = arith.constant 0 : index
    %c0_16 = arith.constant 0 : index
    %37 = vector.load %arg7[%c0_14, %c0_15, %c0_16] : memref<8x8x128xf32, #tpu.memory_space<vmem>>, vector<1x8x128xf32>
    %38 = vector.shape_cast %37 : vector<1x8x128xf32> to vector<8x128xf32>
    %39 = vector.shape_cast %36 : vector<8x128xf32> to vector<1x8x128xf32>
    tpu.vector_store %arg7[%c0_14, %c0_15, %c0_16], %39 {strides = array<i32>} : memref<8x8x128xf32, #tpu.memory_space<vmem>>, vector<1x8x128xf32>,
    %c1 = arith.constant 1 : index
    %c0_17 = arith.constant 0 : index
    %c0_18 = arith.constant 0 : index
    %40 = vector.load %arg2[%c1, %c0_17, %c0_18] : memref<8x8x384xf32, #tpu.memory_space<vmem>>, vector<1x8x384xf32>
    %41 = vector.shape_cast %40 : vector<1x8x384xf32> to vector<8x384xf32>
    %cst_19 = arith.constant dense<0.000000e+00> : vector<8x256xf32>
    %42 = tpu.matmul %36, %3, %cst_19 {dimension_numbers = #tpu.dot_dimension_numbers<[1], [0], [0], [1], [0, 0, 1, 1], [], []>} : vector<8x128xf32>, vector<128x256xf32>, vector<8x256xf32> -> vector<8x256xf32>
    %cst_20 = arith.constant dense<0.000000e+00> : vector<8x128xf32>
    %43 = tpu.matmul %36, %4, %cst_20 {dimension_numbers = #tpu.dot_dimension_numbers<[1], [0], [0], [1], [0, 0, 1, 1], [], []>} : vector<8x128xf32>, vector<128x128xf32>, vector<8x128xf32> -> vector<8x128xf32>
    %44 = vector.extract_strided_slice %41 {offsets = [0, 0], sizes = [8, 128], strides = [1, 1]} : vector<8x384xf32> to vector<8x128xf32>
    %45 = vector.extract_strided_slice %42 {offsets = [0, 0], sizes = [8, 128], strides = [1, 1]} : vector<8x256xf32> to vector<8x128xf32>
    %46 = arith.addf %44, %45 : vector<8x128xf32>
    %47 = arith.negf %46 : vector<8x128xf32>
    %48 = math.exp %47 : vector<8x128xf32>
    %cst_21 = arith.constant 1.000000e+00 : f32
    %49 = vector.broadcast %cst_21 : f32 to vector<8x128xf32>
    %50 = arith.addf %49, %48 : vector<8x128xf32>
    %51 = arith.divf %49, %50 : vector<8x128xf32>
    %52 = vector.extract_strided_slice %41 {offsets = [0, 128], sizes = [8, 128], strides = [1, 1]} : vector<8x384xf32> to vector<8x128xf32>
    %53 = vector.extract_strided_slice %42 {offsets = [0, 128], sizes = [8, 128], strides = [1, 1]} : vector<8x256xf32> to vector<8x128xf32>
    %54 = arith.addf %52, %53 : vector<8x128xf32>
    %55 = arith.negf %54 : vector<8x128xf32>
    %56 = math.exp %55 : vector<8x128xf32>
    %cst_22 = arith.constant 1.000000e+00 : f32
    %57 = vector.broadcast %cst_22 : f32 to vector<8x128xf32>
    %58 = arith.addf %57, %56 : vector<8x128xf32>
    %59 = arith.divf %57, %58 : vector<8x128xf32>
    %60 = vector.extract_strided_slice %41 {offsets = [0, 256], sizes = [8, 128], strides = [1, 1]} : vector<8x384xf32> to vector<8x128xf32>
    %61 = arith.addf %43, %7 : vector<8x128xf32>
    %62 = arith.mulf %51, %61 : vector<8x128xf32>
    %63 = arith.addf %60, %62 : vector<8x128xf32>
    %64 = math.tanh %63 : vector<8x128xf32>
    %65 = arith.subf %36, %64 : vector<8x128xf32>
    %66 = arith.mulf %59, %65 : vector<8x128xf32>
    %67 = arith.addf %64, %66 : vector<8x128xf32>
    %c1_23 = arith.constant 1 : index
    %c0_24 = arith.constant 0 : index
    %c0_25 = arith.constant 0 : index
    %68 = vector.load %arg7[%c1_23, %c0_24, %c0_25] : memref<8x8x128xf32, #tpu.memory_space<vmem>>, vector<1x8x128xf32>
    %69 = vector.shape_cast %68 : vector<1x8x128xf32> to vector<8x128xf32>
    %70 = vector.shape_cast %67 : vector<8x128xf32> to vector<1x8x128xf32>
    tpu.vector_store %arg7[%c1_23, %c0_24, %c0_25], %70 {strides = array<i32>} : memref<8x8x128xf32, #tpu.memory_space<vmem>>, vector<1x8x128xf32>,
    %c2 = arith.constant 2 : index
    %c0_26 = arith.constant 0 : index
    %c0_27 = arith.constant 0 : index
    %71 = vector.load %arg2[%c2, %c0_26, %c0_27] : memref<8x8x384xf32, #tpu.memory_space<vmem>>, vector<1x8x384xf32>
    %72 = vector.shape_cast %71 : vector<1x8x384xf32> to vector<8x384xf32>
    %cst_28 = arith.constant dense<0.000000e+00> : vector<8x256xf32>
    %73 = tpu.matmul %67, %3, %cst_28 {dimension_numbers = #tpu.dot_dimension_numbers<[1], [0], [0], [1], [0, 0, 1, 1], [], []>} : vector<8x128xf32>, vector<128x256xf32>, vector<8x256xf32> -> vector<8x256xf32>
    %cst_29 = arith.constant dense<0.000000e+00> : vector<8x128xf32>
    %74 = tpu.matmul %67, %4, %cst_29 {dimension_numbers = #tpu.dot_dimension_numbers<[1], [0], [0], [1], [0, 0, 1, 1], [], []>} : vector<8x128xf32>, vector<128x128xf32>, vector<8x128xf32> -> vector<8x128xf32>
    %75 = vector.extract_strided_slice %72 {offsets = [0, 0], sizes = [8, 128], strides = [1, 1]} : vector<8x384xf32> to vector<8x128xf32>
    %76 = vector.extract_strided_slice %73 {offsets = [0, 0], sizes = [8, 128], strides = [1, 1]} : vector<8x256xf32> to vector<8x128xf32>
    %77 = arith.addf %75, %76 : vector<8x128xf32>
    %78 = arith.negf %77 : vector<8x128xf32>
    %79 = math.exp %78 : vector<8x128xf32>
    %cst_30 = arith.constant 1.000000e+00 : f32
    %80 = vector.broadcast %cst_30 : f32 to vector<8x128xf32>
    %81 = arith.addf %80, %79 : vector<8x128xf32>
    %82 = arith.divf %80, %81 : vector<8x128xf32>
    %83 = vector.extract_strided_slice %72 {offsets = [0, 128], sizes = [8, 128], strides = [1, 1]} : vector<8x384xf32> to vector<8x128xf32>
    %84 = vector.extract_strided_slice %73 {offsets = [0, 128], sizes = [8, 128], strides = [1, 1]} : vector<8x256xf32> to vector<8x128xf32>
    %85 = arith.addf %83, %84 : vector<8x128xf32>
    %86 = arith.negf %85 : vector<8x128xf32>
    %87 = math.exp %86 : vector<8x128xf32>
    %cst_31 = arith.constant 1.000000e+00 : f32
    %88 = vector.broadcast %cst_31 : f32 to vector<8x128xf32>
    %89 = arith.addf %88, %87 : vector<8x128xf32>
    %90 = arith.divf %88, %89 : vector<8x128xf32>
    %91 = vector.extract_strided_slice %72 {offsets = [0, 256], sizes = [8, 128], strides = [1, 1]} : vector<8x384xf32> to vector<8x128xf32>
    %92 = arith.addf %74, %7 : vector<8x128xf32>
    %93 = arith.mulf %82, %92 : vector<8x128xf32>
    %94 = arith.addf %91, %93 : vector<8x128xf32>
    %95 = math.tanh %94 : vector<8x128xf32>
    %96 = arith.subf %67, %95 : vector<8x128xf32>
    %97 = arith.mulf %90, %96 : vector<8x128xf32>
    %98 = arith.addf %95, %97 : vector<8x128xf32>
    %c2_32 = arith.constant 2 : index
    %c0_33 = arith.constant 0 : index
    %c0_34 = arith.constant 0 : index
    %99 = vector.load %arg7[%c2_32, %c0_33, %c0_34] : memref<8x8x128xf32, #tpu.memory_space<vmem>>, vector<1x8x128xf32>
    %100 = vector.shape_cast %99 : vector<1x8x128xf32> to vector<8x128xf32>
    %101 = vector.shape_cast %98 : vector<8x128xf32> to vector<1x8x128xf32>
    tpu.vector_store %arg7[%c2_32, %c0_33, %c0_34], %101 {strides = array<i32>} : memref<8x8x128xf32, #tpu.memory_space<vmem>>, vector<1x8x128xf32>,
    %c3 = arith.constant 3 : index
    %c0_35 = arith.constant 0 : index
    %c0_36 = arith.constant 0 : index
    %102 = vector.load %arg2[%c3, %c0_35, %c0_36] : memref<8x8x384xf32, #tpu.memory_space<vmem>>, vector<1x8x384xf32>
    %103 = vector.shape_cast %102 : vector<1x8x384xf32> to vector<8x384xf32>
    %cst_37 = arith.constant dense<0.000000e+00> : vector<8x256xf32>
    %104 = tpu.matmul %98, %3, %cst_37 {dimension_numbers = #tpu.dot_dimension_numbers<[1], [0], [0], [1], [0, 0, 1, 1], [], []>} : vector<8x128xf32>, vector<128x256xf32>, vector<8x256xf32> -> vector<8x256xf32>
    %cst_38 = arith.constant dense<0.000000e+00> : vector<8x128xf32>
    %105 = tpu.matmul %98, %4, %cst_38 {dimension_numbers = #tpu.dot_dimension_numbers<[1], [0], [0], [1], [0, 0, 1, 1], [], []>} : vector<8x128xf32>, vector<128x128xf32>, vector<8x128xf32> -> vector<8x128xf32>
    %106 = vector.extract_strided_slice %103 {offsets = [0, 0], sizes = [8, 128], strides = [1, 1]} : vector<8x384xf32> to vector<8x128xf32>
    %107 = vector.extract_strided_slice %104 {offsets = [0, 0], sizes = [8, 128], strides = [1, 1]} : vector<8x256xf32> to vector<8x128xf32>
    %108 = arith.addf %106, %107 : vector<8x128xf32>
    %109 = arith.negf %108 : vector<8x128xf32>
    %110 = math.exp %109 : vector<8x128xf32>
    %cst_39 = arith.constant 1.000000e+00 : f32
    %111 = vector.broadcast %cst_39 : f32 to vector<8x128xf32>
    %112 = arith.addf %111, %110 : vector<8x128xf32>
    %113 = arith.divf %111, %112 : vector<8x128xf32>
    %114 = vector.extract_strided_slice %103 {offsets = [0, 128], sizes = [8, 128], strides = [1, 1]} : vector<8x384xf32> to vector<8x128xf32>
    %115 = vector.extract_strided_slice %104 {offsets = [0, 128], sizes = [8, 128], strides = [1, 1]} : vector<8x256xf32> to vector<8x128xf32>
    %116 = arith.addf %114, %115 : vector<8x128xf32>
    %117 = arith.negf %116 : vector<8x128xf32>
    %118 = math.exp %117 : vector<8x128xf32>
    %cst_40 = arith.constant 1.000000e+00 : f32
    %119 = vector.broadcast %cst_40 : f32 to vector<8x128xf32>
    %120 = arith.addf %119, %118 : vector<8x128xf32>
    %121 = arith.divf %119, %120 : vector<8x128xf32>
    %122 = vector.extract_strided_slice %103 {offsets = [0, 256], sizes = [8, 128], strides = [1, 1]} : vector<8x384xf32> to vector<8x128xf32>
    %123 = arith.addf %105, %7 : vector<8x128xf32>
    %124 = arith.mulf %113, %123 : vector<8x128xf32>
    %125 = arith.addf %122, %124 : vector<8x128xf32>
    %126 = math.tanh %125 : vector<8x128xf32>
    %127 = arith.subf %98, %126 : vector<8x128xf32>
    %128 = arith.mulf %121, %127 : vector<8x128xf32>
    %129 = arith.addf %126, %128 : vector<8x128xf32>
    %c3_41 = arith.constant 3 : index
    %c0_42 = arith.constant 0 : index
    %c0_43 = arith.constant 0 : index
    %130 = vector.load %arg7[%c3_41, %c0_42, %c0_43] : memref<8x8x128xf32, #tpu.memory_space<vmem>>, vector<1x8x128xf32>
    %131 = vector.shape_cast %130 : vector<1x8x128xf32> to vector<8x128xf32>
    %132 = vector.shape_cast %129 : vector<8x128xf32> to vector<1x8x128xf32>
    tpu.vector_store %arg7[%c3_41, %c0_42, %c0_43], %132 {strides = array<i32>} : memref<8x8x128xf32, #tpu.memory_space<vmem>>, vector<1x8x128xf32>,
    %c4 = arith.constant 4 : index
    %c0_44 = arith.constant 0 : index
    %c0_45 = arith.constant 0 : index
    %133 = vector.load %arg2[%c4, %c0_44, %c0_45] : memref<8x8x384xf32, #tpu.memory_space<vmem>>, vector<1x8x384xf32>
    %134 = vector.shape_cast %133 : vector<1x8x384xf32> to vector<8x384xf32>
    %cst_46 = arith.constant dense<0.000000e+00> : vector<8x256xf32>
    %135 = tpu.matmul %129, %3, %cst_46 {dimension_numbers = #tpu.dot_dimension_numbers<[1], [0], [0], [1], [0, 0, 1, 1], [], []>} : vector<8x128xf32>, vector<128x256xf32>, vector<8x256xf32> -> vector<8x256xf32>
    %cst_47 = arith.constant dense<0.000000e+00> : vector<8x128xf32>
    %136 = tpu.matmul %129, %4, %cst_47 {dimension_numbers = #tpu.dot_dimension_numbers<[1], [0], [0], [1], [0, 0, 1, 1], [], []>} : vector<8x128xf32>, vector<128x128xf32>, vector<8x128xf32> -> vector<8x128xf32>
    %137 = vector.extract_strided_slice %134 {offsets = [0, 0], sizes = [8, 128], strides = [1, 1]} : vector<8x384xf32> to vector<8x128xf32>
    %138 = vector.extract_strided_slice %135 {offsets = [0, 0], sizes = [8, 128], strides = [1, 1]} : vector<8x256xf32> to vector<8x128xf32>
    %139 = arith.addf %137, %138 : vector<8x128xf32>
    %140 = arith.negf %139 : vector<8x128xf32>
    %141 = math.exp %140 : vector<8x128xf32>
    %cst_48 = arith.constant 1.000000e+00 : f32
    %142 = vector.broadcast %cst_48 : f32 to vector<8x128xf32>
    %143 = arith.addf %142, %141 : vector<8x128xf32>
    %144 = arith.divf %142, %143 : vector<8x128xf32>
    %145 = vector.extract_strided_slice %134 {offsets = [0, 128], sizes = [8, 128], strides = [1, 1]} : vector<8x384xf32> to vector<8x128xf32>
    %146 = vector.extract_strided_slice %135 {offsets = [0, 128], sizes = [8, 128], strides = [1, 1]} : vector<8x256xf32> to vector<8x128xf32>
    %147 = arith.addf %145, %146 : vector<8x128xf32>
    %148 = arith.negf %147 : vector<8x128xf32>
    %149 = math.exp %148 : vector<8x128xf32>
    %cst_49 = arith.constant 1.000000e+00 : f32
    %150 = vector.broadcast %cst_49 : f32 to vector<8x128xf32>
    %151 = arith.addf %150, %149 : vector<8x128xf32>
    %152 = arith.divf %150, %151 : vector<8x128xf32>
    %153 = vector.extract_strided_slice %134 {offsets = [0, 256], sizes = [8, 128], strides = [1, 1]} : vector<8x384xf32> to vector<8x128xf32>
    %154 = arith.addf %136, %7 : vector<8x128xf32>
    %155 = arith.mulf %144, %154 : vector<8x128xf32>
    %156 = arith.addf %153, %155 : vector<8x128xf32>
    %157 = math.tanh %156 : vector<8x128xf32>
    %158 = arith.subf %129, %157 : vector<8x128xf32>
    %159 = arith.mulf %152, %158 : vector<8x128xf32>
    %160 = arith.addf %157, %159 : vector<8x128xf32>
    %c4_50 = arith.constant 4 : index
    %c0_51 = arith.constant 0 : index
    %c0_52 = arith.constant 0 : index
    %161 = vector.load %arg7[%c4_50, %c0_51, %c0_52] : memref<8x8x128xf32, #tpu.memory_space<vmem>>, vector<1x8x128xf32>
    %162 = vector.shape_cast %161 : vector<1x8x128xf32> to vector<8x128xf32>
    %163 = vector.shape_cast %160 : vector<8x128xf32> to vector<1x8x128xf32>
    tpu.vector_store %arg7[%c4_50, %c0_51, %c0_52], %163 {strides = array<i32>} : memref<8x8x128xf32, #tpu.memory_space<vmem>>, vector<1x8x128xf32>,
    %c5 = arith.constant 5 : index
    %c0_53 = arith.constant 0 : index
    %c0_54 = arith.constant 0 : index
    %164 = vector.load %arg2[%c5, %c0_53, %c0_54] : memref<8x8x384xf32, #tpu.memory_space<vmem>>, vector<1x8x384xf32>
    %165 = vector.shape_cast %164 : vector<1x8x384xf32> to vector<8x384xf32>
    %cst_55 = arith.constant dense<0.000000e+00> : vector<8x256xf32>
    %166 = tpu.matmul %160, %3, %cst_55 {dimension_numbers = #tpu.dot_dimension_numbers<[1], [0], [0], [1], [0, 0, 1, 1], [], []>} : vector<8x128xf32>, vector<128x256xf32>, vector<8x256xf32> -> vector<8x256xf32>
    %cst_56 = arith.constant dense<0.000000e+00> : vector<8x128xf32>
    %167 = tpu.matmul %160, %4, %cst_56 {dimension_numbers = #tpu.dot_dimension_numbers<[1], [0], [0], [1], [0, 0, 1, 1], [], []>} : vector<8x128xf32>, vector<128x128xf32>, vector<8x128xf32> -> vector<8x128xf32>
    %168 = vector.extract_strided_slice %165 {offsets = [0, 0], sizes = [8, 128], strides = [1, 1]} : vector<8x384xf32> to vector<8x128xf32>
    %169 = vector.extract_strided_slice %166 {offsets = [0, 0], sizes = [8, 128], strides = [1, 1]} : vector<8x256xf32> to vector<8x128xf32>
    %170 = arith.addf %168, %169 : vector<8x128xf32>
    %171 = arith.negf %170 : vector<8x128xf32>
    %172 = math.exp %171 : vector<8x128xf32>
    %cst_57 = arith.constant 1.000000e+00 : f32
    %173 = vector.broadcast %cst_57 : f32 to vector<8x128xf32>
    %174 = arith.addf %173, %172 : vector<8x128xf32>
    %175 = arith.divf %173, %174 : vector<8x128xf32>
    %176 = vector.extract_strided_slice %165 {offsets = [0, 128], sizes = [8, 128], strides = [1, 1]} : vector<8x384xf32> to vector<8x128xf32>
    %177 = vector.extract_strided_slice %166 {offsets = [0, 128], sizes = [8, 128], strides = [1, 1]} : vector<8x256xf32> to vector<8x128xf32>
    %178 = arith.addf %176, %177 : vector<8x128xf32>
    %179 = arith.negf %178 : vector<8x128xf32>
    %180 = math.exp %179 : vector<8x128xf32>
    %cst_58 = arith.constant 1.000000e+00 : f32
    %181 = vector.broadcast %cst_58 : f32 to vector<8x128xf32>
    %182 = arith.addf %181, %180 : vector<8x128xf32>
    %183 = arith.divf %181, %182 : vector<8x128xf32>
    %184 = vector.extract_strided_slice %165 {offsets = [0, 256], sizes = [8, 128], strides = [1, 1]} : vector<8x384xf32> to vector<8x128xf32>
    %185 = arith.addf %167, %7 : vector<8x128xf32>
    %186 = arith.mulf %175, %185 : vector<8x128xf32>
    %187 = arith.addf %184, %186 : vector<8x128xf32>
    %188 = math.tanh %187 : vector<8x128xf32>
    %189 = arith.subf %160, %188 : vector<8x128xf32>
    %190 = arith.mulf %183, %189 : vector<8x128xf32>
    %191 = arith.addf %188, %190 : vector<8x128xf32>
    %c5_59 = arith.constant 5 : index
    %c0_60 = arith.constant 0 : index
    %c0_61 = arith.constant 0 : index
    %192 = vector.load %arg7[%c5_59, %c0_60, %c0_61] : memref<8x8x128xf32, #tpu.memory_space<vmem>>, vector<1x8x128xf32>
    %193 = vector.shape_cast %192 : vector<1x8x128xf32> to vector<8x128xf32>
    %194 = vector.shape_cast %191 : vector<8x128xf32> to vector<1x8x128xf32>
    tpu.vector_store %arg7[%c5_59, %c0_60, %c0_61], %194 {strides = array<i32>} : memref<8x8x128xf32, #tpu.memory_space<vmem>>, vector<1x8x128xf32>,
    %c6 = arith.constant 6 : index
    %c0_62 = arith.constant 0 : index
    %c0_63 = arith.constant 0 : index
    %195 = vector.load %arg2[%c6, %c0_62, %c0_63] : memref<8x8x384xf32, #tpu.memory_space<vmem>>, vector<1x8x384xf32>
    %196 = vector.shape_cast %195 : vector<1x8x384xf32> to vector<8x384xf32>
    %cst_64 = arith.constant dense<0.000000e+00> : vector<8x256xf32>
    %197 = tpu.matmul %191, %3, %cst_64 {dimension_numbers = #tpu.dot_dimension_numbers<[1], [0], [0], [1], [0, 0, 1, 1], [], []>} : vector<8x128xf32>, vector<128x256xf32>, vector<8x256xf32> -> vector<8x256xf32>
    %cst_65 = arith.constant dense<0.000000e+00> : vector<8x128xf32>
    %198 = tpu.matmul %191, %4, %cst_65 {dimension_numbers = #tpu.dot_dimension_numbers<[1], [0], [0], [1], [0, 0, 1, 1], [], []>} : vector<8x128xf32>, vector<128x128xf32>, vector<8x128xf32> -> vector<8x128xf32>
    %199 = vector.extract_strided_slice %196 {offsets = [0, 0], sizes = [8, 128], strides = [1, 1]} : vector<8x384xf32> to vector<8x128xf32>
    %200 = vector.extract_strided_slice %197 {offsets = [0, 0], sizes = [8, 128], strides = [1, 1]} : vector<8x256xf32> to vector<8x128xf32>
    %201 = arith.addf %199, %200 : vector<8x128xf32>
    %202 = arith.negf %201 : vector<8x128xf32>
    %203 = math.exp %202 : vector<8x128xf32>
    %cst_66 = arith.constant 1.000000e+00 : f32
    %204 = vector.broadcast %cst_66 : f32 to vector<8x128xf32>
    %205 = arith.addf %204, %203 : vector<8x128xf32>
    %206 = arith.divf %204, %205 : vector<8x128xf32>
    %207 = vector.extract_strided_slice %196 {offsets = [0, 128], sizes = [8, 128], strides = [1, 1]} : vector<8x384xf32> to vector<8x128xf32>
    %208 = vector.extract_strided_slice %197 {offsets = [0, 128], sizes = [8, 128], strides = [1, 1]} : vector<8x256xf32> to vector<8x128xf32>
    %209 = arith.addf %207, %208 : vector<8x128xf32>
    %210 = arith.negf %209 : vector<8x128xf32>
    %211 = math.exp %210 : vector<8x128xf32>
    %cst_67 = arith.constant 1.000000e+00 : f32
    %212 = vector.broadcast %cst_67 : f32 to vector<8x128xf32>
    %213 = arith.addf %212, %211 : vector<8x128xf32>
    %214 = arith.divf %212, %213 : vector<8x128xf32>
    %215 = vector.extract_strided_slice %196 {offsets = [0, 256], sizes = [8, 128], strides = [1, 1]} : vector<8x384xf32> to vector<8x128xf32>
    %216 = arith.addf %198, %7 : vector<8x128xf32>
    %217 = arith.mulf %206, %216 : vector<8x128xf32>
    %218 = arith.addf %215, %217 : vector<8x128xf32>
    %219 = math.tanh %218 : vector<8x128xf32>
    %220 = arith.subf %191, %219 : vector<8x128xf32>
    %221 = arith.mulf %214, %220 : vector<8x128xf32>
    %222 = arith.addf %219, %221 : vector<8x128xf32>
    %c6_68 = arith.constant 6 : index
    %c0_69 = arith.constant 0 : index
    %c0_70 = arith.constant 0 : index
    %223 = vector.load %arg7[%c6_68, %c0_69, %c0_70] : memref<8x8x128xf32, #tpu.memory_space<vmem>>, vector<1x8x128xf32>
    %224 = vector.shape_cast %223 : vector<1x8x128xf32> to vector<8x128xf32>
    %225 = vector.shape_cast %222 : vector<8x128xf32> to vector<1x8x128xf32>
    tpu.vector_store %arg7[%c6_68, %c0_69, %c0_70], %225 {strides = array<i32>} : memref<8x8x128xf32, #tpu.memory_space<vmem>>, vector<1x8x128xf32>,
    %c7 = arith.constant 7 : index
    %c0_71 = arith.constant 0 : index
    %c0_72 = arith.constant 0 : index
    %226 = vector.load %arg2[%c7, %c0_71, %c0_72] : memref<8x8x384xf32, #tpu.memory_space<vmem>>, vector<1x8x384xf32>
    %227 = vector.shape_cast %226 : vector<1x8x384xf32> to vector<8x384xf32>
    %cst_73 = arith.constant dense<0.000000e+00> : vector<8x256xf32>
    %228 = tpu.matmul %222, %3, %cst_73 {dimension_numbers = #tpu.dot_dimension_numbers<[1], [0], [0], [1], [0, 0, 1, 1], [], []>} : vector<8x128xf32>, vector<128x256xf32>, vector<8x256xf32> -> vector<8x256xf32>
    %cst_74 = arith.constant dense<0.000000e+00> : vector<8x128xf32>
    %229 = tpu.matmul %222, %4, %cst_74 {dimension_numbers = #tpu.dot_dimension_numbers<[1], [0], [0], [1], [0, 0, 1, 1], [], []>} : vector<8x128xf32>, vector<128x128xf32>, vector<8x128xf32> -> vector<8x128xf32>
    %230 = vector.extract_strided_slice %227 {offsets = [0, 0], sizes = [8, 128], strides = [1, 1]} : vector<8x384xf32> to vector<8x128xf32>
    %231 = vector.extract_strided_slice %228 {offsets = [0, 0], sizes = [8, 128], strides = [1, 1]} : vector<8x256xf32> to vector<8x128xf32>
    %232 = arith.addf %230, %231 : vector<8x128xf32>
    %233 = arith.negf %232 : vector<8x128xf32>
    %234 = math.exp %233 : vector<8x128xf32>
    %cst_75 = arith.constant 1.000000e+00 : f32
    %235 = vector.broadcast %cst_75 : f32 to vector<8x128xf32>
    %236 = arith.addf %235, %234 : vector<8x128xf32>
    %237 = arith.divf %235, %236 : vector<8x128xf32>
    %238 = vector.extract_strided_slice %227 {offsets = [0, 128], sizes = [8, 128], strides = [1, 1]} : vector<8x384xf32> to vector<8x128xf32>
    %239 = vector.extract_strided_slice %228 {offsets = [0, 128], sizes = [8, 128], strides = [1, 1]} : vector<8x256xf32> to vector<8x128xf32>
    %240 = arith.addf %238, %239 : vector<8x128xf32>
    %241 = arith.negf %240 : vector<8x128xf32>
    %242 = math.exp %241 : vector<8x128xf32>
    %cst_76 = arith.constant 1.000000e+00 : f32
    %243 = vector.broadcast %cst_76 : f32 to vector<8x128xf32>
    %244 = arith.addf %243, %242 : vector<8x128xf32>
    %245 = arith.divf %243, %244 : vector<8x128xf32>
    %246 = vector.extract_strided_slice %227 {offsets = [0, 256], sizes = [8, 128], strides = [1, 1]} : vector<8x384xf32> to vector<8x128xf32>
    %247 = arith.addf %229, %7 : vector<8x128xf32>
    %248 = arith.mulf %237, %247 : vector<8x128xf32>
    %249 = arith.addf %246, %248 : vector<8x128xf32>
    %250 = math.tanh %249 : vector<8x128xf32>
    %251 = arith.subf %222, %250 : vector<8x128xf32>
    %252 = arith.mulf %245, %251 : vector<8x128xf32>
    %253 = arith.addf %250, %252 : vector<8x128xf32>
    %c7_77 = arith.constant 7 : index
    %c0_78 = arith.constant 0 : index
    %c0_79 = arith.constant 0 : index
    %254 = vector.load %arg7[%c7_77, %c0_78, %c0_79] : memref<8x8x128xf32, #tpu.memory_space<vmem>>, vector<1x8x128xf32>
    %255 = vector.shape_cast %254 : vector<1x8x128xf32> to vector<8x128xf32>
    %256 = vector.shape_cast %253 : vector<8x128xf32> to vector<1x8x128xf32>
    tpu.vector_store %arg7[%c7_77, %c0_78, %c0_79], %256 {strides = array<i32>} : memref<8x8x128xf32, #tpu.memory_space<vmem>>, vector<1x8x128xf32>,
    %c0_80 = arith.constant 0 : index
    %c0_81 = arith.constant 0 : index
    %257 = vector.load %arg8[%c0_80, %c0_81] : memref<8x128xf32, #tpu.memory_space<vmem>>, vector<8x128xf32>
    tpu.vector_store %arg8[%c0_80, %c0_81], %253 {strides = array<i32>} : memref<8x128xf32, #tpu.memory_space<vmem>>, vector<8x128xf32>,
    return
  }
  func.func @transform_0(%arg0: i32, %arg1: i32) -> (i32, i32, i32) {
    %c0_i32 = arith.constant 0 : i32
    %c0_i32_0 = arith.constant 0 : i32
    return %arg1, %arg0, %c0_i32 : i32, i32, i32
  }
  func.func @transform_1(%arg0: i32, %arg1: i32) -> (i32, i32) {
    %c0_i32 = arith.constant 0 : i32
    %c0_i32_0 = arith.constant 0 : i32
    return %arg0, %c0_i32 : i32, i32
  }
  func.func @transform_2(%arg0: i32, %arg1: i32) -> (i32, i32) {
    %c0_i32 = arith.constant 0 : i32
    %c0_i32_0 = arith.constant 0 : i32
    %c0_i32_1 = arith.constant 0 : i32
    return %c0_i32, %c0_i32_0 : i32, i32
  }
  func.func @transform_3(%arg0: i32, %arg1: i32) -> (i32, i32) {
    %c0_i32 = arith.constant 0 : i32
    %c0_i32_0 = arith.constant 0 : i32
    %c0_i32_1 = arith.constant 0 : i32
    return %c0_i32, %c0_i32_0 : i32, i32
  }
  func.func @transform_4(%arg0: i32, %arg1: i32) -> (i32, i32) {
    %c0_i32 = arith.constant 0 : i32
    %c0_i32_0 = arith.constant 0 : i32
    %c0_i32_1 = arith.constant 0 : i32
    return %c0_i32, %c0_i32_0 : i32, i32
  }
  func.func @transform_5(%arg0: i32, %arg1: i32) -> (i32, i32, i32) {
    %c0_i32 = arith.constant 0 : i32
    %c0_i32_0 = arith.constant 0 : i32
    return %arg1, %arg0, %c0_i32 : i32, i32, i32
  }
}

module attributes {stable_mosaic.version = 11 : i64} {
  func.func @_matmul_bias_kernel(%arg0: i32, %arg1: i32, %arg2: i32, %arg3: memref<16x128xf32, #tpu.memory_space<vmem>>, %arg4: memref<128x128xf32, #tpu.memory_space<vmem>>, %arg5: memref<1x128xf32, #tpu.memory_space<vmem>>, %arg6: memref<16x128xf32, #tpu.memory_space<vmem>>, %arg7: memref<16x128xf32, #tpu.memory_space<vmem>>) attributes {dimension_semantics = [#tpu.dimension_semantics<parallel>, #tpu.dimension_semantics<parallel>, #tpu.dimension_semantics<arbitrary>], iteration_bounds = array<i64: 1, 1, 1>, scalar_prefetch = 0 : i64, scratch_operands = 1 : i64, tpu.core_type = #tpu.core_type<tc>, window_params = [{transform_indices = @transform_0, window_bounds = array<i64: 16, 128>}, {transform_indices = @transform_1, window_bounds = array<i64: 128, 128>}, {transform_indices = @transform_2, window_bounds = array<i64: 1, 128>}, {transform_indices = @transform_3, window_bounds = array<i64: 16, 128>}]} {
    %c0_i32 = arith.constant 0 : i32
    %0 = arith.cmpi eq, %arg2, %c0_i32 : i32
    %1 = arith.extui %0 : i1 to i32
    %c0_i32_0 = arith.constant 0 : i32
    %2 = arith.cmpi ne, %1, %c0_i32_0 : i32
    scf.if %2 {
      %cst_10 = arith.constant 0.000000e+00 : f32
      %12 = vector.broadcast %cst_10 : f32 to vector<16x128xf32>
      %c0_11 = arith.constant 0 : index
      %c0_12 = arith.constant 0 : index
      %13 = vector.load %arg7[%c0_11, %c0_12] : memref<16x128xf32, #tpu.memory_space<vmem>>, vector<16x128xf32>
      tpu.vector_store %arg7[%c0_11, %c0_12], %12 {strides = array<i32>} : memref<16x128xf32, #tpu.memory_space<vmem>>, vector<16x128xf32>,
    } else {
    }
    %c0 = arith.constant 0 : index
    %c0_1 = arith.constant 0 : index
    %3 = vector.load %arg7[%c0, %c0_1] : memref<16x128xf32, #tpu.memory_space<vmem>>, vector<16x128xf32>
    %c0_2 = arith.constant 0 : index
    %c0_3 = arith.constant 0 : index
    %4 = vector.load %arg3[%c0_2, %c0_3] : memref<16x128xf32, #tpu.memory_space<vmem>>, vector<16x128xf32>
    %c0_4 = arith.constant 0 : index
    %c0_5 = arith.constant 0 : index
    %5 = vector.load %arg4[%c0_4, %c0_5] : memref<128x128xf32, #tpu.memory_space<vmem>>, vector<128x128xf32>
    %cst = arith.constant dense<0.000000e+00> : vector<16x128xf32>
    %6 = tpu.matmul %4, %5, %cst {dimension_numbers = #tpu.dot_dimension_numbers<[1], [0], [0], [1], [0, 0, 1, 1], [], []>} : vector<16x128xf32>, vector<128x128xf32>, vector<16x128xf32> -> vector<16x128xf32>
    %7 = arith.addf %3, %6 : vector<16x128xf32>
    %c0_6 = arith.constant 0 : index
    %c0_7 = arith.constant 0 : index
    %8 = vector.load %arg7[%c0_6, %c0_7] : memref<16x128xf32, #tpu.memory_space<vmem>>, vector<16x128xf32>
    tpu.vector_store %arg7[%c0_6, %c0_7], %7 {strides = array<i32>} : memref<16x128xf32, #tpu.memory_space<vmem>>, vector<16x128xf32>,
    %c0_i32_8 = arith.constant 0 : i32
    %9 = arith.cmpi eq, %arg2, %c0_i32_8 : i32
    %10 = arith.extui %9 : i1 to i32
    %c0_i32_9 = arith.constant 0 : i32
    %11 = arith.cmpi ne, %10, %c0_i32_9 : i32
    scf.if %11 {
      %c0_10 = arith.constant 0 : index
      %c0_11 = arith.constant 0 : index
      %12 = vector.load %arg7[%c0_10, %c0_11] : memref<16x128xf32, #tpu.memory_space<vmem>>, vector<16x128xf32>
      %c0_12 = arith.constant 0 : index
      %c0_13 = arith.constant 0 : index
      %13 = vector.load %arg5[%c0_12, %c0_13] : memref<1x128xf32, #tpu.memory_space<vmem>>, vector<1x128xf32>
      %14 = vector.broadcast %13 : vector<1x128xf32> to vector<16x128xf32>
      %15 = arith.addf %12, %14 : vector<16x128xf32>
      %c0_14 = arith.constant 0 : index
      %c0_15 = arith.constant 0 : index
      %16 = vector.load %arg6[%c0_14, %c0_15] : memref<16x128xf32, #tpu.memory_space<vmem>>, vector<16x128xf32>
      tpu.vector_store %arg6[%c0_14, %c0_15], %15 {strides = array<i32>} : memref<16x128xf32, #tpu.memory_space<vmem>>, vector<16x128xf32>,
    } else {
    }
    return
  }
  func.func @transform_0(%arg0: i32, %arg1: i32, %arg2: i32) -> (i32, i32) {
    %c0_i32 = arith.constant 0 : i32
    return %arg0, %arg2 : i32, i32
  }
  func.func @transform_1(%arg0: i32, %arg1: i32, %arg2: i32) -> (i32, i32) {
    %c0_i32 = arith.constant 0 : i32
    return %arg2, %arg1 : i32, i32
  }
  func.func @transform_2(%arg0: i32, %arg1: i32, %arg2: i32) -> (i32, i32) {
    %c0_i32 = arith.constant 0 : i32
    %c0_i32_0 = arith.constant 0 : i32
    return %c0_i32, %arg1 : i32, i32
  }
  func.func @transform_3(%arg0: i32, %arg1: i32, %arg2: i32) -> (i32, i32) {
    %c0_i32 = arith.constant 0 : i32
    return %arg0, %arg1 : i32, i32
  }
}

module attributes {stable_mosaic.version = 11 : i64} {
  func.func @_matmul_bias_kernel(%arg0: i32, %arg1: i32, %arg2: i32, %arg3: memref<16x128xf32, #tpu.memory_space<vmem>>, %arg4: memref<128x384xf32, #tpu.memory_space<vmem>>, %arg5: memref<1x384xf32, #tpu.memory_space<vmem>>, %arg6: memref<16x384xf32, #tpu.memory_space<vmem>>, %arg7: memref<16x384xf32, #tpu.memory_space<vmem>>) attributes {dimension_semantics = [#tpu.dimension_semantics<parallel>, #tpu.dimension_semantics<parallel>, #tpu.dimension_semantics<arbitrary>], iteration_bounds = array<i64: 1, 1, 1>, scalar_prefetch = 0 : i64, scratch_operands = 1 : i64, tpu.core_type = #tpu.core_type<tc>, window_params = [{transform_indices = @transform_0, window_bounds = array<i64: 16, 128>}, {transform_indices = @transform_1, window_bounds = array<i64: 128, 384>}, {transform_indices = @transform_2, window_bounds = array<i64: 1, 384>}, {transform_indices = @transform_3, window_bounds = array<i64: 16, 384>}]} {
    %c0_i32 = arith.constant 0 : i32
    %0 = arith.cmpi eq, %arg2, %c0_i32 : i32
    %1 = arith.extui %0 : i1 to i32
    %c0_i32_0 = arith.constant 0 : i32
    %2 = arith.cmpi ne, %1, %c0_i32_0 : i32
    scf.if %2 {
      %cst_10 = arith.constant 0.000000e+00 : f32
      %12 = vector.broadcast %cst_10 : f32 to vector<16x384xf32>
      %c0_11 = arith.constant 0 : index
      %c0_12 = arith.constant 0 : index
      %13 = vector.load %arg7[%c0_11, %c0_12] : memref<16x384xf32, #tpu.memory_space<vmem>>, vector<16x384xf32>
      tpu.vector_store %arg7[%c0_11, %c0_12], %12 {strides = array<i32>} : memref<16x384xf32, #tpu.memory_space<vmem>>, vector<16x384xf32>,
    } else {
    }
    %c0 = arith.constant 0 : index
    %c0_1 = arith.constant 0 : index
    %3 = vector.load %arg7[%c0, %c0_1] : memref<16x384xf32, #tpu.memory_space<vmem>>, vector<16x384xf32>
    %c0_2 = arith.constant 0 : index
    %c0_3 = arith.constant 0 : index
    %4 = vector.load %arg3[%c0_2, %c0_3] : memref<16x128xf32, #tpu.memory_space<vmem>>, vector<16x128xf32>
    %c0_4 = arith.constant 0 : index
    %c0_5 = arith.constant 0 : index
    %5 = vector.load %arg4[%c0_4, %c0_5] : memref<128x384xf32, #tpu.memory_space<vmem>>, vector<128x384xf32>
    %cst = arith.constant dense<0.000000e+00> : vector<16x384xf32>
    %6 = tpu.matmul %4, %5, %cst {dimension_numbers = #tpu.dot_dimension_numbers<[1], [0], [0], [1], [0, 0, 1, 1], [], []>} : vector<16x128xf32>, vector<128x384xf32>, vector<16x384xf32> -> vector<16x384xf32>
    %7 = arith.addf %3, %6 : vector<16x384xf32>
    %c0_6 = arith.constant 0 : index
    %c0_7 = arith.constant 0 : index
    %8 = vector.load %arg7[%c0_6, %c0_7] : memref<16x384xf32, #tpu.memory_space<vmem>>, vector<16x384xf32>
    tpu.vector_store %arg7[%c0_6, %c0_7], %7 {strides = array<i32>} : memref<16x384xf32, #tpu.memory_space<vmem>>, vector<16x384xf32>,
    %c0_i32_8 = arith.constant 0 : i32
    %9 = arith.cmpi eq, %arg2, %c0_i32_8 : i32
    %10 = arith.extui %9 : i1 to i32
    %c0_i32_9 = arith.constant 0 : i32
    %11 = arith.cmpi ne, %10, %c0_i32_9 : i32
    scf.if %11 {
      %c0_10 = arith.constant 0 : index
      %c0_11 = arith.constant 0 : index
      %12 = vector.load %arg7[%c0_10, %c0_11] : memref<16x384xf32, #tpu.memory_space<vmem>>, vector<16x384xf32>
      %c0_12 = arith.constant 0 : index
      %c0_13 = arith.constant 0 : index
      %13 = vector.load %arg5[%c0_12, %c0_13] : memref<1x384xf32, #tpu.memory_space<vmem>>, vector<1x384xf32>
      %14 = vector.broadcast %13 : vector<1x384xf32> to vector<16x384xf32>
      %15 = arith.addf %12, %14 : vector<16x384xf32>
      %c0_14 = arith.constant 0 : index
      %c0_15 = arith.constant 0 : index
      %16 = vector.load %arg6[%c0_14, %c0_15] : memref<16x384xf32, #tpu.memory_space<vmem>>, vector<16x384xf32>
      tpu.vector_store %arg6[%c0_14, %c0_15], %15 {strides = array<i32>} : memref<16x384xf32, #tpu.memory_space<vmem>>, vector<16x384xf32>,
    } else {
    }
    return
  }
  func.func @transform_0(%arg0: i32, %arg1: i32, %arg2: i32) -> (i32, i32) {
    %c0_i32 = arith.constant 0 : i32
    return %arg0, %arg2 : i32, i32
  }
  func.func @transform_1(%arg0: i32, %arg1: i32, %arg2: i32) -> (i32, i32) {
    %c0_i32 = arith.constant 0 : i32
    return %arg2, %arg1 : i32, i32
  }
  func.func @transform_2(%arg0: i32, %arg1: i32, %arg2: i32) -> (i32, i32) {
    %c0_i32 = arith.constant 0 : i32
    %c0_i32_0 = arith.constant 0 : i32
    return %c0_i32, %arg1 : i32, i32
  }
  func.func @transform_3(%arg0: i32, %arg1: i32, %arg2: i32) -> (i32, i32) {
    %c0_i32 = arith.constant 0 : i32
    return %arg0, %arg1 : i32, i32
  }
}

module attributes {stable_mosaic.version = 11 : i64} {
  func.func @_matmul_bias_kernel(%arg0: i32, %arg1: i32, %arg2: i32, %arg3: memref<16x128xf32, #tpu.memory_space<vmem>>, %arg4: memref<128x128xf32, #tpu.memory_space<vmem>>, %arg5: memref<1x128xf32, #tpu.memory_space<vmem>>, %arg6: memref<16x128xf32, #tpu.memory_space<vmem>>, %arg7: memref<16x128xf32, #tpu.memory_space<vmem>>) attributes {dimension_semantics = [#tpu.dimension_semantics<parallel>, #tpu.dimension_semantics<parallel>, #tpu.dimension_semantics<arbitrary>], iteration_bounds = array<i64: 1, 1, 1>, scalar_prefetch = 0 : i64, scratch_operands = 1 : i64, tpu.core_type = #tpu.core_type<tc>, window_params = [{transform_indices = @transform_0, window_bounds = array<i64: 16, 128>}, {transform_indices = @transform_1, window_bounds = array<i64: 128, 128>}, {transform_indices = @transform_2, window_bounds = array<i64: 1, 128>}, {transform_indices = @transform_3, window_bounds = array<i64: 16, 128>}]} {
    %c0_i32 = arith.constant 0 : i32
    %0 = arith.cmpi eq, %arg2, %c0_i32 : i32
    %1 = arith.extui %0 : i1 to i32
    %c0_i32_0 = arith.constant 0 : i32
    %2 = arith.cmpi ne, %1, %c0_i32_0 : i32
    scf.if %2 {
      %cst_10 = arith.constant 0.000000e+00 : f32
      %12 = vector.broadcast %cst_10 : f32 to vector<16x128xf32>
      %c0_11 = arith.constant 0 : index
      %c0_12 = arith.constant 0 : index
      %13 = vector.load %arg7[%c0_11, %c0_12] : memref<16x128xf32, #tpu.memory_space<vmem>>, vector<16x128xf32>
      tpu.vector_store %arg7[%c0_11, %c0_12], %12 {strides = array<i32>} : memref<16x128xf32, #tpu.memory_space<vmem>>, vector<16x128xf32>,
    } else {
    }
    %c0 = arith.constant 0 : index
    %c0_1 = arith.constant 0 : index
    %3 = vector.load %arg7[%c0, %c0_1] : memref<16x128xf32, #tpu.memory_space<vmem>>, vector<16x128xf32>
    %c0_2 = arith.constant 0 : index
    %c0_3 = arith.constant 0 : index
    %4 = vector.load %arg3[%c0_2, %c0_3] : memref<16x128xf32, #tpu.memory_space<vmem>>, vector<16x128xf32>
    %c0_4 = arith.constant 0 : index
    %c0_5 = arith.constant 0 : index
    %5 = vector.load %arg4[%c0_4, %c0_5] : memref<128x128xf32, #tpu.memory_space<vmem>>, vector<128x128xf32>
    %cst = arith.constant dense<0.000000e+00> : vector<16x128xf32>
    %6 = tpu.matmul %4, %5, %cst {dimension_numbers = #tpu.dot_dimension_numbers<[1], [0], [0], [1], [0, 0, 1, 1], [], []>} : vector<16x128xf32>, vector<128x128xf32>, vector<16x128xf32> -> vector<16x128xf32>
    %7 = arith.addf %3, %6 : vector<16x128xf32>
    %c0_6 = arith.constant 0 : index
    %c0_7 = arith.constant 0 : index
    %8 = vector.load %arg7[%c0_6, %c0_7] : memref<16x128xf32, #tpu.memory_space<vmem>>, vector<16x128xf32>
    tpu.vector_store %arg7[%c0_6, %c0_7], %7 {strides = array<i32>} : memref<16x128xf32, #tpu.memory_space<vmem>>, vector<16x128xf32>,
    %c0_i32_8 = arith.constant 0 : i32
    %9 = arith.cmpi eq, %arg2, %c0_i32_8 : i32
    %10 = arith.extui %9 : i1 to i32
    %c0_i32_9 = arith.constant 0 : i32
    %11 = arith.cmpi ne, %10, %c0_i32_9 : i32
    scf.if %11 {
      %c0_10 = arith.constant 0 : index
      %c0_11 = arith.constant 0 : index
      %12 = vector.load %arg7[%c0_10, %c0_11] : memref<16x128xf32, #tpu.memory_space<vmem>>, vector<16x128xf32>
      %c0_12 = arith.constant 0 : index
      %c0_13 = arith.constant 0 : index
      %13 = vector.load %arg5[%c0_12, %c0_13] : memref<1x128xf32, #tpu.memory_space<vmem>>, vector<1x128xf32>
      %14 = vector.broadcast %13 : vector<1x128xf32> to vector<16x128xf32>
      %15 = arith.addf %12, %14 : vector<16x128xf32>
      %c0_14 = arith.constant 0 : index
      %c0_15 = arith.constant 0 : index
      %16 = vector.load %arg6[%c0_14, %c0_15] : memref<16x128xf32, #tpu.memory_space<vmem>>, vector<16x128xf32>
      tpu.vector_store %arg6[%c0_14, %c0_15], %15 {strides = array<i32>} : memref<16x128xf32, #tpu.memory_space<vmem>>, vector<16x128xf32>,
    } else {
    }
    return
  }
  func.func @transform_0(%arg0: i32, %arg1: i32, %arg2: i32) -> (i32, i32) {
    %c0_i32 = arith.constant 0 : i32
    return %arg0, %arg2 : i32, i32
  }
  func.func @transform_1(%arg0: i32, %arg1: i32, %arg2: i32) -> (i32, i32) {
    %c0_i32 = arith.constant 0 : i32
    return %arg2, %arg1 : i32, i32
  }
  func.func @transform_2(%arg0: i32, %arg1: i32, %arg2: i32) -> (i32, i32) {
    %c0_i32 = arith.constant 0 : i32
    %c0_i32_0 = arith.constant 0 : i32
    return %c0_i32, %arg1 : i32, i32
  }
  func.func @transform_3(%arg0: i32, %arg1: i32, %arg2: i32) -> (i32, i32) {
    %c0_i32 = arith.constant 0 : i32
    return %arg0, %arg1 : i32, i32
  }
}

module attributes {stable_mosaic.version = 11 : i64} {
  func.func @_gru_recurrence_kernel(%arg0: i32, %arg1: i32, %arg2: memref<8x8x384xf32, #tpu.memory_space<vmem>>, %arg3: memref<8x128xf32, #tpu.memory_space<vmem>>, %arg4: memref<128x256xf32, #tpu.memory_space<vmem>>, %arg5: memref<128x128xf32, #tpu.memory_space<vmem>>, %arg6: memref<1x128xf32, #tpu.memory_space<vmem>>, %arg7: memref<8x8x128xf32, #tpu.memory_space<vmem>>, %arg8: memref<8x128xf32, #tpu.memory_space<vmem>>) attributes {dimension_semantics = [#tpu.dimension_semantics<parallel>, #tpu.dimension_semantics<arbitrary>], iteration_bounds = array<i64: 1, 1>, scalar_prefetch = 0 : i64, scratch_operands = 1 : i64, tpu.core_type = #tpu.core_type<tc>, window_params = [{transform_indices = @transform_0, window_bounds = array<i64: 8, 8, 384>}, {transform_indices = @transform_1, window_bounds = array<i64: 8, 128>}, {pipeline_mode = #tpu.pipeline_mode<synchronous>, transform_indices = @transform_2, window_bounds = array<i64: 128, 256>}, {pipeline_mode = #tpu.pipeline_mode<synchronous>, transform_indices = @transform_3, window_bounds = array<i64: 128, 128>}, {pipeline_mode = #tpu.pipeline_mode<synchronous>, transform_indices = @transform_4, window_bounds = array<i64: 1, 128>}, {transform_indices = @transform_5, window_bounds = array<i64: 8, 8, 128>}]} {
    %c0_i32 = arith.constant 0 : i32
    %0 = arith.cmpi eq, %arg1, %c0_i32 : i32
    %1 = arith.extui %0 : i1 to i32
    %c0_i32_0 = arith.constant 0 : i32
    %2 = arith.cmpi ne, %1, %c0_i32_0 : i32
    scf.if %2 {
      %c0_82 = arith.constant 0 : index
      %c0_83 = arith.constant 0 : index
      %258 = vector.load %arg3[%c0_82, %c0_83] : memref<8x128xf32, #tpu.memory_space<vmem>>, vector<8x128xf32>
      %c0_84 = arith.constant 0 : index
      %c0_85 = arith.constant 0 : index
      %259 = vector.load %arg8[%c0_84, %c0_85] : memref<8x128xf32, #tpu.memory_space<vmem>>, vector<8x128xf32>
      tpu.vector_store %arg8[%c0_84, %c0_85], %258 {strides = array<i32>} : memref<8x128xf32, #tpu.memory_space<vmem>>, vector<8x128xf32>,
    } else {
    }
    %c0 = arith.constant 0 : index
    %c0_1 = arith.constant 0 : index
    %3 = vector.load %arg4[%c0, %c0_1] : memref<128x256xf32, #tpu.memory_space<vmem>>, vector<128x256xf32>
    %c0_2 = arith.constant 0 : index
    %c0_3 = arith.constant 0 : index
    %4 = vector.load %arg5[%c0_2, %c0_3] : memref<128x128xf32, #tpu.memory_space<vmem>>, vector<128x128xf32>
    %c0_4 = arith.constant 0 : index
    %c0_5 = arith.constant 0 : index
    %5 = vector.load %arg6[%c0_4, %c0_5] : memref<1x128xf32, #tpu.memory_space<vmem>>, vector<1x128xf32>
    %6 = vector.shape_cast %5 : vector<1x128xf32> to vector<1x128xf32>
    %7 = vector.broadcast %6 : vector<1x128xf32> to vector<8x128xf32>
    %c0_6 = arith.constant 0 : index
    %c0_7 = arith.constant 0 : index
    %8 = vector.load %arg8[%c0_6, %c0_7] : memref<8x128xf32, #tpu.memory_space<vmem>>, vector<8x128xf32>
    %c0_8 = arith.constant 0 : index
    %c0_9 = arith.constant 0 : index
    %c0_10 = arith.constant 0 : index
    %9 = vector.load %arg2[%c0_8, %c0_9, %c0_10] : memref<8x8x384xf32, #tpu.memory_space<vmem>>, vector<1x8x384xf32>
    %10 = vector.shape_cast %9 : vector<1x8x384xf32> to vector<8x384xf32>
    %cst = arith.constant dense<0.000000e+00> : vector<8x256xf32>
    %11 = tpu.matmul %8, %3, %cst {dimension_numbers = #tpu.dot_dimension_numbers<[1], [0], [0], [1], [0, 0, 1, 1], [], []>} : vector<8x128xf32>, vector<128x256xf32>, vector<8x256xf32> -> vector<8x256xf32>
    %cst_11 = arith.constant dense<0.000000e+00> : vector<8x128xf32>
    %12 = tpu.matmul %8, %4, %cst_11 {dimension_numbers = #tpu.dot_dimension_numbers<[1], [0], [0], [1], [0, 0, 1, 1], [], []>} : vector<8x128xf32>, vector<128x128xf32>, vector<8x128xf32> -> vector<8x128xf32>
    %13 = vector.extract_strided_slice %10 {offsets = [0, 0], sizes = [8, 128], strides = [1, 1]} : vector<8x384xf32> to vector<8x128xf32>
    %14 = vector.extract_strided_slice %11 {offsets = [0, 0], sizes = [8, 128], strides = [1, 1]} : vector<8x256xf32> to vector<8x128xf32>
    %15 = arith.addf %13, %14 : vector<8x128xf32>
    %16 = arith.negf %15 : vector<8x128xf32>
    %17 = math.exp %16 : vector<8x128xf32>
    %cst_12 = arith.constant 1.000000e+00 : f32
    %18 = vector.broadcast %cst_12 : f32 to vector<8x128xf32>
    %19 = arith.addf %18, %17 : vector<8x128xf32>
    %20 = arith.divf %18, %19 : vector<8x128xf32>
    %21 = vector.extract_strided_slice %10 {offsets = [0, 128], sizes = [8, 128], strides = [1, 1]} : vector<8x384xf32> to vector<8x128xf32>
    %22 = vector.extract_strided_slice %11 {offsets = [0, 128], sizes = [8, 128], strides = [1, 1]} : vector<8x256xf32> to vector<8x128xf32>
    %23 = arith.addf %21, %22 : vector<8x128xf32>
    %24 = arith.negf %23 : vector<8x128xf32>
    %25 = math.exp %24 : vector<8x128xf32>
    %cst_13 = arith.constant 1.000000e+00 : f32
    %26 = vector.broadcast %cst_13 : f32 to vector<8x128xf32>
    %27 = arith.addf %26, %25 : vector<8x128xf32>
    %28 = arith.divf %26, %27 : vector<8x128xf32>
    %29 = vector.extract_strided_slice %10 {offsets = [0, 256], sizes = [8, 128], strides = [1, 1]} : vector<8x384xf32> to vector<8x128xf32>
    %30 = arith.addf %12, %7 : vector<8x128xf32>
    %31 = arith.mulf %20, %30 : vector<8x128xf32>
    %32 = arith.addf %29, %31 : vector<8x128xf32>
    %33 = math.tanh %32 : vector<8x128xf32>
    %34 = arith.subf %8, %33 : vector<8x128xf32>
    %35 = arith.mulf %28, %34 : vector<8x128xf32>
    %36 = arith.addf %33, %35 : vector<8x128xf32>
    %c0_14 = arith.constant 0 : index
    %c0_15 = arith.constant 0 : index
    %c0_16 = arith.constant 0 : index
    %37 = vector.load %arg7[%c0_14, %c0_15, %c0_16] : memref<8x8x128xf32, #tpu.memory_space<vmem>>, vector<1x8x128xf32>
    %38 = vector.shape_cast %37 : vector<1x8x128xf32> to vector<8x128xf32>
    %39 = vector.shape_cast %36 : vector<8x128xf32> to vector<1x8x128xf32>
    tpu.vector_store %arg7[%c0_14, %c0_15, %c0_16], %39 {strides = array<i32>} : memref<8x8x128xf32, #tpu.memory_space<vmem>>, vector<1x8x128xf32>,
    %c1 = arith.constant 1 : index
    %c0_17 = arith.constant 0 : index
    %c0_18 = arith.constant 0 : index
    %40 = vector.load %arg2[%c1, %c0_17, %c0_18] : memref<8x8x384xf32, #tpu.memory_space<vmem>>, vector<1x8x384xf32>
    %41 = vector.shape_cast %40 : vector<1x8x384xf32> to vector<8x384xf32>
    %cst_19 = arith.constant dense<0.000000e+00> : vector<8x256xf32>
    %42 = tpu.matmul %36, %3, %cst_19 {dimension_numbers = #tpu.dot_dimension_numbers<[1], [0], [0], [1], [0, 0, 1, 1], [], []>} : vector<8x128xf32>, vector<128x256xf32>, vector<8x256xf32> -> vector<8x256xf32>
    %cst_20 = arith.constant dense<0.000000e+00> : vector<8x128xf32>
    %43 = tpu.matmul %36, %4, %cst_20 {dimension_numbers = #tpu.dot_dimension_numbers<[1], [0], [0], [1], [0, 0, 1, 1], [], []>} : vector<8x128xf32>, vector<128x128xf32>, vector<8x128xf32> -> vector<8x128xf32>
    %44 = vector.extract_strided_slice %41 {offsets = [0, 0], sizes = [8, 128], strides = [1, 1]} : vector<8x384xf32> to vector<8x128xf32>
    %45 = vector.extract_strided_slice %42 {offsets = [0, 0], sizes = [8, 128], strides = [1, 1]} : vector<8x256xf32> to vector<8x128xf32>
    %46 = arith.addf %44, %45 : vector<8x128xf32>
    %47 = arith.negf %46 : vector<8x128xf32>
    %48 = math.exp %47 : vector<8x128xf32>
    %cst_21 = arith.constant 1.000000e+00 : f32
    %49 = vector.broadcast %cst_21 : f32 to vector<8x128xf32>
    %50 = arith.addf %49, %48 : vector<8x128xf32>
    %51 = arith.divf %49, %50 : vector<8x128xf32>
    %52 = vector.extract_strided_slice %41 {offsets = [0, 128], sizes = [8, 128], strides = [1, 1]} : vector<8x384xf32> to vector<8x128xf32>
    %53 = vector.extract_strided_slice %42 {offsets = [0, 128], sizes = [8, 128], strides = [1, 1]} : vector<8x256xf32> to vector<8x128xf32>
    %54 = arith.addf %52, %53 : vector<8x128xf32>
    %55 = arith.negf %54 : vector<8x128xf32>
    %56 = math.exp %55 : vector<8x128xf32>
    %cst_22 = arith.constant 1.000000e+00 : f32
    %57 = vector.broadcast %cst_22 : f32 to vector<8x128xf32>
    %58 = arith.addf %57, %56 : vector<8x128xf32>
    %59 = arith.divf %57, %58 : vector<8x128xf32>
    %60 = vector.extract_strided_slice %41 {offsets = [0, 256], sizes = [8, 128], strides = [1, 1]} : vector<8x384xf32> to vector<8x128xf32>
    %61 = arith.addf %43, %7 : vector<8x128xf32>
    %62 = arith.mulf %51, %61 : vector<8x128xf32>
    %63 = arith.addf %60, %62 : vector<8x128xf32>
    %64 = math.tanh %63 : vector<8x128xf32>
    %65 = arith.subf %36, %64 : vector<8x128xf32>
    %66 = arith.mulf %59, %65 : vector<8x128xf32>
    %67 = arith.addf %64, %66 : vector<8x128xf32>
    %c1_23 = arith.constant 1 : index
    %c0_24 = arith.constant 0 : index
    %c0_25 = arith.constant 0 : index
    %68 = vector.load %arg7[%c1_23, %c0_24, %c0_25] : memref<8x8x128xf32, #tpu.memory_space<vmem>>, vector<1x8x128xf32>
    %69 = vector.shape_cast %68 : vector<1x8x128xf32> to vector<8x128xf32>
    %70 = vector.shape_cast %67 : vector<8x128xf32> to vector<1x8x128xf32>
    tpu.vector_store %arg7[%c1_23, %c0_24, %c0_25], %70 {strides = array<i32>} : memref<8x8x128xf32, #tpu.memory_space<vmem>>, vector<1x8x128xf32>,
    %c2 = arith.constant 2 : index
    %c0_26 = arith.constant 0 : index
    %c0_27 = arith.constant 0 : index
    %71 = vector.load %arg2[%c2, %c0_26, %c0_27] : memref<8x8x384xf32, #tpu.memory_space<vmem>>, vector<1x8x384xf32>
    %72 = vector.shape_cast %71 : vector<1x8x384xf32> to vector<8x384xf32>
    %cst_28 = arith.constant dense<0.000000e+00> : vector<8x256xf32>
    %73 = tpu.matmul %67, %3, %cst_28 {dimension_numbers = #tpu.dot_dimension_numbers<[1], [0], [0], [1], [0, 0, 1, 1], [], []>} : vector<8x128xf32>, vector<128x256xf32>, vector<8x256xf32> -> vector<8x256xf32>
    %cst_29 = arith.constant dense<0.000000e+00> : vector<8x128xf32>
    %74 = tpu.matmul %67, %4, %cst_29 {dimension_numbers = #tpu.dot_dimension_numbers<[1], [0], [0], [1], [0, 0, 1, 1], [], []>} : vector<8x128xf32>, vector<128x128xf32>, vector<8x128xf32> -> vector<8x128xf32>
    %75 = vector.extract_strided_slice %72 {offsets = [0, 0], sizes = [8, 128], strides = [1, 1]} : vector<8x384xf32> to vector<8x128xf32>
    %76 = vector.extract_strided_slice %73 {offsets = [0, 0], sizes = [8, 128], strides = [1, 1]} : vector<8x256xf32> to vector<8x128xf32>
    %77 = arith.addf %75, %76 : vector<8x128xf32>
    %78 = arith.negf %77 : vector<8x128xf32>
    %79 = math.exp %78 : vector<8x128xf32>
    %cst_30 = arith.constant 1.000000e+00 : f32
    %80 = vector.broadcast %cst_30 : f32 to vector<8x128xf32>
    %81 = arith.addf %80, %79 : vector<8x128xf32>
    %82 = arith.divf %80, %81 : vector<8x128xf32>
    %83 = vector.extract_strided_slice %72 {offsets = [0, 128], sizes = [8, 128], strides = [1, 1]} : vector<8x384xf32> to vector<8x128xf32>
    %84 = vector.extract_strided_slice %73 {offsets = [0, 128], sizes = [8, 128], strides = [1, 1]} : vector<8x256xf32> to vector<8x128xf32>
    %85 = arith.addf %83, %84 : vector<8x128xf32>
    %86 = arith.negf %85 : vector<8x128xf32>
    %87 = math.exp %86 : vector<8x128xf32>
    %cst_31 = arith.constant 1.000000e+00 : f32
    %88 = vector.broadcast %cst_31 : f32 to vector<8x128xf32>
    %89 = arith.addf %88, %87 : vector<8x128xf32>
    %90 = arith.divf %88, %89 : vector<8x128xf32>
    %91 = vector.extract_strided_slice %72 {offsets = [0, 256], sizes = [8, 128], strides = [1, 1]} : vector<8x384xf32> to vector<8x128xf32>
    %92 = arith.addf %74, %7 : vector<8x128xf32>
    %93 = arith.mulf %82, %92 : vector<8x128xf32>
    %94 = arith.addf %91, %93 : vector<8x128xf32>
    %95 = math.tanh %94 : vector<8x128xf32>
    %96 = arith.subf %67, %95 : vector<8x128xf32>
    %97 = arith.mulf %90, %96 : vector<8x128xf32>
    %98 = arith.addf %95, %97 : vector<8x128xf32>
    %c2_32 = arith.constant 2 : index
    %c0_33 = arith.constant 0 : index
    %c0_34 = arith.constant 0 : index
    %99 = vector.load %arg7[%c2_32, %c0_33, %c0_34] : memref<8x8x128xf32, #tpu.memory_space<vmem>>, vector<1x8x128xf32>
    %100 = vector.shape_cast %99 : vector<1x8x128xf32> to vector<8x128xf32>
    %101 = vector.shape_cast %98 : vector<8x128xf32> to vector<1x8x128xf32>
    tpu.vector_store %arg7[%c2_32, %c0_33, %c0_34], %101 {strides = array<i32>} : memref<8x8x128xf32, #tpu.memory_space<vmem>>, vector<1x8x128xf32>,
    %c3 = arith.constant 3 : index
    %c0_35 = arith.constant 0 : index
    %c0_36 = arith.constant 0 : index
    %102 = vector.load %arg2[%c3, %c0_35, %c0_36] : memref<8x8x384xf32, #tpu.memory_space<vmem>>, vector<1x8x384xf32>
    %103 = vector.shape_cast %102 : vector<1x8x384xf32> to vector<8x384xf32>
    %cst_37 = arith.constant dense<0.000000e+00> : vector<8x256xf32>
    %104 = tpu.matmul %98, %3, %cst_37 {dimension_numbers = #tpu.dot_dimension_numbers<[1], [0], [0], [1], [0, 0, 1, 1], [], []>} : vector<8x128xf32>, vector<128x256xf32>, vector<8x256xf32> -> vector<8x256xf32>
    %cst_38 = arith.constant dense<0.000000e+00> : vector<8x128xf32>
    %105 = tpu.matmul %98, %4, %cst_38 {dimension_numbers = #tpu.dot_dimension_numbers<[1], [0], [0], [1], [0, 0, 1, 1], [], []>} : vector<8x128xf32>, vector<128x128xf32>, vector<8x128xf32> -> vector<8x128xf32>
    %106 = vector.extract_strided_slice %103 {offsets = [0, 0], sizes = [8, 128], strides = [1, 1]} : vector<8x384xf32> to vector<8x128xf32>
    %107 = vector.extract_strided_slice %104 {offsets = [0, 0], sizes = [8, 128], strides = [1, 1]} : vector<8x256xf32> to vector<8x128xf32>
    %108 = arith.addf %106, %107 : vector<8x128xf32>
    %109 = arith.negf %108 : vector<8x128xf32>
    %110 = math.exp %109 : vector<8x128xf32>
    %cst_39 = arith.constant 1.000000e+00 : f32
    %111 = vector.broadcast %cst_39 : f32 to vector<8x128xf32>
    %112 = arith.addf %111, %110 : vector<8x128xf32>
    %113 = arith.divf %111, %112 : vector<8x128xf32>
    %114 = vector.extract_strided_slice %103 {offsets = [0, 128], sizes = [8, 128], strides = [1, 1]} : vector<8x384xf32> to vector<8x128xf32>
    %115 = vector.extract_strided_slice %104 {offsets = [0, 128], sizes = [8, 128], strides = [1, 1]} : vector<8x256xf32> to vector<8x128xf32>
    %116 = arith.addf %114, %115 : vector<8x128xf32>
    %117 = arith.negf %116 : vector<8x128xf32>
    %118 = math.exp %117 : vector<8x128xf32>
    %cst_40 = arith.constant 1.000000e+00 : f32
    %119 = vector.broadcast %cst_40 : f32 to vector<8x128xf32>
    %120 = arith.addf %119, %118 : vector<8x128xf32>
    %121 = arith.divf %119, %120 : vector<8x128xf32>
    %122 = vector.extract_strided_slice %103 {offsets = [0, 256], sizes = [8, 128], strides = [1, 1]} : vector<8x384xf32> to vector<8x128xf32>
    %123 = arith.addf %105, %7 : vector<8x128xf32>
    %124 = arith.mulf %113, %123 : vector<8x128xf32>
    %125 = arith.addf %122, %124 : vector<8x128xf32>
    %126 = math.tanh %125 : vector<8x128xf32>
    %127 = arith.subf %98, %126 : vector<8x128xf32>
    %128 = arith.mulf %121, %127 : vector<8x128xf32>
    %129 = arith.addf %126, %128 : vector<8x128xf32>
    %c3_41 = arith.constant 3 : index
    %c0_42 = arith.constant 0 : index
    %c0_43 = arith.constant 0 : index
    %130 = vector.load %arg7[%c3_41, %c0_42, %c0_43] : memref<8x8x128xf32, #tpu.memory_space<vmem>>, vector<1x8x128xf32>
    %131 = vector.shape_cast %130 : vector<1x8x128xf32> to vector<8x128xf32>
    %132 = vector.shape_cast %129 : vector<8x128xf32> to vector<1x8x128xf32>
    tpu.vector_store %arg7[%c3_41, %c0_42, %c0_43], %132 {strides = array<i32>} : memref<8x8x128xf32, #tpu.memory_space<vmem>>, vector<1x8x128xf32>,
    %c4 = arith.constant 4 : index
    %c0_44 = arith.constant 0 : index
    %c0_45 = arith.constant 0 : index
    %133 = vector.load %arg2[%c4, %c0_44, %c0_45] : memref<8x8x384xf32, #tpu.memory_space<vmem>>, vector<1x8x384xf32>
    %134 = vector.shape_cast %133 : vector<1x8x384xf32> to vector<8x384xf32>
    %cst_46 = arith.constant dense<0.000000e+00> : vector<8x256xf32>
    %135 = tpu.matmul %129, %3, %cst_46 {dimension_numbers = #tpu.dot_dimension_numbers<[1], [0], [0], [1], [0, 0, 1, 1], [], []>} : vector<8x128xf32>, vector<128x256xf32>, vector<8x256xf32> -> vector<8x256xf32>
    %cst_47 = arith.constant dense<0.000000e+00> : vector<8x128xf32>
    %136 = tpu.matmul %129, %4, %cst_47 {dimension_numbers = #tpu.dot_dimension_numbers<[1], [0], [0], [1], [0, 0, 1, 1], [], []>} : vector<8x128xf32>, vector<128x128xf32>, vector<8x128xf32> -> vector<8x128xf32>
    %137 = vector.extract_strided_slice %134 {offsets = [0, 0], sizes = [8, 128], strides = [1, 1]} : vector<8x384xf32> to vector<8x128xf32>
    %138 = vector.extract_strided_slice %135 {offsets = [0, 0], sizes = [8, 128], strides = [1, 1]} : vector<8x256xf32> to vector<8x128xf32>
    %139 = arith.addf %137, %138 : vector<8x128xf32>
    %140 = arith.negf %139 : vector<8x128xf32>
    %141 = math.exp %140 : vector<8x128xf32>
    %cst_48 = arith.constant 1.000000e+00 : f32
    %142 = vector.broadcast %cst_48 : f32 to vector<8x128xf32>
    %143 = arith.addf %142, %141 : vector<8x128xf32>
    %144 = arith.divf %142, %143 : vector<8x128xf32>
    %145 = vector.extract_strided_slice %134 {offsets = [0, 128], sizes = [8, 128], strides = [1, 1]} : vector<8x384xf32> to vector<8x128xf32>
    %146 = vector.extract_strided_slice %135 {offsets = [0, 128], sizes = [8, 128], strides = [1, 1]} : vector<8x256xf32> to vector<8x128xf32>
    %147 = arith.addf %145, %146 : vector<8x128xf32>
    %148 = arith.negf %147 : vector<8x128xf32>
    %149 = math.exp %148 : vector<8x128xf32>
    %cst_49 = arith.constant 1.000000e+00 : f32
    %150 = vector.broadcast %cst_49 : f32 to vector<8x128xf32>
    %151 = arith.addf %150, %149 : vector<8x128xf32>
    %152 = arith.divf %150, %151 : vector<8x128xf32>
    %153 = vector.extract_strided_slice %134 {offsets = [0, 256], sizes = [8, 128], strides = [1, 1]} : vector<8x384xf32> to vector<8x128xf32>
    %154 = arith.addf %136, %7 : vector<8x128xf32>
    %155 = arith.mulf %144, %154 : vector<8x128xf32>
    %156 = arith.addf %153, %155 : vector<8x128xf32>
    %157 = math.tanh %156 : vector<8x128xf32>
    %158 = arith.subf %129, %157 : vector<8x128xf32>
    %159 = arith.mulf %152, %158 : vector<8x128xf32>
    %160 = arith.addf %157, %159 : vector<8x128xf32>
    %c4_50 = arith.constant 4 : index
    %c0_51 = arith.constant 0 : index
    %c0_52 = arith.constant 0 : index
    %161 = vector.load %arg7[%c4_50, %c0_51, %c0_52] : memref<8x8x128xf32, #tpu.memory_space<vmem>>, vector<1x8x128xf32>
    %162 = vector.shape_cast %161 : vector<1x8x128xf32> to vector<8x128xf32>
    %163 = vector.shape_cast %160 : vector<8x128xf32> to vector<1x8x128xf32>
    tpu.vector_store %arg7[%c4_50, %c0_51, %c0_52], %163 {strides = array<i32>} : memref<8x8x128xf32, #tpu.memory_space<vmem>>, vector<1x8x128xf32>,
    %c5 = arith.constant 5 : index
    %c0_53 = arith.constant 0 : index
    %c0_54 = arith.constant 0 : index
    %164 = vector.load %arg2[%c5, %c0_53, %c0_54] : memref<8x8x384xf32, #tpu.memory_space<vmem>>, vector<1x8x384xf32>
    %165 = vector.shape_cast %164 : vector<1x8x384xf32> to vector<8x384xf32>
    %cst_55 = arith.constant dense<0.000000e+00> : vector<8x256xf32>
    %166 = tpu.matmul %160, %3, %cst_55 {dimension_numbers = #tpu.dot_dimension_numbers<[1], [0], [0], [1], [0, 0, 1, 1], [], []>} : vector<8x128xf32>, vector<128x256xf32>, vector<8x256xf32> -> vector<8x256xf32>
    %cst_56 = arith.constant dense<0.000000e+00> : vector<8x128xf32>
    %167 = tpu.matmul %160, %4, %cst_56 {dimension_numbers = #tpu.dot_dimension_numbers<[1], [0], [0], [1], [0, 0, 1, 1], [], []>} : vector<8x128xf32>, vector<128x128xf32>, vector<8x128xf32> -> vector<8x128xf32>
    %168 = vector.extract_strided_slice %165 {offsets = [0, 0], sizes = [8, 128], strides = [1, 1]} : vector<8x384xf32> to vector<8x128xf32>
    %169 = vector.extract_strided_slice %166 {offsets = [0, 0], sizes = [8, 128], strides = [1, 1]} : vector<8x256xf32> to vector<8x128xf32>
    %170 = arith.addf %168, %169 : vector<8x128xf32>
    %171 = arith.negf %170 : vector<8x128xf32>
    %172 = math.exp %171 : vector<8x128xf32>
    %cst_57 = arith.constant 1.000000e+00 : f32
    %173 = vector.broadcast %cst_57 : f32 to vector<8x128xf32>
    %174 = arith.addf %173, %172 : vector<8x128xf32>
    %175 = arith.divf %173, %174 : vector<8x128xf32>
    %176 = vector.extract_strided_slice %165 {offsets = [0, 128], sizes = [8, 128], strides = [1, 1]} : vector<8x384xf32> to vector<8x128xf32>
    %177 = vector.extract_strided_slice %166 {offsets = [0, 128], sizes = [8, 128], strides = [1, 1]} : vector<8x256xf32> to vector<8x128xf32>
    %178 = arith.addf %176, %177 : vector<8x128xf32>
    %179 = arith.negf %178 : vector<8x128xf32>
    %180 = math.exp %179 : vector<8x128xf32>
    %cst_58 = arith.constant 1.000000e+00 : f32
    %181 = vector.broadcast %cst_58 : f32 to vector<8x128xf32>
    %182 = arith.addf %181, %180 : vector<8x128xf32>
    %183 = arith.divf %181, %182 : vector<8x128xf32>
    %184 = vector.extract_strided_slice %165 {offsets = [0, 256], sizes = [8, 128], strides = [1, 1]} : vector<8x384xf32> to vector<8x128xf32>
    %185 = arith.addf %167, %7 : vector<8x128xf32>
    %186 = arith.mulf %175, %185 : vector<8x128xf32>
    %187 = arith.addf %184, %186 : vector<8x128xf32>
    %188 = math.tanh %187 : vector<8x128xf32>
    %189 = arith.subf %160, %188 : vector<8x128xf32>
    %190 = arith.mulf %183, %189 : vector<8x128xf32>
    %191 = arith.addf %188, %190 : vector<8x128xf32>
    %c5_59 = arith.constant 5 : index
    %c0_60 = arith.constant 0 : index
    %c0_61 = arith.constant 0 : index
    %192 = vector.load %arg7[%c5_59, %c0_60, %c0_61] : memref<8x8x128xf32, #tpu.memory_space<vmem>>, vector<1x8x128xf32>
    %193 = vector.shape_cast %192 : vector<1x8x128xf32> to vector<8x128xf32>
    %194 = vector.shape_cast %191 : vector<8x128xf32> to vector<1x8x128xf32>
    tpu.vector_store %arg7[%c5_59, %c0_60, %c0_61], %194 {strides = array<i32>} : memref<8x8x128xf32, #tpu.memory_space<vmem>>, vector<1x8x128xf32>,
    %c6 = arith.constant 6 : index
    %c0_62 = arith.constant 0 : index
    %c0_63 = arith.constant 0 : index
    %195 = vector.load %arg2[%c6, %c0_62, %c0_63] : memref<8x8x384xf32, #tpu.memory_space<vmem>>, vector<1x8x384xf32>
    %196 = vector.shape_cast %195 : vector<1x8x384xf32> to vector<8x384xf32>
    %cst_64 = arith.constant dense<0.000000e+00> : vector<8x256xf32>
    %197 = tpu.matmul %191, %3, %cst_64 {dimension_numbers = #tpu.dot_dimension_numbers<[1], [0], [0], [1], [0, 0, 1, 1], [], []>} : vector<8x128xf32>, vector<128x256xf32>, vector<8x256xf32> -> vector<8x256xf32>
    %cst_65 = arith.constant dense<0.000000e+00> : vector<8x128xf32>
    %198 = tpu.matmul %191, %4, %cst_65 {dimension_numbers = #tpu.dot_dimension_numbers<[1], [0], [0], [1], [0, 0, 1, 1], [], []>} : vector<8x128xf32>, vector<128x128xf32>, vector<8x128xf32> -> vector<8x128xf32>
    %199 = vector.extract_strided_slice %196 {offsets = [0, 0], sizes = [8, 128], strides = [1, 1]} : vector<8x384xf32> to vector<8x128xf32>
    %200 = vector.extract_strided_slice %197 {offsets = [0, 0], sizes = [8, 128], strides = [1, 1]} : vector<8x256xf32> to vector<8x128xf32>
    %201 = arith.addf %199, %200 : vector<8x128xf32>
    %202 = arith.negf %201 : vector<8x128xf32>
    %203 = math.exp %202 : vector<8x128xf32>
    %cst_66 = arith.constant 1.000000e+00 : f32
    %204 = vector.broadcast %cst_66 : f32 to vector<8x128xf32>
    %205 = arith.addf %204, %203 : vector<8x128xf32>
    %206 = arith.divf %204, %205 : vector<8x128xf32>
    %207 = vector.extract_strided_slice %196 {offsets = [0, 128], sizes = [8, 128], strides = [1, 1]} : vector<8x384xf32> to vector<8x128xf32>
    %208 = vector.extract_strided_slice %197 {offsets = [0, 128], sizes = [8, 128], strides = [1, 1]} : vector<8x256xf32> to vector<8x128xf32>
    %209 = arith.addf %207, %208 : vector<8x128xf32>
    %210 = arith.negf %209 : vector<8x128xf32>
    %211 = math.exp %210 : vector<8x128xf32>
    %cst_67 = arith.constant 1.000000e+00 : f32
    %212 = vector.broadcast %cst_67 : f32 to vector<8x128xf32>
    %213 = arith.addf %212, %211 : vector<8x128xf32>
    %214 = arith.divf %212, %213 : vector<8x128xf32>
    %215 = vector.extract_strided_slice %196 {offsets = [0, 256], sizes = [8, 128], strides = [1, 1]} : vector<8x384xf32> to vector<8x128xf32>
    %216 = arith.addf %198, %7 : vector<8x128xf32>
    %217 = arith.mulf %206, %216 : vector<8x128xf32>
    %218 = arith.addf %215, %217 : vector<8x128xf32>
    %219 = math.tanh %218 : vector<8x128xf32>
    %220 = arith.subf %191, %219 : vector<8x128xf32>
    %221 = arith.mulf %214, %220 : vector<8x128xf32>
    %222 = arith.addf %219, %221 : vector<8x128xf32>
    %c6_68 = arith.constant 6 : index
    %c0_69 = arith.constant 0 : index
    %c0_70 = arith.constant 0 : index
    %223 = vector.load %arg7[%c6_68, %c0_69, %c0_70] : memref<8x8x128xf32, #tpu.memory_space<vmem>>, vector<1x8x128xf32>
    %224 = vector.shape_cast %223 : vector<1x8x128xf32> to vector<8x128xf32>
    %225 = vector.shape_cast %222 : vector<8x128xf32> to vector<1x8x128xf32>
    tpu.vector_store %arg7[%c6_68, %c0_69, %c0_70], %225 {strides = array<i32>} : memref<8x8x128xf32, #tpu.memory_space<vmem>>, vector<1x8x128xf32>,
    %c7 = arith.constant 7 : index
    %c0_71 = arith.constant 0 : index
    %c0_72 = arith.constant 0 : index
    %226 = vector.load %arg2[%c7, %c0_71, %c0_72] : memref<8x8x384xf32, #tpu.memory_space<vmem>>, vector<1x8x384xf32>
    %227 = vector.shape_cast %226 : vector<1x8x384xf32> to vector<8x384xf32>
    %cst_73 = arith.constant dense<0.000000e+00> : vector<8x256xf32>
    %228 = tpu.matmul %222, %3, %cst_73 {dimension_numbers = #tpu.dot_dimension_numbers<[1], [0], [0], [1], [0, 0, 1, 1], [], []>} : vector<8x128xf32>, vector<128x256xf32>, vector<8x256xf32> -> vector<8x256xf32>
    %cst_74 = arith.constant dense<0.000000e+00> : vector<8x128xf32>
    %229 = tpu.matmul %222, %4, %cst_74 {dimension_numbers = #tpu.dot_dimension_numbers<[1], [0], [0], [1], [0, 0, 1, 1], [], []>} : vector<8x128xf32>, vector<128x128xf32>, vector<8x128xf32> -> vector<8x128xf32>
    %230 = vector.extract_strided_slice %227 {offsets = [0, 0], sizes = [8, 128], strides = [1, 1]} : vector<8x384xf32> to vector<8x128xf32>
    %231 = vector.extract_strided_slice %228 {offsets = [0, 0], sizes = [8, 128], strides = [1, 1]} : vector<8x256xf32> to vector<8x128xf32>
    %232 = arith.addf %230, %231 : vector<8x128xf32>
    %233 = arith.negf %232 : vector<8x128xf32>
    %234 = math.exp %233 : vector<8x128xf32>
    %cst_75 = arith.constant 1.000000e+00 : f32
    %235 = vector.broadcast %cst_75 : f32 to vector<8x128xf32>
    %236 = arith.addf %235, %234 : vector<8x128xf32>
    %237 = arith.divf %235, %236 : vector<8x128xf32>
    %238 = vector.extract_strided_slice %227 {offsets = [0, 128], sizes = [8, 128], strides = [1, 1]} : vector<8x384xf32> to vector<8x128xf32>
    %239 = vector.extract_strided_slice %228 {offsets = [0, 128], sizes = [8, 128], strides = [1, 1]} : vector<8x256xf32> to vector<8x128xf32>
    %240 = arith.addf %238, %239 : vector<8x128xf32>
    %241 = arith.negf %240 : vector<8x128xf32>
    %242 = math.exp %241 : vector<8x128xf32>
    %cst_76 = arith.constant 1.000000e+00 : f32
    %243 = vector.broadcast %cst_76 : f32 to vector<8x128xf32>
    %244 = arith.addf %243, %242 : vector<8x128xf32>
    %245 = arith.divf %243, %244 : vector<8x128xf32>
    %246 = vector.extract_strided_slice %227 {offsets = [0, 256], sizes = [8, 128], strides = [1, 1]} : vector<8x384xf32> to vector<8x128xf32>
    %247 = arith.addf %229, %7 : vector<8x128xf32>
    %248 = arith.mulf %237, %247 : vector<8x128xf32>
    %249 = arith.addf %246, %248 : vector<8x128xf32>
    %250 = math.tanh %249 : vector<8x128xf32>
    %251 = arith.subf %222, %250 : vector<8x128xf32>
    %252 = arith.mulf %245, %251 : vector<8x128xf32>
    %253 = arith.addf %250, %252 : vector<8x128xf32>
    %c7_77 = arith.constant 7 : index
    %c0_78 = arith.constant 0 : index
    %c0_79 = arith.constant 0 : index
    %254 = vector.load %arg7[%c7_77, %c0_78, %c0_79] : memref<8x8x128xf32, #tpu.memory_space<vmem>>, vector<1x8x128xf32>
    %255 = vector.shape_cast %254 : vector<1x8x128xf32> to vector<8x128xf32>
    %256 = vector.shape_cast %253 : vector<8x128xf32> to vector<1x8x128xf32>
    tpu.vector_store %arg7[%c7_77, %c0_78, %c0_79], %256 {strides = array<i32>} : memref<8x8x128xf32, #tpu.memory_space<vmem>>, vector<1x8x128xf32>,
    %c0_80 = arith.constant 0 : index
    %c0_81 = arith.constant 0 : index
    %257 = vector.load %arg8[%c0_80, %c0_81] : memref<8x128xf32, #tpu.memory_space<vmem>>, vector<8x128xf32>
    tpu.vector_store %arg8[%c0_80, %c0_81], %253 {strides = array<i32>} : memref<8x128xf32, #tpu.memory_space<vmem>>, vector<8x128xf32>,
    return
  }
  func.func @transform_0(%arg0: i32, %arg1: i32) -> (i32, i32, i32) {
    %c0_i32 = arith.constant 0 : i32
    %c0_i32_0 = arith.constant 0 : i32
    return %arg1, %arg0, %c0_i32 : i32, i32, i32
  }
  func.func @transform_1(%arg0: i32, %arg1: i32) -> (i32, i32) {
    %c0_i32 = arith.constant 0 : i32
    %c0_i32_0 = arith.constant 0 : i32
    return %arg0, %c0_i32 : i32, i32
  }
  func.func @transform_2(%arg0: i32, %arg1: i32) -> (i32, i32) {
    %c0_i32 = arith.constant 0 : i32
    %c0_i32_0 = arith.constant 0 : i32
    %c0_i32_1 = arith.constant 0 : i32
    return %c0_i32, %c0_i32_0 : i32, i32
  }
  func.func @transform_3(%arg0: i32, %arg1: i32) -> (i32, i32) {
    %c0_i32 = arith.constant 0 : i32
    %c0_i32_0 = arith.constant 0 : i32
    %c0_i32_1 = arith.constant 0 : i32
    return %c0_i32, %c0_i32_0 : i32, i32
  }
  func.func @transform_4(%arg0: i32, %arg1: i32) -> (i32, i32) {
    %c0_i32 = arith.constant 0 : i32
    %c0_i32_0 = arith.constant 0 : i32
    %c0_i32_1 = arith.constant 0 : i32
    return %c0_i32, %c0_i32_0 : i32, i32
  }
  func.func @transform_5(%arg0: i32, %arg1: i32) -> (i32, i32, i32) {
    %c0_i32 = arith.constant 0 : i32
    %c0_i32_0 = arith.constant 0 : i32
    return %arg1, %arg0, %c0_i32 : i32, i32, i32
  }
}

</mosaic_0001>

<llo_original>
// kernel: decoder_forward.3
$region0: #{decoder_forward.3}
  #allocation0 [shape = 'u32[]', space=smem, size = 0x4, offset = 0x4, fixed_abs, tag = 'smem constant byte address 0x4 - core index']
  #allocation1 [shape = 'u32[144,128]{1,0:T(1,128)}', space=vmem, size = 0x12000, scoped, tag = 'internal scratch']
  #allocation2 [shape = 'f32[16,384]{1,0:T(8,128)}', space=vmem, size = 0x6000, scoped, tag = 'scratch operand']
  %s0 = inlined_call_operand.vmem [shape: f32[16,128], index: 0, kind: input, shape index: {}]
  %s1 = inlined_call_operand.vmem [shape: f32[128,384], index: 1, kind: input, shape index: {}]
  %s2 = inlined_call_operand.vmem [shape: f32[1,384], index: 2, kind: input, shape index: {}]
  %s3 = inlined_call_operand.vmem [shape: f32[16,384], index: 3, kind: output, shape index: {}]
  %s4 = sld [smem:[#allocation0]]
  $region30: #{decoder_forward.3} parent=0
    _
  %s6 = ssub.s32 1, %s4
  %s7 = scalar_select 0, %s6, %s4
  // Predicated region
  $region2: #{decoder_forward.3} parent=0 // pred_check
    _
  $region3: #{decoder_forward.3} parent=0 // pred_check_branch
    %9 = sbr.rel (0) target = $region5
  $region4: #{decoder_forward.3} parent=0 // pred_region
    _
  $region5: #{decoder_forward.3} parent=0 // pred_fallthru
    _
  // Predicated region
  $region6: #{decoder_forward.3} parent=0 // pred_check
    _
  $region7: #{decoder_forward.3} parent=0 // pred_check_branch
    %11 = sbr.rel (0) target = $region9
  $region8: #{decoder_forward.3} parent=0 // pred_region
    _
  $region9: #{decoder_forward.3} parent=0 // pred_fallthru
    _
  // Predicated region
  $region10: #{decoder_forward.3} parent=0 // pred_check
    _
  $region11: #{decoder_forward.3} parent=0 // pred_check_branch
    %13 = sbr.rel (0) target = $region13
  $region12: #{decoder_forward.3} parent=0 // pred_region
    _
  $region13: #{decoder_forward.3} parent=0 // pred_fallthru
    _
  %p14 = scmp.eq.s32.totalorder 0, 0
  // Predicated region
  $region14: #{decoder_forward.3} parent=0 // pred_check
    %p15 = pneg %p14
  $region15: #{decoder_forward.3} parent=0 // pred_check_branch
    %17 = sbr.rel (%p15) target = $region17
  $region16: #{decoder_forward.3} parent=0 // pred_region
    %18 = vst [vmem:[#allocation2] sm:$0xff] 0.0
    %19 = vst [vmem:[#allocation2 + $0x8] sm:$0xff] 0.0
    %20 = vst [vmem:[#allocation2 + $0x10] sm:$0xff] 0.0
    %21 = vst [vmem:[#allocation2 + $0x18] sm:$0xff] 0.0
    %22 = vst [vmem:[#allocation2 + $0x20] sm:$0xff] 0.0
    %23 = vst [vmem:[#allocation2 + $0x28] sm:$0xff] 0.0
  $region17: #{decoder_forward.3} parent=0 // pred_fallthru
    _
  %v24 = vld [vmem:[#allocation2] sm:$0xff]
  %v25 = vld [vmem:[#allocation2 + $0x8] sm:$0xff]
  %v26 = vld [vmem:[#allocation2 + $0x10] sm:$0xff]
  %v27 = vld [vmem:[#allocation2 + $0x18] sm:$0xff]
  %v28 = vld [vmem:[#allocation2 + $0x20] sm:$0xff]
  %v29 = vld [vmem:[#allocation2 + $0x28] sm:$0xff]
  %v30 = vld [vmem:[%s0] sm:$0xff]
  %v31 = vld [vmem:[%s0 + $0x8] sm:$0xff]
  %v32 = vld [vmem:[%s1] sm:$0xff]
  %v33 = vld [vmem:[%s1 + $0x8] sm:$0xff]
  %v34 = vld [vmem:[%s1 + $0x10] sm:$0xff]
  %v35 = vld [vmem:[%s1 + $0x18] sm:$0xff]
  %v36 = vld [vmem:[%s1 + $0x20] sm:$0xff]
  %v37 = vld [vmem:[%s1 + $0x28] sm:$0xff]
  %v38 = vld [vmem:[%s1 + $0x30] sm:$0xff]
  %v39 = vld [vmem:[%s1 + $0x38] sm:$0xff]
  %v40 = vld [vmem:[%s1 + $0x40] sm:$0xff]
  %v41 = vld [vmem:[%s1 + $0x48] sm:$0xff]
  %v42 = vld [vmem:[%s1 + $0x50] sm:$0xff]
  %v43 = vld [vmem:[%s1 + $0x58] sm:$0xff]
  %v44 = vld [vmem:[%s1 + $0x60] sm:$0xff]
  %v45 = vld [vmem:[%s1 + $0x68] sm:$0xff]
  %v46 = vld [vmem:[%s1 + $0x70] sm:$0xff]
  %v47 = vld [vmem:[%s1 + $0x78] sm:$0xff]
  %v48 = vld [vmem:[%s1 + $0x80] sm:$0xff]
  %v49 = vld [vmem:[%s1 + $0x88] sm:$0xff]
  %v50 = vld [vmem:[%s1 + $0x90] sm:$0xff]
  %v51 = vld [vmem:[%s1 + $0x98] sm:$0xff]
  %v52 = vld [vmem:[%s1 + $0xa0] sm:$0xff]
  %v53 = vld [vmem:[%s1 + $0xa8] sm:$0xff]
  %v54 = vld [vmem:[%s1 + $0xb0] sm:$0xff]
  %v55 = vld [vmem:[%s1 + $0xb8] sm:$0xff]
  %v56 = vld [vmem:[%s1 + $0xc0] sm:$0xff]
  %v57 = vld [vmem:[%s1 + $0xc8] sm:$0xff]
  %v58 = vld [vmem:[%s1 + $0xd0] sm:$0xff]
  %v59 = vld [vmem:[%s1 + $0xd8] sm:$0xff]
  %v60 = vld [vmem:[%s1 + $0xe0] sm:$0xff]
  %v61 = vld [vmem:[%s1 + $0xe8] sm:$0xff]
  %v62 = vld [vmem:[%s1 + $0xf0] sm:$0xff]
  %v63 = vld [vmem:[%s1 + $0xf8] sm:$0xff]
  %v64 = vld [vmem:[%s1 + $0x100] sm:$0xff]
  %v65 = vld [vmem:[%s1 + $0x108] sm:$0xff]
  %v66 = vld [vmem:[%s1 + $0x110] sm:$0xff]
  %v67 = vld [vmem:[%s1 + $0x118] sm:$0xff]
  %v68 = vld [vmem:[%s1 + $0x120] sm:$0xff]
  %v69 = vld [vmem:[%s1 + $0x128] sm:$0xff]
  %v70 = vld [vmem:[%s1 + $0x130] sm:$0xff]
  %v71 = vld [vmem:[%s1 + $0x138] sm:$0xff]
  %v72 = vld [vmem:[%s1 + $0x140] sm:$0xff]
  %v73 = vld [vmem:[%s1 + $0x148] sm:$0xff]
  %v74 = vld [vmem:[%s1 + $0x150] sm:$0xff]
  %v75 = vld [vmem:[%s1 + $0x158] sm:$0xff]
  %v76 = vld [vmem:[%s1 + $0x160] sm:$0xff]
  %v77 = vld [vmem:[%s1 + $0x168] sm:$0xff]
  %v78 = vld [vmem:[%s1 + $0x170] sm:$0xff]
  %v79 = vld [vmem:[%s1 + $0x178] sm:$0xff]
  %80 = vmatprep.subr.mxu0 %v78
  %81 = vmatpush1.msra.mxu0 %v77
  %82 = vmatprep.subr.mxu0 %v75
  %83 = vmatpush1.msra.mxu0 %v74
  %84 = vmatprep.subr.mxu0 %v72
  %85 = vmatpush1.msra.mxu0 %v71
  %86 = vmatprep.subr.mxu0 %v69
  %87 = vmatpush1.msra.mxu0 %v68
  %88 = vmatprep.subr.mxu0 %v66
  %89 = vmatpush1.msra.mxu0 %v65
  %90 = vmatprep.subr.mxu0 %v63
  %91 = vmatpush1.msra.mxu0 %v62
  %92 = vmatprep.subr.mxu0 %v60
  %93 = vmatpush1.msra.mxu0 %v59
  %94 = vmatprep.subr.mxu0 %v57
  %95 = vmatpush1.msra.mxu0 %v56
  %96 = vmatprep.subr.mxu0 %v54
  %97 = vmatpush1.msra.mxu0 %v53
  %98 = vmatprep.subr.mxu0 %v51
  %99 = vmatpush1.msra.mxu0 %v50
  %100 = vmatprep.subr.mxu0 %v48
  %101 = vmatpush1.msra.mxu0 %v47
  %102 = vmatprep.subr.mxu0 %v45
  %103 = vmatpush1.msra.mxu0 %v44
  %104 = vmatprep.subr.mxu0 %v42
  %105 = vmatpush1.msra.mxu0 %v41
  %106 = vmatprep.subr.mxu0 %v39
  %107 = vmatpush1.msra.mxu0 %v38
  %108 = vmatprep.subr.mxu0 %v36
  %109 = vmatpush1.msra.mxu0 %v35
  %110 = vmatprep.subr.mxu0 %v33
  %111 = vmatpush1.msra.mxu0 %v32
  %112 = vmatprep.subr.mxu0 0.0
  %113 = vmatpush2.msra.mxu0 0.0
  %114 = vmatprep.subr.mxu0 0.0
  %115 = vmatpush2.msra.mxu0 0.0
  %116 = vmatprep.subr.mxu0 0.0
  %117 = vmatpush2.msra.mxu0 0.0
  %118 = vmatprep.subr.mxu0 0.0
  %119 = vmatpush2.msra.mxu0 0.0
  %120 = vmatprep.subr.mxu0 0.0
  %121 = vmatpush2.msra.mxu0 0.0
  %122 = vmatprep.subr.mxu0 0.0
  %123 = vmatpush2.msra.mxu0 0.0
  %124 = vmatprep.subr.mxu0 0.0
  %125 = vmatpush2.msra.mxu0 0.0
  %126 = vmatprep.subr.mxu0 0.0
  %127 = vmatpush2.msra.mxu0 0.0
  %128 = vmatprep.subr.mxu0 0.0
  %129 = vmatpush2.msra.mxu0 0.0
  %130 = vmatprep.subr.mxu0 0.0
  %131 = vmatpush2.msra.mxu0 0.0
  %132 = vmatprep.subr.mxu0 0.0
  %133 = vmatpush2.msra.mxu0 0.0
  %134 = vmatprep.subr.mxu0 0.0
  %135 = vmatpush2.msra.mxu0 0.0
  %136 = vmatprep.subr.mxu0 0.0
  %137 = vmatpush2.msra.mxu0 0.0
  %138 = vmatprep.subr.mxu0 0.0
  %139 = vmatpush2.msra.mxu0 0.0
  %140 = vmatprep.subr.mxu0 0.0
  %141 = vmatpush2.msra.mxu0 0.0
  %142 = vmatprep.subr.mxu0 0.0
  %143 = vmatpush2.msra.mxu0 0.0
  %144 = vmatprep.mubr.f32.mxu0 0.0
  %145 = vmatmul.mubr.f32.gmra.mxu0 %v30
  %v146 = vpop.f32.mrf.mxu0
  %v147 = vadd.f32 0.0, %v146
  %v148 = vpop.f32.mrf.mxu0
  %v149 = vadd.f32 0.0, %v148
  %150 = vmatprep.mubr.f32.mxu0 0.0
  %151 = vmatmul.mubr.f32.gmra.mxu0 %v31
  %v152 = vpop.f32.mrf.mxu0
  %v153 = vadd.f32 0.0, %v152
  %v154 = vpop.f32.mrf.mxu0
  %v155 = vadd.f32 0.0, %v154
  %156 = vdwg.mxu0
  %157 = vmatprep.subr.mxu0 0.0
  %158 = vmatpush1.msra.mxu0 %v79
  %159 = vmatprep.subr.mxu0 0.0
  %160 = vmatpush1.msra.mxu0 %v76
  %161 = vmatprep.subr.mxu0 0.0
  %162 = vmatpush1.msra.mxu0 %v73
  %163 = vmatprep.subr.mxu0 0.0
  %164 = vmatpush1.msra.mxu0 %v70
  %165 = vmatprep.subr.mxu0 0.0
  %166 = vmatpush1.msra.mxu0 %v67
  %167 = vmatprep.subr.mxu0 0.0
  %168 = vmatpush1.msra.mxu0 %v64
  %169 = vmatprep.subr.mxu0 0.0
  %170 = vmatpush1.msra.mxu0 %v61
  %171 = vmatprep.subr.mxu0 0.0
  %172 = vmatpush1.msra.mxu0 %v58
  %173 = vmatprep.subr.mxu0 0.0
  %174 = vmatpush1.msra.mxu0 %v55
  %175 = vmatprep.subr.mxu0 0.0
  %176 = vmatpush1.msra.mxu0 %v52
  %177 = vmatprep.subr.mxu0 0.0
  %178 = vmatpush1.msra.mxu0 %v49
  %179 = vmatprep.subr.mxu0 0.0
  %180 = vmatpush1.msra.mxu0 %v46
  %181 = vmatprep.subr.mxu0 0.0
  %182 = vmatpush1.msra.mxu0 %v43
  %183 = vmatprep.subr.mxu0 0.0
  %184 = vmatpush1.msra.mxu0 %v40
  %185 = vmatprep.subr.mxu0 0.0
  %186 = vmatpush1.msra.mxu0 %v37
  %187 = vmatprep.subr.mxu0 0.0
  %188 = vmatpush1.msra.mxu0 %v34
  %189 = vmatprep.subr.mxu0 0.0
  %190 = vmatpush2.msra.mxu0 0.0
  %191 = vmatprep.subr.mxu0 0.0
  %192 = vmatpush2.msra.mxu0 0.0
  %193 = vmatprep.subr.mxu0 0.0
  %194 = vmatpush2.msra.mxu0 0.0
  %195 = vmatprep.subr.mxu0 0.0
  %196 = vmatpush2.msra.mxu0 0.0
  %197 = vmatprep.subr.mxu0 0.0
  %198 = vmatpush2.msra.mxu0 0.0
  %199 = vmatprep.subr.mxu0 0.0
  %200 = vmatpush2.msra.mxu0 0.0
  %201 = vmatprep.subr.mxu0 0.0
  %202 = vmatpush2.msra.mxu0 0.0
  %203 = vmatprep.subr.mxu0 0.0
  %204 = vmatpush2.msra.mxu0 0.0
  %205 = vmatprep.subr.mxu0 0.0
  %206 = vmatpush2.msra.mxu0 0.0
  %207 = vmatprep.subr.mxu0 0.0
  %208 = vmatpush2.msra.mxu0 0.0
  %209 = vmatprep.subr.mxu0 0.0
  %210 = vmatpush2.msra.mxu0 0.0
  %211 = vmatprep.subr.mxu0 0.0
  %212 = vmatpush2.msra.mxu0 0.0
  %213 = vmatprep.subr.mxu0 0.0
  %214 = vmatpush2.msra.mxu0 0.0
  %215 = vmatprep.subr.mxu0 0.0
  %216 = vmatpush2.msra.mxu0 0.0
  %217 = vmatprep.subr.mxu0 0.0
  %218 = vmatpush2.msra.mxu0 0.0
  %219 = vmatprep.subr.mxu0 0.0
  %220 = vmatpush2.msra.mxu0 0.0
  %221 = vmatprep.mubr.f32.mxu0 0.0
  %222 = vmatmul.mubr.f32.gmra.mxu0 %v30
  %v223 = vpop.f32.mrf.mxu0
  %v224 = vadd.f32 0.0, %v223
  %v225 = vpop.f32.mrf.mxu0
  %226 = vmatprep.mubr.f32.mxu0 0.0
  %227 = vmatmul.mubr.f32.gmra.mxu0 %v31
  %v228 = vpop.f32.mrf.mxu0
  %v229 = vadd.f32 0.0, %v228
  %v230 = vpop.f32.mrf.mxu0
  %231 = vdwg.mxu0
  %v232 = vadd.f32 %v24, %v147
  %v233 = vadd.f32 %v25, %v149
  %v234 = vadd.f32 %v26, %v224
  %v235 = vadd.f32 %v27, %v153
  %v236 = vadd.f32 %v28, %v155
  %v237 = vadd.f32 %v29, %v229
  %238 = vst [vmem:[#allocation2] sm:$0xff] %v232
  %239 = vst [vmem:[#allocation2 + $0x8] sm:$0xff] %v233
  %240 = vst [vmem:[#allocation2 + $0x10] sm:$0xff] %v234
  %241 = vst [vmem:[#allocation2 + $0x18] sm:$0xff] %v235
  %242 = vst [vmem:[#allocation2 + $0x20] sm:$0xff] %v236
  %243 = vst [vmem:[#allocation2 + $0x28] sm:$0xff] %v237
  // Predicated region
  $region18: #{decoder_forward.3} parent=0 // pred_check
    %p244 = pneg %p14
  $region19: #{decoder_forward.3} parent=0 // pred_check_branch
    %246 = sbr.rel (%p244) target = $region21
  $region20: #{decoder_forward.3} parent=0 // pred_region
    %v247 = vld [vmem:[#allocation2] sm:$0xff]
    %v248 = vld [vmem:[#allocation2 + $0x8] sm:$0xff]
    %v249 = vld [vmem:[#allocation2 + $0x10] sm:$0xff]
    %v250 = vld [vmem:[#allocation2 + $0x18] sm:$0xff]
    %v251 = vld [vmem:[#allocation2 + $0x20] sm:$0xff]
    %v252 = vld [vmem:[#allocation2 + $0x28] sm:$0xff]
    %v253 = vld [vmem:[%s2] sm:$0x7]
    %v255 = vlaneseq
    %v256 = vshrl.u32 %v255, 7
    %v257 = vsub.s32 0, %v256
    %v258 = vrot.slane %v253, %v257
    %v259 = vlaneseq
    %v260 = vshrl.u32 %v259, 7
    %v261 = vsub.s32 1, %v260
    %v262 = vrot.slane %v253, %v261
    %v263 = vlaneseq
    %v264 = vshrl.u32 %v263, 7
    %v265 = vsub.s32 2, %v264
    %v266 = vrot.slane %v253, %v265
    %v270 = vadd.f32 %v247, %v258
    %v271 = vadd.f32 %v248, %v262
    %v272 = vadd.f32 %v249, %v266
    %v273 = vadd.f32 %v250, %v258
    %v274 = vadd.f32 %v251, %v262
    %v275 = vadd.f32 %v252, %v266
    %276 = vst [vmem:[%s3] sm:$0xff] %v270
    %277 = vst [vmem:[%s3 + $0x8] sm:$0xff] %v271
    %278 = vst [vmem:[%s3 + $0x10] sm:$0xff] %v272
    %279 = vst [vmem:[%s3 + $0x18] sm:$0xff] %v273
    %280 = vst [vmem:[%s3 + $0x20] sm:$0xff] %v274
    %281 = vst [vmem:[%s3 + $0x28] sm:$0xff] %v275
  $region21: #{decoder_forward.3} parent=0 // pred_fallthru
    _
  // Predicated region
  $region22: #{decoder_forward.3} parent=0 // pred_check
    _
  $region23: #{decoder_forward.3} parent=0 // pred_check_branch
    %283 = sbr.rel (0) target = $region25
  $region24: #{decoder_forward.3} parent=0 // pred_region
    _
  $region25: #{decoder_forward.3} parent=0 // pred_fallthru
    _
  // Predicated region
  $region26: #{decoder_forward.3} parent=0 // pred_check
    _
  $region27: #{decoder_forward.3} parent=0 // pred_check_branch
    %285 = sbr.rel (0) target = $region29
  $region28: #{decoder_forward.3} parent=0 // pred_region
    _
  $region29: #{decoder_forward.3} parent=0 // pred_fallthru
    _

// kernel: decoder_forward.5
$region0: #{decoder_forward.5}
  #allocation0 [shape = 'u32[]', space=smem, size = 0x4, offset = 0x4, fixed_abs, tag = 'smem constant byte address 0x4 - core index']
  #allocation1 [shape = 'u32[144,128]{1,0:T(1,128)}', space=vmem, size = 0x12000, scoped, tag = 'internal scratch']
  #allocation2 [shape = 'f32[16,128]{1,0:T(8,128)}', space=vmem, size = 0x2000, scoped, tag = 'scratch operand']
  %s0 = inlined_call_operand.vmem [shape: f32[16,128], index: 0, kind: input, shape index: {}]
  %s1 = inlined_call_operand.vmem [shape: f32[128,128], index: 1, kind: input, shape index: {}]
  %s2 = inlined_call_operand.vmem [shape: f32[1,128], index: 2, kind: input, shape index: {}]
  %s3 = inlined_call_operand.vmem [shape: f32[16,128], index: 3, kind: output, shape index: {}]
  %s4 = sld [smem:[#allocation0]]
  $region30: #{decoder_forward.5} parent=0
    _
  %s6 = ssub.s32 1, %s4
  %s7 = scalar_select 0, %s6, %s4
  // Predicated region
  $region2: #{decoder_forward.5} parent=0 // pred_check
    _
  $region3: #{decoder_forward.5} parent=0 // pred_check_branch
    %9 = sbr.rel (0) target = $region5
  $region4: #{decoder_forward.5} parent=0 // pred_region
    _
  $region5: #{decoder_forward.5} parent=0 // pred_fallthru
    _
  // Predicated region
  $region6: #{decoder_forward.5} parent=0 // pred_check
    _
  $region7: #{decoder_forward.5} parent=0 // pred_check_branch
    %11 = sbr.rel (0) target = $region9
  $region8: #{decoder_forward.5} parent=0 // pred_region
    _
  $region9: #{decoder_forward.5} parent=0 // pred_fallthru
    _
  // Predicated region
  $region10: #{decoder_forward.5} parent=0 // pred_check
    _
  $region11: #{decoder_forward.5} parent=0 // pred_check_branch
    %13 = sbr.rel (0) target = $region13
  $region12: #{decoder_forward.5} parent=0 // pred_region
    _
  $region13: #{decoder_forward.5} parent=0 // pred_fallthru
    _
  %p14 = scmp.eq.s32.totalorder 0, 0
  // Predicated region
  $region14: #{decoder_forward.5} parent=0 // pred_check
    %p15 = pneg %p14
  $region15: #{decoder_forward.5} parent=0 // pred_check_branch
    %17 = sbr.rel (%p15) target = $region17
  $region16: #{decoder_forward.5} parent=0 // pred_region
    %18 = vst [vmem:[#allocation2] sm:$0xff] 0.0
    %19 = vst [vmem:[#allocation2 + $0x8] sm:$0xff] 0.0
  $region17: #{decoder_forward.5} parent=0 // pred_fallthru
    _
  %v20 = vld [vmem:[#allocation2] sm:$0xff]
  %v21 = vld [vmem:[#allocation2 + $0x8] sm:$0xff]
  %v22 = vld [vmem:[%s0] sm:$0xff]
  %v23 = vld [vmem:[%s0 + $0x8] sm:$0xff]
  %v24 = vld [vmem:[%s1] sm:$0xff]
  %v25 = vld [vmem:[%s1 + $0x8] sm:$0xff]
  %v26 = vld [vmem:[%s1 + $0x10] sm:$0xff]
  %v27 = vld [vmem:[%s1 + $0x18] sm:$0xff]
  %v28 = vld [vmem:[%s1 + $0x20] sm:$0xff]
  %v29 = vld [vmem:[%s1 + $0x28] sm:$0xff]
  %v30 = vld [vmem:[%s1 + $0x30] sm:$0xff]
  %v31 = vld [vmem:[%s1 + $0x38] sm:$0xff]
  %v32 = vld [vmem:[%s1 + $0x40] sm:$0xff]
  %v33 = vld [vmem:[%s1 + $0x48] sm:$0xff]
  %v34 = vld [vmem:[%s1 + $0x50] sm:$0xff]
  %v35 = vld [vmem:[%s1 + $0x58] sm:$0xff]
  %v36 = vld [vmem:[%s1 + $0x60] sm:$0xff]
  %v37 = vld [vmem:[%s1 + $0x68] sm:$0xff]
  %v38 = vld [vmem:[%s1 + $0x70] sm:$0xff]
  %v39 = vld [vmem:[%s1 + $0x78] sm:$0xff]
  %40 = vmatprep.subr.mxu0 0.0
  %41 = vmatpush1.msra.mxu0 %v39
  %42 = vmatprep.subr.mxu0 0.0
  %43 = vmatpush1.msra.mxu0 %v38
  %44 = vmatprep.subr.mxu0 0.0
  %45 = vmatpush1.msra.mxu0 %v37
  %46 = vmatprep.subr.mxu0 0.0
  %47 = vmatpush1.msra.mxu0 %v36
  %48 = vmatprep.subr.mxu0 0.0
  %49 = vmatpush1.msra.mxu0 %v35
  %50 = vmatprep.subr.mxu0 0.0
  %51 = vmatpush1.msra.mxu0 %v34
  %52 = vmatprep.subr.mxu0 0.0
  %53 = vmatpush1.msra.mxu0 %v33
  %54 = vmatprep.subr.mxu0 0.0
  %55 = vmatpush1.msra.mxu0 %v32
  %56 = vmatprep.subr.mxu0 0.0
  %57 = vmatpush1.msra.mxu0 %v31
  %58 = vmatprep.subr.mxu0 0.0
  %59 = vmatpush1.msra.mxu0 %v30
  %60 = vmatprep.subr.mxu0 0.0
  %61 = vmatpush1.msra.mxu0 %v29
  %62 = vmatprep.subr.mxu0 0.0
  %63 = vmatpush1.msra.mxu0 %v28
  %64 = vmatprep.subr.mxu0 0.0
  %65 = vmatpush1.msra.mxu0 %v27
  %66 = vmatprep.subr.mxu0 0.0
  %67 = vmatpush1.msra.mxu0 %v26
  %68 = vmatprep.subr.mxu0 0.0
  %69 = vmatpush1.msra.mxu0 %v25
  %70 = vmatprep.subr.mxu0 0.0
  %71 = vmatpush1.msra.mxu0 %v24
  %72 = vmatprep.subr.mxu0 0.0
  %73 = vmatpush2.msra.mxu0 0.0
  %74 = vmatprep.subr.mxu0 0.0
  %75 = vmatpush2.msra.mxu0 0.0
  %76 = vmatprep.subr.mxu0 0.0
  %77 = vmatpush2.msra.mxu0 0.0
  %78 = vmatprep.subr.mxu0 0.0
  %79 = vmatpush2.msra.mxu0 0.0
  %80 = vmatprep.subr.mxu0 0.0
  %81 = vmatpush2.msra.mxu0 0.0
  %82 = vmatprep.subr.mxu0 0.0
  %83 = vmatpush2.msra.mxu0 0.0
  %84 = vmatprep.subr.mxu0 0.0
  %85 = vmatpush2.msra.mxu0 0.0
  %86 = vmatprep.subr.mxu0 0.0
  %87 = vmatpush2.msra.mxu0 0.0
  %88 = vmatprep.subr.mxu0 0.0
  %89 = vmatpush2.msra.mxu0 0.0
  %90 = vmatprep.subr.mxu0 0.0
  %91 = vmatpush2.msra.mxu0 0.0
  %92 = vmatprep.subr.mxu0 0.0
  %93 = vmatpush2.msra.mxu0 0.0
  %94 = vmatprep.subr.mxu0 0.0
  %95 = vmatpush2.msra.mxu0 0.0
  %96 = vmatprep.subr.mxu0 0.0
  %97 = vmatpush2.msra.mxu0 0.0
  %98 = vmatprep.subr.mxu0 0.0
  %99 = vmatpush2.msra.mxu0 0.0
  %100 = vmatprep.subr.mxu0 0.0
  %101 = vmatpush2.msra.mxu0 0.0
  %102 = vmatprep.subr.mxu0 0.0
  %103 = vmatpush2.msra.mxu0 0.0
  %104 = vmatprep.mubr.f32.mxu0 0.0
  %105 = vmatmul.mubr.f32.gmra.mxu0 %v22
  %v106 = vpop.f32.mrf.mxu0
  %v107 = vadd.f32 0.0, %v106
  %v108 = vpop.f32.mrf.mxu0
  %109 = vmatprep.mubr.f32.mxu0 0.0
  %110 = vmatmul.mubr.f32.gmra.mxu0 %v23
  %v111 = vpop.f32.mrf.mxu0
  %v112 = vadd.f32 0.0, %v111
  %v113 = vpop.f32.mrf.mxu0
  %114 = vdwg.mxu0
  %v115 = vadd.f32 %v20, %v107
  %v116 = vadd.f32 %v21, %v112
  %117 = vst [vmem:[#allocation2] sm:$0xff] %v115
  %118 = vst [vmem:[#allocation2 + $0x8] sm:$0xff] %v116
  // Predicated region
  $region18: #{decoder_forward.5} parent=0 // pred_check
    %p119 = pneg %p14
  $region19: #{decoder_forward.5} parent=0 // pred_check_branch
    %121 = sbr.rel (%p119) target = $region21
  $region20: #{decoder_forward.5} parent=0 // pred_region
    %v122 = vld [vmem:[#allocation2] sm:$0xff]
    %v123 = vld [vmem:[#allocation2 + $0x8] sm:$0xff]
    %v124 = vld [vmem:[%s2] sm:$0x1]
    %v126 = vlaneseq
    %v127 = vshrl.u32 %v126, 7
    %v128 = vsub.s32 0, %v127
    %v129 = vrot.slane %v124, %v128
    %v131 = vadd.f32 %v122, %v129
    %v132 = vadd.f32 %v123, %v129
    %133 = vst [vmem:[%s3] sm:$0xff] %v131
    %134 = vst [vmem:[%s3 + $0x8] sm:$0xff] %v132
  $region21: #{decoder_forward.5} parent=0 // pred_fallthru
    _
  // Predicated region
  $region22: #{decoder_forward.5} parent=0 // pred_check
    _
  $region23: #{decoder_forward.5} parent=0 // pred_check_branch
    %136 = sbr.rel (0) target = $region25
  $region24: #{decoder_forward.5} parent=0 // pred_region
    _
  $region25: #{decoder_forward.5} parent=0 // pred_fallthru
    _
  // Predicated region
  $region26: #{decoder_forward.5} parent=0 // pred_check
    _
  $region27: #{decoder_forward.5} parent=0 // pred_check_branch
    %138 = sbr.rel (0) target = $region29
  $region28: #{decoder_forward.5} parent=0 // pred_region
    _
  $region29: #{decoder_forward.5} parent=0 // pred_fallthru
    _

// kernel: decoder_forward.4
$region0: #{decoder_forward.4}
  #allocation0 [shape = 'u32[]', space=smem, size = 0x4, offset = 0x4, fixed_abs, tag = 'smem constant byte address 0x4 - core index']
  #allocation1 [shape = 'u32[144,128]{1,0:T(1,128)}', space=vmem, size = 0x12000, scoped, tag = 'internal scratch']
  #allocation2 [shape = 'f32[8,128]{1,0:T(8,128)}', space=vmem, size = 0x1000, scoped, tag = 'scratch operand']
  %s0 = inlined_call_operand.vmem [shape: f32[8,8,384], index: 0, kind: input, shape index: {}]
  %s1 = inlined_call_operand.vmem [shape: f32[8,128], index: 1, kind: input, shape index: {}]
  %s2 = inlined_call_operand.vmem [shape: f32[128,256], index: 2, kind: input, shape index: {}]
  %s3 = inlined_call_operand.vmem [shape: f32[128,128], index: 3, kind: input, shape index: {}]
  %s4 = inlined_call_operand.vmem [shape: f32[1,128], index: 4, kind: input, shape index: {}]
  %s5 = inlined_call_operand.vmem [shape: f32[8,8,128], index: 5, kind: output, shape index: {}]
  %s6 = sld [smem:[#allocation0]]
  $region34: #{decoder_forward.4} parent=0
    _
  %s8 = ssub.s32 1, %s6
  %s9 = scalar_select 0, %s8, %s6
  // Predicated region
  $region2: #{decoder_forward.4} parent=0 // pred_check
    _
  $region3: #{decoder_forward.4} parent=0 // pred_check_branch
    %11 = sbr.rel (0) target = $region5
  $region4: #{decoder_forward.4} parent=0 // pred_region
    _
  $region5: #{decoder_forward.4} parent=0 // pred_fallthru
    _
  // Predicated region
  $region6: #{decoder_forward.4} parent=0 // pred_check
    _
  $region7: #{decoder_forward.4} parent=0 // pred_check_branch
    %13 = sbr.rel (0) target = $region9
  $region8: #{decoder_forward.4} parent=0 // pred_region
    _
  $region9: #{decoder_forward.4} parent=0 // pred_fallthru
    _
  // Predicated region
  $region10: #{decoder_forward.4} parent=0 // pred_check
    _
  $region11: #{decoder_forward.4} parent=0 // pred_check_branch
    %15 = sbr.rel (0) target = $region13
  $region12: #{decoder_forward.4} parent=0 // pred_region
    _
  $region13: #{decoder_forward.4} parent=0 // pred_fallthru
    _
  // Predicated region
  $region14: #{decoder_forward.4} parent=0 // pred_check
    _
  $region15: #{decoder_forward.4} parent=0 // pred_check_branch
    %17 = sbr.rel (0) target = $region17
  $region16: #{decoder_forward.4} parent=0 // pred_region
    _
  $region17: #{decoder_forward.4} parent=0 // pred_fallthru
    _
  // Predicated region
  $region18: #{decoder_forward.4} parent=0 // pred_check
    _
  $region19: #{decoder_forward.4} parent=0 // pred_check_branch
    %19 = sbr.rel (0) target = $region21
  $region20: #{decoder_forward.4} parent=0 // pred_region
    _
  $region21: #{decoder_forward.4} parent=0 // pred_fallthru
    _
  %p20 = scmp.eq.s32.totalorder 0, 0
  // Predicated region
  $region22: #{decoder_forward.4} parent=0 // pred_check
    %p21 = pneg %p20
  $region23: #{decoder_forward.4} parent=0 // pred_check_branch
    %23 = sbr.rel (%p21) target = $region25
  $region24: #{decoder_forward.4} parent=0 // pred_region
    %v24 = vld [vmem:[%s1] sm:$0xff]
    %25 = vst [vmem:[#allocation2] sm:$0xff] %v24
  $region25: #{decoder_forward.4} parent=0 // pred_fallthru
    _
  %v26 = vld [vmem:[%s2] sm:$0xff]
  %v27 = vld [vmem:[%s2 + $0x8] sm:$0xff]
  %v28 = vld [vmem:[%s2 + $0x10] sm:$0xff]
  %v29 = vld [vmem:[%s2 + $0x18] sm:$0xff]
  %v30 = vld [vmem:[%s2 + $0x20] sm:$0xff]
  %v31 = vld [vmem:[%s2 + $0x28] sm:$0xff]
  %v32 = vld [vmem:[%s2 + $0x30] sm:$0xff]
  %v33 = vld [vmem:[%s2 + $0x38] sm:$0xff]
  %v34 = vld [vmem:[%s2 + $0x40] sm:$0xff]
  %v35 = vld [vmem:[%s2 + $0x48] sm:$0xff]
  %v36 = vld [vmem:[%s2 + $0x50] sm:$0xff]
  %v37 = vld [vmem:[%s2 + $0x58] sm:$0xff]
  %v38 = vld [vmem:[%s2 + $0x60] sm:$0xff]
  %v39 = vld [vmem:[%s2 + $0x68] sm:$0xff]
  %v40 = vld [vmem:[%s2 + $0x70] sm:$0xff]
  %v41 = vld [vmem:[%s2 + $0x78] sm:$0xff]
  %v42 = vld [vmem:[%s2 + $0x80] sm:$0xff]
  %v43 = vld [vmem:[%s2 + $0x88] sm:$0xff]
  %v44 = vld [vmem:[%s2 + $0x90] sm:$0xff]
  %v45 = vld [vmem:[%s2 + $0x98] sm:$0xff]
  %v46 = vld [vmem:[%s2 + $0xa0] sm:$0xff]
  %v47 = vld [vmem:[%s2 + $0xa8] sm:$0xff]
  %v48 = vld [vmem:[%s2 + $0xb0] sm:$0xff]
  %v49 = vld [vmem:[%s2 + $0xb8] sm:$0xff]
  %v50 = vld [vmem:[%s2 + $0xc0] sm:$0xff]
  %v51 = vld [vmem:[%s2 + $0xc8] sm:$0xff]
  %v52 = vld [vmem:[%s2 + $0xd0] sm:$0xff]
  %v53 = vld [vmem:[%s2 + $0xd8] sm:$0xff]
  %v54 = vld [vmem:[%s2 + $0xe0] sm:$0xff]
  %v55 = vld [vmem:[%s2 + $0xe8] sm:$0xff]
  %v56 = vld [vmem:[%s2 + $0xf0] sm:$0xff]
  %v57 = vld [vmem:[%s2 + $0xf8] sm:$0xff]
  %v58 = vld [vmem:[%s3] sm:$0xff]
  %v59 = vld [vmem:[%s3 + $0x8] sm:$0xff]
  %v60 = vld [vmem:[%s3 + $0x10] sm:$0xff]
  %v61 = vld [vmem:[%s3 + $0x18] sm:$0xff]
  %v62 = vld [vmem:[%s3 + $0x20] sm:$0xff]
  %v63 = vld [vmem:[%s3 + $0x28] sm:$0xff]
  %v64 = vld [vmem:[%s3 + $0x30] sm:$0xff]
  %v65 = vld [vmem:[%s3 + $0x38] sm:$0xff]
  %v66 = vld [vmem:[%s3 + $0x40] sm:$0xff]
  %v67 = vld [vmem:[%s3 + $0x48] sm:$0xff]
  %v68 = vld [vmem:[%s3 + $0x50] sm:$0xff]
  %v69 = vld [vmem:[%s3 + $0x58] sm:$0xff]
  %v70 = vld [vmem:[%s3 + $0x60] sm:$0xff]
  %v71 = vld [vmem:[%s3 + $0x68] sm:$0xff]
  %v72 = vld [vmem:[%s3 + $0x70] sm:$0xff]
  %v73 = vld [vmem:[%s3 + $0x78] sm:$0xff]
  %v74 = vld [vmem:[%s4] sm:$0x1]
  %v76 = vlaneseq
  %v77 = vshrl.u32 %v76, 7
  %v78 = vsub.s32 0, %v77
  %v79 = vrot.slane %v74, %v78
  %v81 = vld [vmem:[#allocation2] sm:$0xff]
  %v82 = vld [vmem:[%s0] sm:$0xff]
  %v83 = vld [vmem:[%s0 + $0x8] sm:$0xff]
  %v84 = vld [vmem:[%s0 + $0x10] sm:$0xff]
  %85 = vmatprep.subr.mxu0 %v57
  %86 = vmatpush1.msra.mxu0 %v56
  %87 = vmatprep.subr.mxu0 %v55
  %88 = vmatpush1.msra.mxu0 %v54
  %89 = vmatprep.subr.mxu0 %v53
  %90 = vmatpush1.msra.mxu0 %v52
  %91 = vmatprep.subr.mxu0 %v51
  %92 = vmatpush1.msra.mxu0 %v50
  %93 = vmatprep.subr.mxu0 %v49
  %94 = vmatpush1.msra.mxu0 %v48
  %95 = vmatprep.subr.mxu0 %v47
  %96 = vmatpush1.msra.mxu0 %v46
  %97 = vmatprep.subr.mxu0 %v45
  %98 = vmatpush1.msra.mxu0 %v44
  %99 = vmatprep.subr.mxu0 %v43
  %100 = vmatpush1.msra.mxu0 %v42
  %101 = vmatprep.subr.mxu0 %v41
  %102 = vmatpush1.msra.mxu0 %v40
  %103 = vmatprep.subr.mxu0 %v39
  %104 = vmatpush1.msra.mxu0 %v38
  %105 = vmatprep.subr.mxu0 %v37
  %106 = vmatpush1.msra.mxu0 %v36
  %107 = vmatprep.subr.mxu0 %v35
  %108 = vmatpush1.msra.mxu0 %v34
  %109 = vmatprep.subr.mxu0 %v33
  %110 = vmatpush1.msra.mxu0 %v32
  %111 = vmatprep.subr.mxu0 %v31
  %112 = vmatpush1.msra.mxu0 %v30
  %113 = vmatprep.subr.mxu0 %v29
  %114 = vmatpush1.msra.mxu0 %v28
  %115 = vmatprep.subr.mxu0 %v27
  %116 = vmatpush1.msra.mxu0 %v26
  %117 = vmatprep.subr.mxu0 0.0
  %118 = vmatpush2.msra.mxu0 0.0
  %119 = vmatprep.subr.mxu0 0.0
  %120 = vmatpush2.msra.mxu0 0.0
  %121 = vmatprep.subr.mxu0 0.0
  %122 = vmatpush2.msra.mxu0 0.0
  %123 = vmatprep.subr.mxu0 0.0
  %124 = vmatpush2.msra.mxu0 0.0
  %125 = vmatprep.subr.mxu0 0.0
  %126 = vmatpush2.msra.mxu0 0.0
  %127 = vmatprep.subr.mxu0 0.0
  %128 = vmatpush2.msra.mxu0 0.0
  %129 = vmatprep.subr.mxu0 0.0
  %130 = vmatpush2.msra.mxu0 0.0
  %131 = vmatprep.subr.mxu0 0.0
  %132 = vmatpush2.msra.mxu0 0.0
  %133 = vmatprep.subr.mxu0 0.0
  %134 = vmatpush2.msra.mxu0 0.0
  %135 = vmatprep.subr.mxu0 0.0
  %136 = vmatpush2.msra.mxu0 0.0
  %137 = vmatprep.subr.mxu0 0.0
  %138 = vmatpush2.msra.mxu0 0.0
  %139 = vmatprep.subr.mxu0 0.0
  %140 = vmatpush2.msra.mxu0 0.0
  %141 = vmatprep.subr.mxu0 0.0
  %142 = vmatpush2.msra.mxu0 0.0
  %143 = vmatprep.subr.mxu0 0.0
  %144 = vmatpush2.msra.mxu0 0.0
  %145 = vmatprep.subr.mxu0 0.0
  %146 = vmatpush2.msra.mxu0 0.0
  %147 = vmatprep.subr.mxu0 0.0
  %148 = vmatpush2.msra.mxu0 0.0
  %149 = vmatprep.mubr.f32.mxu0 0.0
  %150 = vmatmul.mubr.f32.gmra.mxu0 %v81
  %v151 = vpop.f32.mrf.mxu0
  %v152 = vadd.f32 0.0, %v151
  %v153 = vpop.f32.mrf.mxu0
  %v154 = vadd.f32 0.0, %v153
  %155 = vdwg.mxu0
  %v156 = vadd.f32 %v82, %v152
  %v157 = vxor.u32 %v156, 2147483648
  %v158 = vmul.f32 %v157, 1.442695
  %v159 = vpow.pop %v158
  %v160 = vadd.f32 %v159, 1.0
  %v161 = vrcp.pop %v160
  %v162 = vmul.f32 1.0, %v161
  %v163 = vadd.f32 %v83, %v154
  %v164 = vxor.u32 %v163, 2147483648
  %v165 = vmul.f32 %v164, 1.442695
  %v166 = vpow.pop %v165
  %v167 = vadd.f32 %v166, 1.0
  %v168 = vrcp.pop %v167
  %v169 = vmul.f32 1.0, %v168
  %170 = vmatprep.subr.mxu0 0.0
  %171 = vmatpush1.msra.mxu0 %v73
  %172 = vmatprep.subr.mxu0 0.0
  %173 = vmatpush1.msra.mxu0 %v72
  %174 = vmatprep.subr.mxu0 0.0
  %175 = vmatpush1.msra.mxu0 %v71
  %176 = vmatprep.subr.mxu0 0.0
  %177 = vmatpush1.msra.mxu0 %v70
  %178 = vmatprep.subr.mxu0 0.0
  %179 = vmatpush1.msra.mxu0 %v69
  %180 = vmatprep.subr.mxu0 0.0
  %181 = vmatpush1.msra.mxu0 %v68
  %182 = vmatprep.subr.mxu0 0.0
  %183 = vmatpush1.msra.mxu0 %v67
  %184 = vmatprep.subr.mxu0 0.0
  %185 = vmatpush1.msra.mxu0 %v66
  %186 = vmatprep.subr.mxu0 0.0
  %187 = vmatpush1.msra.mxu0 %v65
  %188 = vmatprep.subr.mxu0 0.0
  %189 = vmatpush1.msra.mxu0 %v64
  %190 = vmatprep.subr.mxu0 0.0
  %191 = vmatpush1.msra.mxu0 %v63
  %192 = vmatprep.subr.mxu0 0.0
  %193 = vmatpush1.msra.mxu0 %v62
  %194 = vmatprep.subr.mxu0 0.0
  %195 = vmatpush1.msra.mxu0 %v61
  %196 = vmatprep.subr.mxu0 0.0
  %197 = vmatpush1.msra.mxu0 %v60
  %198 = vmatprep.subr.mxu0 0.0
  %199 = vmatpush1.msra.mxu0 %v59
  %200 = vmatprep.subr.mxu0 0.0
  %201 = vmatpush1.msra.mxu0 %v58
  %202 = vmatprep.subr.mxu0 0.0
  %203 = vmatpush2.msra.mxu0 0.0
  %204 = vmatprep.subr.mxu0 0.0
  %205 = vmatpush2.msra.mxu0 0.0
  %206 = vmatprep.subr.mxu0 0.0
  %207 = vmatpush2.msra.mxu0 0.0
  %208 = vmatprep.subr.mxu0 0.0
  %209 = vmatpush2.msra.mxu0 0.0
  %210 = vmatprep.subr.mxu0 0.0
  %211 = vmatpush2.msra.mxu0 0.0
  %212 = vmatprep.subr.mxu0 0.0
  %213 = vmatpush2.msra.mxu0 0.0
  %214 = vmatprep.subr.mxu0 0.0
  %215 = vmatpush2.msra.mxu0 0.0
  %216 = vmatprep.subr.mxu0 0.0
  %217 = vmatpush2.msra.mxu0 0.0
  %218 = vmatprep.subr.mxu0 0.0
  %219 = vmatpush2.msra.mxu0 0.0
  %220 = vmatprep.subr.mxu0 0.0
  %221 = vmatpush2.msra.mxu0 0.0
  %222 = vmatprep.subr.mxu0 0.0
  %223 = vmatpush2.msra.mxu0 0.0
  %224 = vmatprep.subr.mxu0 0.0
  %225 = vmatpush2.msra.mxu0 0.0
  %226 = vmatprep.subr.mxu0 0.0
  %227 = vmatpush2.msra.mxu0 0.0
  %228 = vmatprep.subr.mxu0 0.0
  %229 = vmatpush2.msra.mxu0 0.0
  %230 = vmatprep.subr.mxu0 0.0
  %231 = vmatpush2.msra.mxu0 0.0
  %232 = vmatprep.subr.mxu0 0.0
  %233 = vmatpush2.msra.mxu0 0.0
  %234 = vmatprep.mubr.f32.mxu0 0.0
  %235 = vmatmul.mubr.f32.gmra.mxu0 %v81
  %v236 = vpop.f32.mrf.mxu0
  %v237 = vadd.f32 %v79, %v236
  %v238 = vpop.f32.mrf.mxu0
  %239 = vdwg.mxu0
  %v240 = vmul.f32 %v162, %v237
  %v241 = vadd.f32 %v84, %v240
  %v242 = vtanh.pop %v241
  %v243 = vsub.f32 %v81, %v242
  %v244 = vmul.f32 %v169, %v243
  %v245 = vadd.f32 %v242, %v244
  %246 = vst [vmem:[%s5] sm:$0xff] %v245
  %s247 = scalar_lea.vmem %s0, 24
  %v248 = vld [vmem:[%s247] sm:$0xff]
  %v249 = vld [vmem:[%s247 + $0x8] sm:$0xff]
  %v250 = vld [vmem:[%s247 + $0x10] sm:$0xff]
  %251 = vmatprep.subr.mxu0 %v57
  %252 = vmatpush1.msra.mxu0 %v56
  %253 = vmatprep.subr.mxu0 %v55
  %254 = vmatpush1.msra.mxu0 %v54
  %255 = vmatprep.subr.mxu0 %v53
  %256 = vmatpush1.msra.mxu0 %v52
  %257 = vmatprep.subr.mxu0 %v51
  %258 = vmatpush1.msra.mxu0 %v50
  %259 = vmatprep.subr.mxu0 %v49
  %260 = vmatpush1.msra.mxu0 %v48
  %261 = vmatprep.subr.mxu0 %v47
  %262 = vmatpush1.msra.mxu0 %v46
  %263 = vmatprep.subr.mxu0 %v45
  %264 = vmatpush1.msra.mxu0 %v44
  %265 = vmatprep.subr.mxu0 %v43
  %266 = vmatpush1.msra.mxu0 %v42
  %267 = vmatprep.subr.mxu0 %v41
  %268 = vmatpush1.msra.mxu0 %v40
  %269 = vmatprep.subr.mxu0 %v39
  %270 = vmatpush1.msra.mxu0 %v38
  %271 = vmatprep.subr.mxu0 %v37
  %272 = vmatpush1.msra.mxu0 %v36
  %273 = vmatprep.subr.mxu0 %v35
  %274 = vmatpush1.msra.mxu0 %v34
  %275 = vmatprep.subr.mxu0 %v33
  %276 = vmatpush1.msra.mxu0 %v32
  %277 = vmatprep.subr.mxu0 %v31
  %278 = vmatpush1.msra.mxu0 %v30
  %279 = vmatprep.subr.mxu0 %v29
  %280 = vmatpush1.msra.mxu0 %v28
  %281 = vmatprep.subr.mxu0 %v27
  %282 = vmatpush1.msra.mxu0 %v26
  %283 = vmatprep.subr.mxu0 0.0
  %284 = vmatpush2.msra.mxu0 0.0
  %285 = vmatprep.subr.mxu0 0.0
  %286 = vmatpush2.msra.mxu0 0.0
  %287 = vmatprep.subr.mxu0 0.0
  %288 = vmatpush2.msra.mxu0 0.0
  %289 = vmatprep.subr.mxu0 0.0
  %290 = vmatpush2.msra.mxu0 0.0
  %291 = vmatprep.subr.mxu0 0.0
  %292 = vmatpush2.msra.mxu0 0.0
  %293 = vmatprep.subr.mxu0 0.0
  %294 = vmatpush2.msra.mxu0 0.0
  %295 = vmatprep.subr.mxu0 0.0
  %296 = vmatpush2.msra.mxu0 0.0
  %297 = vmatprep.subr.mxu0 0.0
  %298 = vmatpush2.msra.mxu0 0.0
  %299 = vmatprep.subr.mxu0 0.0
  %300 = vmatpush2.msra.mxu0 0.0
  %301 = vmatprep.subr.mxu0 0.0
  %302 = vmatpush2.msra.mxu0 0.0
  %303 = vmatprep.subr.mxu0 0.0
  %304 = vmatpush2.msra.mxu0 0.0
  %305 = vmatprep.subr.mxu0 0.0
  %306 = vmatpush2.msra.mxu0 0.0
  %307 = vmatprep.subr.mxu0 0.0
  %308 = vmatpush2.msra.mxu0 0.0
  %309 = vmatprep.subr.mxu0 0.0
  %310 = vmatpush2.msra.mxu0 0.0
  %311 = vmatprep.subr.mxu0 0.0
  %312 = vmatpush2.msra.mxu0 0.0
  %313 = vmatprep.subr.mxu0 0.0
  %314 = vmatpush2.msra.mxu0 0.0
  %315 = vmatprep.mubr.f32.mxu0 0.0
  %316 = vmatmul.mubr.f32.gmra.mxu0 %v245
  %v317 = vpop.f32.mrf.mxu0
  %v318 = vadd.f32 0.0, %v317
  %v319 = vpop.f32.mrf.mxu0
  %v320 = vadd.f32 0.0, %v319
  %321 = vdwg.mxu0
  %v322 = vadd.f32 %v248, %v318
  %v323 = vxor.u32 %v322, 2147483648
  %v324 = vmul.f32 %v323, 1.442695
  %v325 = vpow.pop %v324
  %v326 = vadd.f32 %v325, 1.0
  %v327 = vrcp.pop %v326
  %v328 = vmul.f32 1.0, %v327
  %v329 = vadd.f32 %v249, %v320
  %v330 = vxor.u32 %v329, 2147483648
  %v331 = vmul.f32 %v330, 1.442695
  %v332 = vpow.pop %v331
  %v333 = vadd.f32 %v332, 1.0
  %v334 = vrcp.pop %v333
  %v335 = vmul.f32 1.0, %v334
  %336 = vmatprep.subr.mxu0 0.0
  %337 = vmatpush1.msra.mxu0 %v73
  %338 = vmatprep.subr.mxu0 0.0
  %339 = vmatpush1.msra.mxu0 %v72
  %340 = vmatprep.subr.mxu0 0.0
  %341 = vmatpush1.msra.mxu0 %v71
  %342 = vmatprep.subr.mxu0 0.0
  %343 = vmatpush1.msra.mxu0 %v70
  %344 = vmatprep.subr.mxu0 0.0
  %345 = vmatpush1.msra.mxu0 %v69
  %346 = vmatprep.subr.mxu0 0.0
  %347 = vmatpush1.msra.mxu0 %v68
  %348 = vmatprep.subr.mxu0 0.0
  %349 = vmatpush1.msra.mxu0 %v67
  %350 = vmatprep.subr.mxu0 0.0
  %351 = vmatpush1.msra.mxu0 %v66
  %352 = vmatprep.subr.mxu0 0.0
  %353 = vmatpush1.msra.mxu0 %v65
  %354 = vmatprep.subr.mxu0 0.0
  %355 = vmatpush1.msra.mxu0 %v64
  %356 = vmatprep.subr.mxu0 0.0
  %357 = vmatpush1.msra.mxu0 %v63
  %358 = vmatprep.subr.mxu0 0.0
  %359 = vmatpush1.msra.mxu0 %v62
  %360 = vmatprep.subr.mxu0 0.0
  %361 = vmatpush1.msra.mxu0 %v61
  %362 = vmatprep.subr.mxu0 0.0
  %363 = vmatpush1.msra.mxu0 %v60
  %364 = vmatprep.subr.mxu0 0.0
  %365 = vmatpush1.msra.mxu0 %v59
  %366 = vmatprep.subr.mxu0 0.0
  %367 = vmatpush1.msra.mxu0 %v58
  %368 = vmatprep.subr.mxu0 0.0
  %369 = vmatpush2.msra.mxu0 0.0
  %370 = vmatprep.subr.mxu0 0.0
  %371 = vmatpush2.msra.mxu0 0.0
  %372 = vmatprep.subr.mxu0 0.0
  %373 = vmatpush2.msra.mxu0 0.0
  %374 = vmatprep.subr.mxu0 0.0
  %375 = vmatpush2.msra.mxu0 0.0
  %376 = vmatprep.subr.mxu0 0.0
  %377 = vmatpush2.msra.mxu0 0.0
  %378 = vmatprep.subr.mxu0 0.0
  %379 = vmatpush2.msra.mxu0 0.0
  %380 = vmatprep.subr.mxu0 0.0
  %381 = vmatpush2.msra.mxu0 0.0
  %382 = vmatprep.subr.mxu0 0.0
  %383 = vmatpush2.msra.mxu0 0.0
  %384 = vmatprep.subr.mxu0 0.0
  %385 = vmatpush2.msra.mxu0 0.0
  %386 = vmatprep.subr.mxu0 0.0
  %387 = vmatpush2.msra.mxu0 0.0
  %388 = vmatprep.subr.mxu0 0.0
  %389 = vmatpush2.msra.mxu0 0.0
  %390 = vmatprep.subr.mxu0 0.0
  %391 = vmatpush2.msra.mxu0 0.0
  %392 = vmatprep.subr.mxu0 0.0
  %393 = vmatpush2.msra.mxu0 0.0
  %394 = vmatprep.subr.mxu0 0.0
  %395 = vmatpush2.msra.mxu0 0.0
  %396 = vmatprep.subr.mxu0 0.0
  %397 = vmatpush2.msra.mxu0 0.0
  %398 = vmatprep.subr.mxu0 0.0
  %399 = vmatpush2.msra.mxu0 0.0
  %400 = vmatprep.mubr.f32.mxu0 0.0
  %401 = vmatmul.mubr.f32.gmra.mxu0 %v245
  %v402 = vpop.f32.mrf.mxu0
  %v403 = vadd.f32 %v79, %v402
  %v404 = vpop.f32.mrf.mxu0
  %405 = vdwg.mxu0
  %v406 = vmul.f32 %v328, %v403
  %v407 = vadd.f32 %v250, %v406
  %v408 = vtanh.pop %v407
  %v409 = vsub.f32 %v245, %v408
  %v410 = vmul.f32 %v335, %v409
  %v411 = vadd.f32 %v408, %v410
  %s412 = scalar_lea.vmem %s5, 8
  %413 = vst [vmem:[%s412] sm:$0xff] %v411
  %s414 = scalar_lea.vmem %s0, 48
  %v415 = vld [vmem:[%s414] sm:$0xff]
  %v416 = vld [vmem:[%s414 + $0x8] sm:$0xff]
  %v417 = vld [vmem:[%s414 + $0x10] sm:$0xff]
  %418 = vmatprep.subr.mxu0 %v57
  %419 = vmatpush1.msra.mxu0 %v56
  %420 = vmatprep.subr.mxu0 %v55
  %421 = vmatpush1.msra.mxu0 %v54
  %422 = vmatprep.subr.mxu0 %v53
  %423 = vmatpush1.msra.mxu0 %v52
  %424 = vmatprep.subr.mxu0 %v51
  %425 = vmatpush1.msra.mxu0 %v50
  %426 = vmatprep.subr.mxu0 %v49
  %427 = vmatpush1.msra.mxu0 %v48
  %428 = vmatprep.subr.mxu0 %v47
  %429 = vmatpush1.msra.mxu0 %v46
  %430 = vmatprep.subr.mxu0 %v45
  %431 = vmatpush1.msra.mxu0 %v44
  %432 = vmatprep.subr.mxu0 %v43
  %433 = vmatpush1.msra.mxu0 %v42
  %434 = vmatprep.subr.mxu0 %v41
  %435 = vmatpush1.msra.mxu0 %v40
  %436 = vmatprep.subr.mxu0 %v39
  %437 = vmatpush1.msra.mxu0 %v38
  %438 = vmatprep.subr.mxu0 %v37
  %439 = vmatpush1.msra.mxu0 %v36
  %440 = vmatprep.subr.mxu0 %v35
  %441 = vmatpush1.msra.mxu0 %v34
  %442 = vmatprep.subr.mxu0 %v33
  %443 = vmatpush1.msra.mxu0 %v32
  %444 = vmatprep.subr.mxu0 %v31
  %445 = vmatpush1.msra.mxu0 %v30
  %446 = vmatprep.subr.mxu0 %v29
  %447 = vmatpush1.msra.mxu0 %v28
  %448 = vmatprep.subr.mxu0 %v27
  %449 = vmatpush1.msra.mxu0 %v26
  %450 = vmatprep.subr.mxu0 0.0
  %451 = vmatpush2.msra.mxu0 0.0
  %452 = vmatprep.subr.mxu0 0.0
  %453 = vmatpush2.msra.mxu0 0.0
  %454 = vmatprep.subr.mxu0 0.0
  %455 = vmatpush2.msra.mxu0 0.0
  %456 = vmatprep.subr.mxu0 0.0
  %457 = vmatpush2.msra.mxu0 0.0
  %458 = vmatprep.subr.mxu0 0.0
  %459 = vmatpush2.msra.mxu0 0.0
  %460 = vmatprep.subr.mxu0 0.0
  %461 = vmatpush2.msra.mxu0 0.0
  %462 = vmatprep.subr.mxu0 0.0
  %463 = vmatpush2.msra.mxu0 0.0
  %464 = vmatprep.subr.mxu0 0.0
  %465 = vmatpush2.msra.mxu0 0.0
  %466 = vmatprep.subr.mxu0 0.0
  %467 = vmatpush2.msra.mxu0 0.0
  %468 = vmatprep.subr.mxu0 0.0
  %469 = vmatpush2.msra.mxu0 0.0
  %470 = vmatprep.subr.mxu0 0.0
  %471 = vmatpush2.msra.mxu0 0.0
  %472 = vmatprep.subr.mxu0 0.0
  %473 = vmatpush2.msra.mxu0 0.0
  %474 = vmatprep.subr.mxu0 0.0
  %475 = vmatpush2.msra.mxu0 0.0
  %476 = vmatprep.subr.mxu0 0.0
  %477 = vmatpush2.msra.mxu0 0.0
  %478 = vmatprep.subr.mxu0 0.0
  %479 = vmatpush2.msra.mxu0 0.0
  %480 = vmatprep.subr.mxu0 0.0
  %481 = vmatpush2.msra.mxu0 0.0
  %482 = vmatprep.mubr.f32.mxu0 0.0
  %483 = vmatmul.mubr.f32.gmra.mxu0 %v411
  %v484 = vpop.f32.mrf.mxu0
  %v485 = vadd.f32 0.0, %v484
  %v486 = vpop.f32.mrf.mxu0
  %v487 = vadd.f32 0.0, %v486
  %488 = vdwg.mxu0
  %v489 = vadd.f32 %v415, %v485
  %v490 = vxor.u32 %v489, 2147483648
  %v491 = vmul.f32 %v490, 1.442695
  %v492 = vpow.pop %v491
  %v493 = vadd.f32 %v492, 1.0
  %v494 = vrcp.pop %v493
  %v495 = vmul.f32 1.0, %v494
  %v496 = vadd.f32 %v416, %v487
  %v497 = vxor.u32 %v496, 2147483648
  %v498 = vmul.f32 %v497, 1.442695
  %v499 = vpow.pop %v498
  %v500 = vadd.f32 %v499, 1.0
  %v501 = vrcp.pop %v500
  %v502 = vmul.f32 1.0, %v501
  %503 = vmatprep.subr.mxu0 0.0
  %504 = vmatpush1.msra.mxu0 %v73
  %505 = vmatprep.subr.mxu0 0.0
  %506 = vmatpush1.msra.mxu0 %v72
  %507 = vmatprep.subr.mxu0 0.0
  %508 = vmatpush1.msra.mxu0 %v71
  %509 = vmatprep.subr.mxu0 0.0
  %510 = vmatpush1.msra.mxu0 %v70
  %511 = vmatprep.subr.mxu0 0.0
  %512 = vmatpush1.msra.mxu0 %v69
  %513 = vmatprep.subr.mxu0 0.0
  %514 = vmatpush1.msra.mxu0 %v68
  %515 = vmatprep.subr.mxu0 0.0
  %516 = vmatpush1.msra.mxu0 %v67
  %517 = vmatprep.subr.mxu0 0.0
  %518 = vmatpush1.msra.mxu0 %v66
  %519 = vmatprep.subr.mxu0 0.0
  %520 = vmatpush1.msra.mxu0 %v65
  %521 = vmatprep.subr.mxu0 0.0
  %522 = vmatpush1.msra.mxu0 %v64
  %523 = vmatprep.subr.mxu0 0.0
  %524 = vmatpush1.msra.mxu0 %v63
  %525 = vmatprep.subr.mxu0 0.0
  %526 = vmatpush1.msra.mxu0 %v62
  %527 = vmatprep.subr.mxu0 0.0
  %528 = vmatpush1.msra.mxu0 %v61
  %529 = vmatprep.subr.mxu0 0.0
  %530 = vmatpush1.msra.mxu0 %v60
  %531 = vmatprep.subr.mxu0 0.0
  %532 = vmatpush1.msra.mxu0 %v59
  %533 = vmatprep.subr.mxu0 0.0
  %534 = vmatpush1.msra.mxu0 %v58
  %535 = vmatprep.subr.mxu0 0.0
  %536 = vmatpush2.msra.mxu0 0.0
  %537 = vmatprep.subr.mxu0 0.0
  %538 = vmatpush2.msra.mxu0 0.0
  %539 = vmatprep.subr.mxu0 0.0
  %540 = vmatpush2.msra.mxu0 0.0
  %541 = vmatprep.subr.mxu0 0.0
  %542 = vmatpush2.msra.mxu0 0.0
  %543 = vmatprep.subr.mxu0 0.0
  %544 = vmatpush2.msra.mxu0 0.0
  %545 = vmatprep.subr.mxu0 0.0
  %546 = vmatpush2.msra.mxu0 0.0
  %547 = vmatprep.subr.mxu0 0.0
  %548 = vmatpush2.msra.mxu0 0.0
  %549 = vmatprep.subr.mxu0 0.0
  %550 = vmatpush2.msra.mxu0 0.0
  %551 = vmatprep.subr.mxu0 0.0
  %552 = vmatpush2.msra.mxu0 0.0
  %553 = vmatprep.subr.mxu0 0.0
  %554 = vmatpush2.msra.mxu0 0.0
  %555 = vmatprep.subr.mxu0 0.0
  %556 = vmatpush2.msra.mxu0 0.0
  %557 = vmatprep.subr.mxu0 0.0
  %558 = vmatpush2.msra.mxu0 0.0
  %559 = vmatprep.subr.mxu0 0.0
  %560 = vmatpush2.msra.mxu0 0.0
  %561 = vmatprep.subr.mxu0 0.0
  %562 = vmatpush2.msra.mxu0 0.0
  %563 = vmatprep.subr.mxu0 0.0
  %564 = vmatpush2.msra.mxu0 0.0
  %565 = vmatprep.subr.mxu0 0.0
  %566 = vmatpush2.msra.mxu0 0.0
  %567 = vmatprep.mubr.f32.mxu0 0.0
  %568 = vmatmul.mubr.f32.gmra.mxu0 %v411
  %v569 = vpop.f32.mrf.mxu0
  %v570 = vadd.f32 %v79, %v569
  %v571 = vpop.f32.mrf.mxu0
  %572 = vdwg.mxu0
  %v573 = vmul.f32 %v495, %v570
  %v574 = vadd.f32 %v417, %v573
  %v575 = vtanh.pop %v574
  %v576 = vsub.f32 %v411, %v575
  %v577 = vmul.f32 %v502, %v576
  %v578 = vadd.f32 %v575, %v577
  %s579 = scalar_lea.vmem %s5, 16
  %580 = vst [vmem:[%s579] sm:$0xff] %v578
  %s581 = scalar_lea.vmem %s0, 72
  %v582 = vld [vmem:[%s581] sm:$0xff]
  %v583 = vld [vmem:[%s581 + $0x8] sm:$0xff]
  %v584 = vld [vmem:[%s581 + $0x10] sm:$0xff]
  %585 = vmatprep.subr.mxu0 %v57
  %586 = vmatpush1.msra.mxu0 %v56
  %587 = vmatprep.subr.mxu0 %v55
  %588 = vmatpush1.msra.mxu0 %v54
  %589 = vmatprep.subr.mxu0 %v53
  %590 = vmatpush1.msra.mxu0 %v52
  %591 = vmatprep.subr.mxu0 %v51
  %592 = vmatpush1.msra.mxu0 %v50
  %593 = vmatprep.subr.mxu0 %v49
  %594 = vmatpush1.msra.mxu0 %v48
  %595 = vmatprep.subr.mxu0 %v47
  %596 = vmatpush1.msra.mxu0 %v46
  %597 = vmatprep.subr.mxu0 %v45
  %598 = vmatpush1.msra.mxu0 %v44
  %599 = vmatprep.subr.mxu0 %v43
  %600 = vmatpush1.msra.mxu0 %v42
  %601 = vmatprep.subr.mxu0 %v41
  %602 = vmatpush1.msra.mxu0 %v40
  %603 = vmatprep.subr.mxu0 %v39
  %604 = vmatpush1.msra.mxu0 %v38
  %605 = vmatprep.subr.mxu0 %v37
  %606 = vmatpush1.msra.mxu0 %v36
  %607 = vmatprep.subr.mxu0 %v35
  %608 = vmatpush1.msra.mxu0 %v34
  %609 = vmatprep.subr.mxu0 %v33
  %610 = vmatpush1.msra.mxu0 %v32
  %611 = vmatprep.subr.mxu0 %v31
  %612 = vmatpush1.msra.mxu0 %v30
  %613 = vmatprep.subr.mxu0 %v29
  %614 = vmatpush1.msra.mxu0 %v28
  %615 = vmatprep.subr.mxu0 %v27
  %616 = vmatpush1.msra.mxu0 %v26
  %617 = vmatprep.subr.mxu0 0.0
  %618 = vmatpush2.msra.mxu0 0.0
  %619 = vmatprep.subr.mxu0 0.0
  %620 = vmatpush2.msra.mxu0 0.0
  %621 = vmatprep.subr.mxu0 0.0
  %622 = vmatpush2.msra.mxu0 0.0
  %623 = vmatprep.subr.mxu0 0.0
  %624 = vmatpush2.msra.mxu0 0.0
  %625 = vmatprep.subr.mxu0 0.0
  %626 = vmatpush2.msra.mxu0 0.0
  %627 = vmatprep.subr.mxu0 0.0
  %628 = vmatpush2.msra.mxu0 0.0
  %629 = vmatprep.subr.mxu0 0.0
  %630 = vmatpush2.msra.mxu0 0.0
  %631 = vmatprep.subr.mxu0 0.0
  %632 = vmatpush2.msra.mxu0 0.0
  %633 = vmatprep.subr.mxu0 0.0
  %634 = vmatpush2.msra.mxu0 0.0
  %635 = vmatprep.subr.mxu0 0.0
  %636 = vmatpush2.msra.mxu0 0.0
  %637 = vmatprep.subr.mxu0 0.0
  %638 = vmatpush2.msra.mxu0 0.0
  %639 = vmatprep.subr.mxu0 0.0
  %640 = vmatpush2.msra.mxu0 0.0
  %641 = vmatprep.subr.mxu0 0.0
  %642 = vmatpush2.msra.mxu0 0.0
  %643 = vmatprep.subr.mxu0 0.0
  %644 = vmatpush2.msra.mxu0 0.0
  %645 = vmatprep.subr.mxu0 0.0
  %646 = vmatpush2.msra.mxu0 0.0
  %647 = vmatprep.subr.mxu0 0.0
  %648 = vmatpush2.msra.mxu0 0.0
  %649 = vmatprep.mubr.f32.mxu0 0.0
  %650 = vmatmul.mubr.f32.gmra.mxu0 %v578
  %v651 = vpop.f32.mrf.mxu0
  %v652 = vadd.f32 0.0, %v651
  %v653 = vpop.f32.mrf.mxu0
  %v654 = vadd.f32 0.0, %v653
  %655 = vdwg.mxu0
  %v656 = vadd.f32 %v582, %v652
  %v657 = vxor.u32 %v656, 2147483648
  %v658 = vmul.f32 %v657, 1.442695
  %v659 = vpow.pop %v658
  %v660 = vadd.f32 %v659, 1.0
  %v661 = vrcp.pop %v660
  %v662 = vmul.f32 1.0, %v661
  %v663 = vadd.f32 %v583, %v654
  %v664 = vxor.u32 %v663, 2147483648
  %v665 = vmul.f32 %v664, 1.442695
  %v666 = vpow.pop %v665
  %v667 = vadd.f32 %v666, 1.0
  %v668 = vrcp.pop %v667
  %v669 = vmul.f32 1.0, %v668
  %670 = vmatprep.subr.mxu0 0.0
  %671 = vmatpush1.msra.mxu0 %v73
  %672 = vmatprep.subr.mxu0 0.0
  %673 = vmatpush1.msra.mxu0 %v72
  %674 = vmatprep.subr.mxu0 0.0
  %675 = vmatpush1.msra.mxu0 %v71
  %676 = vmatprep.subr.mxu0 0.0
  %677 = vmatpush1.msra.mxu0 %v70
  %678 = vmatprep.subr.mxu0 0.0
  %679 = vmatpush1.msra.mxu0 %v69
  %680 = vmatprep.subr.mxu0 0.0
  %681 = vmatpush1.msra.mxu0 %v68
  %682 = vmatprep.subr.mxu0 0.0
  %683 = vmatpush1.msra.mxu0 %v67
  %684 = vmatprep.subr.mxu0 0.0
  %685 = vmatpush1.msra.mxu0 %v66
  %686 = vmatprep.subr.mxu0 0.0
  %687 = vmatpush1.msra.mxu0 %v65
  %688 = vmatprep.subr.mxu0 0.0
  %689 = vmatpush1.msra.mxu0 %v64
  %690 = vmatprep.subr.mxu0 0.0
  %691 = vmatpush1.msra.mxu0 %v63
  %692 = vmatprep.subr.mxu0 0.0
  %693 = vmatpush1.msra.mxu0 %v62
  %694 = vmatprep.subr.mxu0 0.0
  %695 = vmatpush1.msra.mxu0 %v61
  %696 = vmatprep.subr.mxu0 0.0
  %697 = vmatpush1.msra.mxu0 %v60
  %698 = vmatprep.subr.mxu0 0.0
  %699 = vmatpush1.msra.mxu0 %v59
  %700 = vmatprep.subr.mxu0 0.0
  %701 = vmatpush1.msra.mxu0 %v58
  %702 = vmatprep.subr.mxu0 0.0
  %703 = vmatpush2.msra.mxu0 0.0
  %704 = vmatprep.subr.mxu0 0.0
  %705 = vmatpush2.msra.mxu0 0.0
  %706 = vmatprep.subr.mxu0 0.0
  %707 = vmatpush2.msra.mxu0 0.0
  %708 = vmatprep.subr.mxu0 0.0
  %709 = vmatpush2.msra.mxu0 0.0
  %710 = vmatprep.subr.mxu0 0.0
  %711 = vmatpush2.msra.mxu0 0.0
  %712 = vmatprep.subr.mxu0 0.0
  %713 = vmatpush2.msra.mxu0 0.0
  %714 = vmatprep.subr.mxu0 0.0
  %715 = vmatpush2.msra.mxu0 0.0
  %716 = vmatprep.subr.mxu0 0.0
  %717 = vmatpush2.msra.mxu0 0.0
  %718 = vmatprep.subr.mxu0 0.0
  %719 = vmatpush2.msra.mxu0 0.0
  %720 = vmatprep.subr.mxu0 0.0
  %721 = vmatpush2.msra.mxu0 0.0
  %722 = vmatprep.subr.mxu0 0.0
  %723 = vmatpush2.msra.mxu0 0.0
  %724 = vmatprep.subr.mxu0 0.0
  %725 = vmatpush2.msra.mxu0 0.0
  %726 = vmatprep.subr.mxu0 0.0
  %727 = vmatpush2.msra.mxu0 0.0
  %728 = vmatprep.subr.mxu0 0.0
  %729 = vmatpush2.msra.mxu0 0.0
  %730 = vmatprep.subr.mxu0 0.0
  %731 = vmatpush2.msra.mxu0 0.0
  %732 = vmatprep.subr.mxu0 0.0
  %733 = vmatpush2.msra.mxu0 0.0
  %734 = vmatprep.mubr.f32.mxu0 0.0
  %735 = vmatmul.mubr.f32.gmra.mxu0 %v578
  %v736 = vpop.f32.mrf.mxu0
  %v737 = vadd.f32 %v79, %v736
  %v738 = vpop.f32.mrf.mxu0
  %739 = vdwg.mxu0
  %v740 = vmul.f32 %v662, %v737
  %v741 = vadd.f32 %v584, %v740
  %v742 = vtanh.pop %v741
  %v743 = vsub.f32 %v578, %v742
  %v744 = vmul.f32 %v669, %v743
  %v745 = vadd.f32 %v742, %v744
  %s746 = scalar_lea.vmem %s5, 24
  %747 = vst [vmem:[%s746] sm:$0xff] %v745
  %s748 = scalar_lea.vmem %s0, 96
  %v749 = vld [vmem:[%s748] sm:$0xff]
  %v750 = vld [vmem:[%s748 + $0x8] sm:$0xff]
  %v751 = vld [vmem:[%s748 + $0x10] sm:$0xff]
  %752 = vmatprep.subr.mxu0 %v57
  %753 = vmatpush1.msra.mxu0 %v56
  %754 = vmatprep.subr.mxu0 %v55
  %755 = vmatpush1.msra.mxu0 %v54
  %756 = vmatprep.subr.mxu0 %v53
  %757 = vmatpush1.msra.mxu0 %v52
  %758 = vmatprep.subr.mxu0 %v51
  %759 = vmatpush1.msra.mxu0 %v50
  %760 = vmatprep.subr.mxu0 %v49
  %761 = vmatpush1.msra.mxu0 %v48
  %762 = vmatprep.subr.mxu0 %v47
  %763 = vmatpush1.msra.mxu0 %v46
  %764 = vmatprep.subr.mxu0 %v45
  %765 = vmatpush1.msra.mxu0 %v44
  %766 = vmatprep.subr.mxu0 %v43
  %767 = vmatpush1.msra.mxu0 %v42
  %768 = vmatprep.subr.mxu0 %v41
  %769 = vmatpush1.msra.mxu0 %v40
  %770 = vmatprep.subr.mxu0 %v39
  %771 = vmatpush1.msra.mxu0 %v38
  %772 = vmatprep.subr.mxu0 %v37
  %773 = vmatpush1.msra.mxu0 %v36
  %774 = vmatprep.subr.mxu0 %v35
  %775 = vmatpush1.msra.mxu0 %v34
  %776 = vmatprep.subr.mxu0 %v33
  %777 = vmatpush1.msra.mxu0 %v32
  %778 = vmatprep.subr.mxu0 %v31
  %779 = vmatpush1.msra.mxu0 %v30
  %780 = vmatprep.subr.mxu0 %v29
  %781 = vmatpush1.msra.mxu0 %v28
  %782 = vmatprep.subr.mxu0 %v27
  %783 = vmatpush1.msra.mxu0 %v26
  %784 = vmatprep.subr.mxu0 0.0
  %785 = vmatpush2.msra.mxu0 0.0
  %786 = vmatprep.subr.mxu0 0.0
  %787 = vmatpush2.msra.mxu0 0.0
  %788 = vmatprep.subr.mxu0 0.0
  %789 = vmatpush2.msra.mxu0 0.0
  %790 = vmatprep.subr.mxu0 0.0
  %791 = vmatpush2.msra.mxu0 0.0
  %792 = vmatprep.subr.mxu0 0.0
  %793 = vmatpush2.msra.mxu0 0.0
  %794 = vmatprep.subr.mxu0 0.0
  %795 = vmatpush2.msra.mxu0 0.0
  %796 = vmatprep.subr.mxu0 0.0
  %797 = vmatpush2.msra.mxu0 0.0
  %798 = vmatprep.subr.mxu0 0.0
  %799 = vmatpush2.msra.mxu0 0.0
  %800 = vmatprep.subr.mxu0 0.0
  %801 = vmatpush2.msra.mxu0 0.0
  %802 = vmatprep.subr.mxu0 0.0
  %803 = vmatpush2.msra.mxu0 0.0
  %804 = vmatprep.subr.mxu0 0.0
  %805 = vmatpush2.msra.mxu0 0.0
  %806 = vmatprep.subr.mxu0 0.0
  %807 = vmatpush2.msra.mxu0 0.0
  %808 = vmatprep.subr.mxu0 0.0
  %809 = vmatpush2.msra.mxu0 0.0
  %810 = vmatprep.subr.mxu0 0.0
  %811 = vmatpush2.msra.mxu0 0.0
  %812 = vmatprep.subr.mxu0 0.0
  %813 = vmatpush2.msra.mxu0 0.0
  %814 = vmatprep.subr.mxu0 0.0
  %815 = vmatpush2.msra.mxu0 0.0
  %816 = vmatprep.mubr.f32.mxu0 0.0
  %817 = vmatmul.mubr.f32.gmra.mxu0 %v745
  %v818 = vpop.f32.mrf.mxu0
  %v819 = vadd.f32 0.0, %v818
  %v820 = vpop.f32.mrf.mxu0
  %v821 = vadd.f32 0.0, %v820
  %822 = vdwg.mxu0
  %v823 = vadd.f32 %v749, %v819
  %v824 = vxor.u32 %v823, 2147483648
  %v825 = vmul.f32 %v824, 1.442695
  %v826 = vpow.pop %v825
  %v827 = vadd.f32 %v826, 1.0
  %v828 = vrcp.pop %v827
  %v829 = vmul.f32 1.0, %v828
  %v830 = vadd.f32 %v750, %v821
  %v831 = vxor.u32 %v830, 2147483648
  %v832 = vmul.f32 %v831, 1.442695
  %v833 = vpow.pop %v832
  %v834 = vadd.f32 %v833, 1.0
  %v835 = vrcp.pop %v834
  %v836 = vmul.f32 1.0, %v835
  %837 = vmatprep.subr.mxu0 0.0
  %838 = vmatpush1.msra.mxu0 %v73
  %839 = vmatprep.subr.mxu0 0.0
  %840 = vmatpush1.msra.mxu0 %v72
  %841 = vmatprep.subr.mxu0 0.0
  %842 = vmatpush1.msra.mxu0 %v71
  %843 = vmatprep.subr.mxu0 0.0
  %844 = vmatpush1.msra.mxu0 %v70
  %845 = vmatprep.subr.mxu0 0.0
  %846 = vmatpush1.msra.mxu0 %v69
  %847 = vmatprep.subr.mxu0 0.0
  %848 = vmatpush1.msra.mxu0 %v68
  %849 = vmatprep.subr.mxu0 0.0
  %850 = vmatpush1.msra.mxu0 %v67
  %851 = vmatprep.subr.mxu0 0.0
  %852 = vmatpush1.msra.mxu0 %v66
  %853 = vmatprep.subr.mxu0 0.0
  %854 = vmatpush1.msra.mxu0 %v65
  %855 = vmatprep.subr.mxu0 0.0
  %856 = vmatpush1.msra.mxu0 %v64
  %857 = vmatprep.subr.mxu0 0.0
  %858 = vmatpush1.msra.mxu0 %v63
  %859 = vmatprep.subr.mxu0 0.0
  %860 = vmatpush1.msra.mxu0 %v62
  %861 = vmatprep.subr.mxu0 0.0
  %862 = vmatpush1.msra.mxu0 %v61
  %863 = vmatprep.subr.mxu0 0.0
  %864 = vmatpush1.msra.mxu0 %v60
  %865 = vmatprep.subr.mxu0 0.0
  %866 = vmatpush1.msra.mxu0 %v59
  %867 = vmatprep.subr.mxu0 0.0
  %868 = vmatpush1.msra.mxu0 %v58
  %869 = vmatprep.subr.mxu0 0.0
  %870 = vmatpush2.msra.mxu0 0.0
  %871 = vmatprep.subr.mxu0 0.0
  %872 = vmatpush2.msra.mxu0 0.0
  %873 = vmatprep.subr.mxu0 0.0
  %874 = vmatpush2.msra.mxu0 0.0
  %875 = vmatprep.subr.mxu0 0.0
  %876 = vmatpush2.msra.mxu0 0.0
  %877 = vmatprep.subr.mxu0 0.0
  %878 = vmatpush2.msra.mxu0 0.0
  %879 = vmatprep.subr.mxu0 0.0
  %880 = vmatpush2.msra.mxu0 0.0
  %881 = vmatprep.subr.mxu0 0.0
  %882 = vmatpush2.msra.mxu0 0.0
  %883 = vmatprep.subr.mxu0 0.0
  %884 = vmatpush2.msra.mxu0 0.0
  %885 = vmatprep.subr.mxu0 0.0
  %886 = vmatpush2.msra.mxu0 0.0
  %887 = vmatprep.subr.mxu0 0.0
  %888 = vmatpush2.msra.mxu0 0.0
  %889 = vmatprep.subr.mxu0 0.0
  %890 = vmatpush2.msra.mxu0 0.0
  %891 = vmatprep.subr.mxu0 0.0
  %892 = vmatpush2.msra.mxu0 0.0
  %893 = vmatprep.subr.mxu0 0.0
  %894 = vmatpush2.msra.mxu0 0.0
  %895 = vmatprep.subr.mxu0 0.0
  %896 = vmatpush2.msra.mxu0 0.0
  %897 = vmatprep.subr.mxu0 0.0
  %898 = vmatpush2.msra.mxu0 0.0
  %899 = vmatprep.subr.mxu0 0.0
  %900 = vmatpush2.msra.mxu0 0.0
  %901 = vmatprep.mubr.f32.mxu0 0.0
  %902 = vmatmul.mubr.f32.gmra.mxu0 %v745
  %v903 = vpop.f32.mrf.mxu0
  %v904 = vadd.f32 %v79, %v903
  %v905 = vpop.f32.mrf.mxu0
  %906 = vdwg.mxu0
  %v907 = vmul.f32 %v829, %v904
  %v908 = vadd.f32 %v751, %v907
  %v909 = vtanh.pop %v908
  %v910 = vsub.f32 %v745, %v909
  %v911 = vmul.f32 %v836, %v910
  %v912 = vadd.f32 %v909, %v911
  %s913 = scalar_lea.vmem %s5, 32
  %914 = vst [vmem:[%s913] sm:$0xff] %v912
  %s915 = scalar_lea.vmem %s0, 120
  %v916 = vld [vmem:[%s915] sm:$0xff]
  %v917 = vld [vmem:[%s915 + $0x8] sm:$0xff]
  %v918 = vld [vmem:[%s915 + $0x10] sm:$0xff]
  %919 = vmatprep.subr.mxu0 %v57
  %920 = vmatpush1.msra.mxu0 %v56
  %921 = vmatprep.subr.mxu0 %v55
  %922 = vmatpush1.msra.mxu0 %v54
  %923 = vmatprep.subr.mxu0 %v53
  %924 = vmatpush1.msra.mxu0 %v52
  %925 = vmatprep.subr.mxu0 %v51
  %926 = vmatpush1.msra.mxu0 %v50
  %927 = vmatprep.subr.mxu0 %v49
  %928 = vmatpush1.msra.mxu0 %v48
  %929 = vmatprep.subr.mxu0 %v47
  %930 = vmatpush1.msra.mxu0 %v46
  %931 = vmatprep.subr.mxu0 %v45
  %932 = vmatpush1.msra.mxu0 %v44
  %933 = vmatprep.subr.mxu0 %v43
  %934 = vmatpush1.msra.mxu0 %v42
  %935 = vmatprep.subr.mxu0 %v41
  %936 = vmatpush1.msra.mxu0 %v40
  %937 = vmatprep.subr.mxu0 %v39
  %938 = vmatpush1.msra.mxu0 %v38
  %939 = vmatprep.subr.mxu0 %v37
  %940 = vmatpush1.msra.mxu0 %v36
  %941 = vmatprep.subr.mxu0 %v35
  %942 = vmatpush1.msra.mxu0 %v34
  %943 = vmatprep.subr.mxu0 %v33
  %944 = vmatpush1.msra.mxu0 %v32
  %945 = vmatprep.subr.mxu0 %v31
  %946 = vmatpush1.msra.mxu0 %v30
  %947 = vmatprep.subr.mxu0 %v29
  %948 = vmatpush1.msra.mxu0 %v28
  %949 = vmatprep.subr.mxu0 %v27
  %950 = vmatpush1.msra.mxu0 %v26
  %951 = vmatprep.subr.mxu0 0.0
  %952 = vmatpush2.msra.mxu0 0.0
  %953 = vmatprep.subr.mxu0 0.0
  %954 = vmatpush2.msra.mxu0 0.0
  %955 = vmatprep.subr.mxu0 0.0
  %956 = vmatpush2.msra.mxu0 0.0
  %957 = vmatprep.subr.mxu0 0.0
  %958 = vmatpush2.msra.mxu0 0.0
  %959 = vmatprep.subr.mxu0 0.0
  %960 = vmatpush2.msra.mxu0 0.0
  %961 = vmatprep.subr.mxu0 0.0
  %962 = vmatpush2.msra.mxu0 0.0
  %963 = vmatprep.subr.mxu0 0.0
  %964 = vmatpush2.msra.mxu0 0.0
  %965 = vmatprep.subr.mxu0 0.0
  %966 = vmatpush2.msra.mxu0 0.0
  %967 = vmatprep.subr.mxu0 0.0
  %968 = vmatpush2.msra.mxu0 0.0
  %969 = vmatprep.subr.mxu0 0.0
  %970 = vmatpush2.msra.mxu0 0.0
  %971 = vmatprep.subr.mxu0 0.0
  %972 = vmatpush2.msra.mxu0 0.0
  %973 = vmatprep.subr.mxu0 0.0
  %974 = vmatpush2.msra.mxu0 0.0
  %975 = vmatprep.subr.mxu0 0.0
  %976 = vmatpush2.msra.mxu0 0.0
  %977 = vmatprep.subr.mxu0 0.0
  %978 = vmatpush2.msra.mxu0 0.0
  %979 = vmatprep.subr.mxu0 0.0
  %980 = vmatpush2.msra.mxu0 0.0
  %981 = vmatprep.subr.mxu0 0.0
  %982 = vmatpush2.msra.mxu0 0.0
  %983 = vmatprep.mubr.f32.mxu0 0.0
  %984 = vmatmul.mubr.f32.gmra.mxu0 %v912
  %v985 = vpop.f32.mrf.mxu0
  %v986 = vadd.f32 0.0, %v985
  %v987 = vpop.f32.mrf.mxu0
  %v988 = vadd.f32 0.0, %v987
  %989 = vdwg.mxu0
  %v990 = vadd.f32 %v916, %v986
  %v991 = vxor.u32 %v990, 2147483648
  %v992 = vmul.f32 %v991, 1.442695
  %v993 = vpow.pop %v992
  %v994 = vadd.f32 %v993, 1.0
  %v995 = vrcp.pop %v994
  %v996 = vmul.f32 1.0, %v995
  %v997 = vadd.f32 %v917, %v988
  %v998 = vxor.u32 %v997, 2147483648
  %v999 = vmul.f32 %v998, 1.442695
  %v1000 = vpow.pop %v999
  %v1001 = vadd.f32 %v1000, 1.0
  %v1002 = vrcp.pop %v1001
  %v1003 = vmul.f32 1.0, %v1002
  %1004 = vmatprep.subr.mxu0 0.0
  %1005 = vmatpush1.msra.mxu0 %v73
  %1006 = vmatprep.subr.mxu0 0.0
  %1007 = vmatpush1.msra.mxu0 %v72
  %1008 = vmatprep.subr.mxu0 0.0
  %1009 = vmatpush1.msra.mxu0 %v71
  %1010 = vmatprep.subr.mxu0 0.0
  %1011 = vmatpush1.msra.mxu0 %v70
  %1012 = vmatprep.subr.mxu0 0.0
  %1013 = vmatpush1.msra.mxu0 %v69
  %1014 = vmatprep.subr.mxu0 0.0
  %1015 = vmatpush1.msra.mxu0 %v68
  %1016 = vmatprep.subr.mxu0 0.0
  %1017 = vmatpush1.msra.mxu0 %v67
  %1018 = vmatprep.subr.mxu0 0.0
  %1019 = vmatpush1.msra.mxu0 %v66
  %1020 = vmatprep.subr.mxu0 0.0
  %1021 = vmatpush1.msra.mxu0 %v65
  %1022 = vmatprep.subr.mxu0 0.0
  %1023 = vmatpush1.msra.mxu0 %v64
  %1024 = vmatprep.subr.mxu0 0.0
  %1025 = vmatpush1.msra.mxu0 %v63
  %1026 = vmatprep.subr.mxu0 0.0
  %1027 = vmatpush1.msra.mxu0 %v62
  %1028 = vmatprep.subr.mxu0 0.0
  %1029 = vmatpush1.msra.mxu0 %v61
  %1030 = vmatprep.subr.mxu0 0.0
  %1031 = vmatpush1.msra.mxu0 %v60
  %1032 = vmatprep.subr.mxu0 0.0
  %1033 = vmatpush1.msra.mxu0 %v59
  %1034 = vmatprep.subr.mxu0 0.0
  %1035 = vmatpush1.msra.mxu0 %v58
  %1036 = vmatprep.subr.mxu0 0.0
  %1037 = vmatpush2.msra.mxu0 0.0
  %1038 = vmatprep.subr.mxu0 0.0
  %1039 = vmatpush2.msra.mxu0 0.0
  %1040 = vmatprep.subr.mxu0 0.0
  %1041 = vmatpush2.msra.mxu0 0.0
  %1042 = vmatprep.subr.mxu0 0.0
  %1043 = vmatpush2.msra.mxu0 0.0
  %1044 = vmatprep.subr.mxu0 0.0
  %1045 = vmatpush2.msra.mxu0 0.0
  %1046 = vmatprep.subr.mxu0 0.0
  %1047 = vmatpush2.msra.mxu0 0.0
  %1048 = vmatprep.subr.mxu0 0.0
  %1049 = vmatpush2.msra.mxu0 0.0
  %1050 = vmatprep.subr.mxu0 0.0
  %1051 = vmatpush2.msra.mxu0 0.0
  %1052 = vmatprep.subr.mxu0 0.0
  %1053 = vmatpush2.msra.mxu0 0.0
  %1054 = vmatprep.subr.mxu0 0.0
  %1055 = vmatpush2.msra.mxu0 0.0
  %1056 = vmatprep.subr.mxu0 0.0
  %1057 = vmatpush2.msra.mxu0 0.0
  %1058 = vmatprep.subr.mxu0 0.0
  %1059 = vmatpush2.msra.mxu0 0.0
  %1060 = vmatprep.subr.mxu0 0.0
  %1061 = vmatpush2.msra.mxu0 0.0
  %1062 = vmatprep.subr.mxu0 0.0
  %1063 = vmatpush2.msra.mxu0 0.0
  %1064 = vmatprep.subr.mxu0 0.0
  %1065 = vmatpush2.msra.mxu0 0.0
  %1066 = vmatprep.subr.mxu0 0.0
  %1067 = vmatpush2.msra.mxu0 0.0
  %1068 = vmatprep.mubr.f32.mxu0 0.0
  %1069 = vmatmul.mubr.f32.gmra.mxu0 %v912
  %v1070 = vpop.f32.mrf.mxu0
  %v1071 = vadd.f32 %v79, %v1070
  %v1072 = vpop.f32.mrf.mxu0
  %1073 = vdwg.mxu0
  %v1074 = vmul.f32 %v996, %v1071
  %v1075 = vadd.f32 %v918, %v1074
  %v1076 = vtanh.pop %v1075
  %v1077 = vsub.f32 %v912, %v1076
  %v1078 = vmul.f32 %v1003, %v1077
  %v1079 = vadd.f32 %v1076, %v1078
  %s1080 = scalar_lea.vmem %s5, 40
  %1081 = vst [vmem:[%s1080] sm:$0xff] %v1079
  %s1082 = scalar_lea.vmem %s0, 144
  %v1083 = vld [vmem:[%s1082] sm:$0xff]
  %v1084 = vld [vmem:[%s1082 + $0x8] sm:$0xff]
  %v1085 = vld [vmem:[%s1082 + $0x10] sm:$0xff]
  %1086 = vmatprep.subr.mxu0 %v57
  %1087 = vmatpush1.msra.mxu0 %v56
  %1088 = vmatprep.subr.mxu0 %v55
  %1089 = vmatpush1.msra.mxu0 %v54
  %1090 = vmatprep.subr.mxu0 %v53
  %1091 = vmatpush1.msra.mxu0 %v52
  %1092 = vmatprep.subr.mxu0 %v51
  %1093 = vmatpush1.msra.mxu0 %v50
  %1094 = vmatprep.subr.mxu0 %v49
  %1095 = vmatpush1.msra.mxu0 %v48
  %1096 = vmatprep.subr.mxu0 %v47
  %1097 = vmatpush1.msra.mxu0 %v46
  %1098 = vmatprep.subr.mxu0 %v45
  %1099 = vmatpush1.msra.mxu0 %v44
  %1100 = vmatprep.subr.mxu0 %v43
  %1101 = vmatpush1.msra.mxu0 %v42
  %1102 = vmatprep.subr.mxu0 %v41
  %1103 = vmatpush1.msra.mxu0 %v40
  %1104 = vmatprep.subr.mxu0 %v39
  %1105 = vmatpush1.msra.mxu0 %v38
  %1106 = vmatprep.subr.mxu0 %v37
  %1107 = vmatpush1.msra.mxu0 %v36
  %1108 = vmatprep.subr.mxu0 %v35
  %1109 = vmatpush1.msra.mxu0 %v34
  %1110 = vmatprep.subr.mxu0 %v33
  %1111 = vmatpush1.msra.mxu0 %v32
  %1112 = vmatprep.subr.mxu0 %v31
  %1113 = vmatpush1.msra.mxu0 %v30
  %1114 = vmatprep.subr.mxu0 %v29
  %1115 = vmatpush1.msra.mxu0 %v28
  %1116 = vmatprep.subr.mxu0 %v27
  %1117 = vmatpush1.msra.mxu0 %v26
  %1118 = vmatprep.subr.mxu0 0.0
  %1119 = vmatpush2.msra.mxu0 0.0
  %1120 = vmatprep.subr.mxu0 0.0
  %1121 = vmatpush2.msra.mxu0 0.0
  %1122 = vmatprep.subr.mxu0 0.0
  %1123 = vmatpush2.msra.mxu0 0.0
  %1124 = vmatprep.subr.mxu0 0.0
  %1125 = vmatpush2.msra.mxu0 0.0
  %1126 = vmatprep.subr.mxu0 0.0
  %1127 = vmatpush2.msra.mxu0 0.0
  %1128 = vmatprep.subr.mxu0 0.0
  %1129 = vmatpush2.msra.mxu0 0.0
  %1130 = vmatprep.subr.mxu0 0.0
  %1131 = vmatpush2.msra.mxu0 0.0
  %1132 = vmatprep.subr.mxu0 0.0
  %1133 = vmatpush2.msra.mxu0 0.0
  %1134 = vmatprep.subr.mxu0 0.0
  %1135 = vmatpush2.msra.mxu0 0.0
  %1136 = vmatprep.subr.mxu0 0.0
  %1137 = vmatpush2.msra.mxu0 0.0
  %1138 = vmatprep.subr.mxu0 0.0
  %1139 = vmatpush2.msra.mxu0 0.0
  %1140 = vmatprep.subr.mxu0 0.0
  %1141 = vmatpush2.msra.mxu0 0.0
  %1142 = vmatprep.subr.mxu0 0.0
  %1143 = vmatpush2.msra.mxu0 0.0
  %1144 = vmatprep.subr.mxu0 0.0
  %1145 = vmatpush2.msra.mxu0 0.0
  %1146 = vmatprep.subr.mxu0 0.0
  %1147 = vmatpush2.msra.mxu0 0.0
  %1148 = vmatprep.subr.mxu0 0.0
  %1149 = vmatpush2.msra.mxu0 0.0
  %1150 = vmatprep.mubr.f32.mxu0 0.0
  %1151 = vmatmul.mubr.f32.gmra.mxu0 %v1079
  %v1152 = vpop.f32.mrf.mxu0
  %v1153 = vadd.f32 0.0, %v1152
  %v1154 = vpop.f32.mrf.mxu0
  %v1155 = vadd.f32 0.0, %v1154
  %1156 = vdwg.mxu0
  %v1157 = vadd.f32 %v1083, %v1153
  %v1158 = vxor.u32 %v1157, 2147483648
  %v1159 = vmul.f32 %v1158, 1.442695
  %v1160 = vpow.pop %v1159
  %v1161 = vadd.f32 %v1160, 1.0
  %v1162 = vrcp.pop %v1161
  %v1163 = vmul.f32 1.0, %v1162
  %v1164 = vadd.f32 %v1084, %v1155
  %v1165 = vxor.u32 %v1164, 2147483648
  %v1166 = vmul.f32 %v1165, 1.442695
  %v1167 = vpow.pop %v1166
  %v1168 = vadd.f32 %v1167, 1.0
  %v1169 = vrcp.pop %v1168
  %v1170 = vmul.f32 1.0, %v1169
  %1171 = vmatprep.subr.mxu0 0.0
  %1172 = vmatpush1.msra.mxu0 %v73
  %1173 = vmatprep.subr.mxu0 0.0
  %1174 = vmatpush1.msra.mxu0 %v72
  %1175 = vmatprep.subr.mxu0 0.0
  %1176 = vmatpush1.msra.mxu0 %v71
  %1177 = vmatprep.subr.mxu0 0.0
  %1178 = vmatpush1.msra.mxu0 %v70
  %1179 = vmatprep.subr.mxu0 0.0
  %1180 = vmatpush1.msra.mxu0 %v69
  %1181 = vmatprep.subr.mxu0 0.0
  %1182 = vmatpush1.msra.mxu0 %v68
  %1183 = vmatprep.subr.mxu0 0.0
  %1184 = vmatpush1.msra.mxu0 %v67
  %1185 = vmatprep.subr.mxu0 0.0
  %1186 = vmatpush1.msra.mxu0 %v66
  %1187 = vmatprep.subr.mxu0 0.0
  %1188 = vmatpush1.msra.mxu0 %v65
  %1189 = vmatprep.subr.mxu0 0.0
  %1190 = vmatpush1.msra.mxu0 %v64
  %1191 = vmatprep.subr.mxu0 0.0
  %1192 = vmatpush1.msra.mxu0 %v63
  %1193 = vmatprep.subr.mxu0 0.0
  %1194 = vmatpush1.msra.mxu0 %v62
  %1195 = vmatprep.subr.mxu0 0.0
  %1196 = vmatpush1.msra.mxu0 %v61
  %1197 = vmatprep.subr.mxu0 0.0
  %1198 = vmatpush1.msra.mxu0 %v60
  %1199 = vmatprep.subr.mxu0 0.0
  %1200 = vmatpush1.msra.mxu0 %v59
  %1201 = vmatprep.subr.mxu0 0.0
  %1202 = vmatpush1.msra.mxu0 %v58
  %1203 = vmatprep.subr.mxu0 0.0
  %1204 = vmatpush2.msra.mxu0 0.0
  %1205 = vmatprep.subr.mxu0 0.0
  %1206 = vmatpush2.msra.mxu0 0.0
  %1207 = vmatprep.subr.mxu0 0.0
  %1208 = vmatpush2.msra.mxu0 0.0
  %1209 = vmatprep.subr.mxu0 0.0
  %1210 = vmatpush2.msra.mxu0 0.0
  %1211 = vmatprep.subr.mxu0 0.0
  %1212 = vmatpush2.msra.mxu0 0.0
  %1213 = vmatprep.subr.mxu0 0.0
  %1214 = vmatpush2.msra.mxu0 0.0
  %1215 = vmatprep.subr.mxu0 0.0
  %1216 = vmatpush2.msra.mxu0 0.0
  %1217 = vmatprep.subr.mxu0 0.0
  %1218 = vmatpush2.msra.mxu0 0.0
  %1219 = vmatprep.subr.mxu0 0.0
  %1220 = vmatpush2.msra.mxu0 0.0
  %1221 = vmatprep.subr.mxu0 0.0
  %1222 = vmatpush2.msra.mxu0 0.0
  %1223 = vmatprep.subr.mxu0 0.0
  %1224 = vmatpush2.msra.mxu0 0.0
  %1225 = vmatprep.subr.mxu0 0.0
  %1226 = vmatpush2.msra.mxu0 0.0
  %1227 = vmatprep.subr.mxu0 0.0
  %1228 = vmatpush2.msra.mxu0 0.0
  %1229 = vmatprep.subr.mxu0 0.0
  %1230 = vmatpush2.msra.mxu0 0.0
  %1231 = vmatprep.subr.mxu0 0.0
  %1232 = vmatpush2.msra.mxu0 0.0
  %1233 = vmatprep.subr.mxu0 0.0
  %1234 = vmatpush2.msra.mxu0 0.0
  %1235 = vmatprep.mubr.f32.mxu0 0.0
  %1236 = vmatmul.mubr.f32.gmra.mxu0 %v1079
  %v1237 = vpop.f32.mrf.mxu0
  %v1238 = vadd.f32 %v79, %v1237
  %v1239 = vpop.f32.mrf.mxu0
  %1240 = vdwg.mxu0
  %v1241 = vmul.f32 %v1163, %v1238
  %v1242 = vadd.f32 %v1085, %v1241
  %v1243 = vtanh.pop %v1242
  %v1244 = vsub.f32 %v1079, %v1243
  %v1245 = vmul.f32 %v1170, %v1244
  %v1246 = vadd.f32 %v1243, %v1245
  %s1247 = scalar_lea.vmem %s5, 48
  %1248 = vst [vmem:[%s1247] sm:$0xff] %v1246
  %s1249 = scalar_lea.vmem %s0, 168
  %v1250 = vld [vmem:[%s1249] sm:$0xff]
  %v1251 = vld [vmem:[%s1249 + $0x8] sm:$0xff]
  %v1252 = vld [vmem:[%s1249 + $0x10] sm:$0xff]
  %1253 = vmatprep.subr.mxu0 %v57
  %1254 = vmatpush1.msra.mxu0 %v56
  %1255 = vmatprep.subr.mxu0 %v55
  %1256 = vmatpush1.msra.mxu0 %v54
  %1257 = vmatprep.subr.mxu0 %v53
  %1258 = vmatpush1.msra.mxu0 %v52
  %1259 = vmatprep.subr.mxu0 %v51
  %1260 = vmatpush1.msra.mxu0 %v50
  %1261 = vmatprep.subr.mxu0 %v49
  %1262 = vmatpush1.msra.mxu0 %v48
  %1263 = vmatprep.subr.mxu0 %v47
  %1264 = vmatpush1.msra.mxu0 %v46
  %1265 = vmatprep.subr.mxu0 %v45
  %1266 = vmatpush1.msra.mxu0 %v44
  %1267 = vmatprep.subr.mxu0 %v43
  %1268 = vmatpush1.msra.mxu0 %v42
  %1269 = vmatprep.subr.mxu0 %v41
  %1270 = vmatpush1.msra.mxu0 %v40
  %1271 = vmatprep.subr.mxu0 %v39
  %1272 = vmatpush1.msra.mxu0 %v38
  %1273 = vmatprep.subr.mxu0 %v37
  %1274 = vmatpush1.msra.mxu0 %v36
  %1275 = vmatprep.subr.mxu0 %v35
  %1276 = vmatpush1.msra.mxu0 %v34
  %1277 = vmatprep.subr.mxu0 %v33
  %1278 = vmatpush1.msra.mxu0 %v32
  %1279 = vmatprep.subr.mxu0 %v31
  %1280 = vmatpush1.msra.mxu0 %v30
  %1281 = vmatprep.subr.mxu0 %v29
  %1282 = vmatpush1.msra.mxu0 %v28
  %1283 = vmatprep.subr.mxu0 %v27
  %1284 = vmatpush1.msra.mxu0 %v26
  %1285 = vmatprep.subr.mxu0 0.0
  %1286 = vmatpush2.msra.mxu0 0.0
  %1287 = vmatprep.subr.mxu0 0.0
  %1288 = vmatpush2.msra.mxu0 0.0
  %1289 = vmatprep.subr.mxu0 0.0
  %1290 = vmatpush2.msra.mxu0 0.0
  %1291 = vmatprep.subr.mxu0 0.0
  %1292 = vmatpush2.msra.mxu0 0.0
  %1293 = vmatprep.subr.mxu0 0.0
  %1294 = vmatpush2.msra.mxu0 0.0
  %1295 = vmatprep.subr.mxu0 0.0
  %1296 = vmatpush2.msra.mxu0 0.0
  %1297 = vmatprep.subr.mxu0 0.0
  %1298 = vmatpush2.msra.mxu0 0.0
  %1299 = vmatprep.subr.mxu0 0.0
  %1300 = vmatpush2.msra.mxu0 0.0
  %1301 = vmatprep.subr.mxu0 0.0
  %1302 = vmatpush2.msra.mxu0 0.0
  %1303 = vmatprep.subr.mxu0 0.0
  %1304 = vmatpush2.msra.mxu0 0.0
  %1305 = vmatprep.subr.mxu0 0.0
  %1306 = vmatpush2.msra.mxu0 0.0
  %1307 = vmatprep.subr.mxu0 0.0
  %1308 = vmatpush2.msra.mxu0 0.0
  %1309 = vmatprep.subr.mxu0 0.0
  %1310 = vmatpush2.msra.mxu0 0.0
  %1311 = vmatprep.subr.mxu0 0.0
  %1312 = vmatpush2.msra.mxu0 0.0
  %1313 = vmatprep.subr.mxu0 0.0
  %1314 = vmatpush2.msra.mxu0 0.0
  %1315 = vmatprep.subr.mxu0 0.0
  %1316 = vmatpush2.msra.mxu0 0.0
  %1317 = vmatprep.mubr.f32.mxu0 0.0
  %1318 = vmatmul.mubr.f32.gmra.mxu0 %v1246
  %v1319 = vpop.f32.mrf.mxu0
  %v1320 = vadd.f32 0.0, %v1319
  %v1321 = vpop.f32.mrf.mxu0
  %v1322 = vadd.f32 0.0, %v1321
  %1323 = vdwg.mxu0
  %v1324 = vadd.f32 %v1250, %v1320
  %v1325 = vxor.u32 %v1324, 2147483648
  %v1326 = vmul.f32 %v1325, 1.442695
  %v1327 = vpow.pop %v1326
  %v1328 = vadd.f32 %v1327, 1.0
  %v1329 = vrcp.pop %v1328
  %v1330 = vmul.f32 1.0, %v1329
  %v1331 = vadd.f32 %v1251, %v1322
  %v1332 = vxor.u32 %v1331, 2147483648
  %v1333 = vmul.f32 %v1332, 1.442695
  %v1334 = vpow.pop %v1333
  %v1335 = vadd.f32 %v1334, 1.0
  %v1336 = vrcp.pop %v1335
  %v1337 = vmul.f32 1.0, %v1336
  %1338 = vmatprep.subr.mxu0 0.0
  %1339 = vmatpush1.msra.mxu0 %v73
  %1340 = vmatprep.subr.mxu0 0.0
  %1341 = vmatpush1.msra.mxu0 %v72
  %1342 = vmatprep.subr.mxu0 0.0
  %1343 = vmatpush1.msra.mxu0 %v71
  %1344 = vmatprep.subr.mxu0 0.0
  %1345 = vmatpush1.msra.mxu0 %v70
  %1346 = vmatprep.subr.mxu0 0.0
  %1347 = vmatpush1.msra.mxu0 %v69
  %1348 = vmatprep.subr.mxu0 0.0
  %1349 = vmatpush1.msra.mxu0 %v68
  %1350 = vmatprep.subr.mxu0 0.0
  %1351 = vmatpush1.msra.mxu0 %v67
  %1352 = vmatprep.subr.mxu0 0.0
  %1353 = vmatpush1.msra.mxu0 %v66
  %1354 = vmatprep.subr.mxu0 0.0
  %1355 = vmatpush1.msra.mxu0 %v65
  %1356 = vmatprep.subr.mxu0 0.0
  %1357 = vmatpush1.msra.mxu0 %v64
  %1358 = vmatprep.subr.mxu0 0.0
  %1359 = vmatpush1.msra.mxu0 %v63
  %1360 = vmatprep.subr.mxu0 0.0
  %1361 = vmatpush1.msra.mxu0 %v62
  %1362 = vmatprep.subr.mxu0 0.0
  %1363 = vmatpush1.msra.mxu0 %v61
  %1364 = vmatprep.subr.mxu0 0.0
  %1365 = vmatpush1.msra.mxu0 %v60
  %1366 = vmatprep.subr.mxu0 0.0
  %1367 = vmatpush1.msra.mxu0 %v59
  %1368 = vmatprep.subr.mxu0 0.0
  %1369 = vmatpush1.msra.mxu0 %v58
  %1370 = vmatprep.subr.mxu0 0.0
  %1371 = vmatpush2.msra.mxu0 0.0
  %1372 = vmatprep.subr.mxu0 0.0
  %1373 = vmatpush2.msra.mxu0 0.0
  %1374 = vmatprep.subr.mxu0 0.0
  %1375 = vmatpush2.msra.mxu0 0.0
  %1376 = vmatprep.subr.mxu0 0.0
  %1377 = vmatpush2.msra.mxu0 0.0
  %1378 = vmatprep.subr.mxu0 0.0
  %1379 = vmatpush2.msra.mxu0 0.0
  %1380 = vmatprep.subr.mxu0 0.0
  %1381 = vmatpush2.msra.mxu0 0.0
  %1382 = vmatprep.subr.mxu0 0.0
  %1383 = vmatpush2.msra.mxu0 0.0
  %1384 = vmatprep.subr.mxu0 0.0
  %1385 = vmatpush2.msra.mxu0 0.0
  %1386 = vmatprep.subr.mxu0 0.0
  %1387 = vmatpush2.msra.mxu0 0.0
  %1388 = vmatprep.subr.mxu0 0.0
  %1389 = vmatpush2.msra.mxu0 0.0
  %1390 = vmatprep.subr.mxu0 0.0
  %1391 = vmatpush2.msra.mxu0 0.0
  %1392 = vmatprep.subr.mxu0 0.0
  %1393 = vmatpush2.msra.mxu0 0.0
  %1394 = vmatprep.subr.mxu0 0.0
  %1395 = vmatpush2.msra.mxu0 0.0
  %1396 = vmatprep.subr.mxu0 0.0
  %1397 = vmatpush2.msra.mxu0 0.0
  %1398 = vmatprep.subr.mxu0 0.0
  %1399 = vmatpush2.msra.mxu0 0.0
  %1400 = vmatprep.subr.mxu0 0.0
  %1401 = vmatpush2.msra.mxu0 0.0
  %1402 = vmatprep.mubr.f32.mxu0 0.0
  %1403 = vmatmul.mubr.f32.gmra.mxu0 %v1246
  %v1404 = vpop.f32.mrf.mxu0
  %v1405 = vadd.f32 %v79, %v1404
  %v1406 = vpop.f32.mrf.mxu0
  %1407 = vdwg.mxu0
  %v1408 = vmul.f32 %v1330, %v1405
  %v1409 = vadd.f32 %v1252, %v1408
  %v1410 = vtanh.pop %v1409
  %v1411 = vsub.f32 %v1246, %v1410
  %v1412 = vmul.f32 %v1337, %v1411
  %v1413 = vadd.f32 %v1410, %v1412
  %s1414 = scalar_lea.vmem %s5, 56
  %1415 = vst [vmem:[%s1414] sm:$0xff] %v1413
  %1416 = vst [vmem:[#allocation2] sm:$0xff] %v1413
  // Predicated region
  $region26: #{decoder_forward.4} parent=0 // pred_check
    _
  $region27: #{decoder_forward.4} parent=0 // pred_check_branch
    %1418 = sbr.rel (0) target = $region29
  $region28: #{decoder_forward.4} parent=0 // pred_region
    _
  $region29: #{decoder_forward.4} parent=0 // pred_fallthru
    _
  // Predicated region
  $region30: #{decoder_forward.4} parent=0 // pred_check
    _
  $region31: #{decoder_forward.4} parent=0 // pred_check_branch
    %1420 = sbr.rel (0) target = $region33
  $region32: #{decoder_forward.4} parent=0 // pred_region
    _
  $region33: #{decoder_forward.4} parent=0 // pred_fallthru
    _

// kernel: decoder_forward.3
$region0: #{decoder_forward.3}
  #allocation0 [shape = 'u32[]', space=smem, size = 0x4, offset = 0x4, fixed_abs, tag = 'smem constant byte address 0x4 - core index']
  #allocation1 [shape = 'u32[144,128]{1,0:T(1,128)}', space=vmem, size = 0x12000, scoped, tag = 'internal scratch']
  #allocation2 [shape = 'f32[16,384]{1,0:T(8,128)}', space=vmem, size = 0x6000, scoped, tag = 'scratch operand']
  %s0 = inlined_call_operand.vmem [shape: f32[16,128], index: 0, kind: input, shape index: {}]
  %s1 = inlined_call_operand.vmem [shape: f32[128,384], index: 1, kind: input, shape index: {}]
  %s2 = inlined_call_operand.vmem [shape: f32[1,384], index: 2, kind: input, shape index: {}]
  %s3 = inlined_call_operand.vmem [shape: f32[16,384], index: 3, kind: output, shape index: {}]
  %s4 = sld [smem:[#allocation0]]
  $region30: #{decoder_forward.3} parent=0
    _
  %s6 = ssub.s32 1, %s4
  %s7 = scalar_select 0, %s6, %s4
  // Predicated region
  $region2: #{decoder_forward.3} parent=0 // pred_check
    _
  $region3: #{decoder_forward.3} parent=0 // pred_check_branch
    %9 = sbr.rel (0) target = $region5
  $region4: #{decoder_forward.3} parent=0 // pred_region
    _
  $region5: #{decoder_forward.3} parent=0 // pred_fallthru
    _
  // Predicated region
  $region6: #{decoder_forward.3} parent=0 // pred_check
    _
  $region7: #{decoder_forward.3} parent=0 // pred_check_branch
    %11 = sbr.rel (0) target = $region9
  $region8: #{decoder_forward.3} parent=0 // pred_region
    _
  $region9: #{decoder_forward.3} parent=0 // pred_fallthru
    _
  // Predicated region
  $region10: #{decoder_forward.3} parent=0 // pred_check
    _
  $region11: #{decoder_forward.3} parent=0 // pred_check_branch
    %13 = sbr.rel (0) target = $region13
  $region12: #{decoder_forward.3} parent=0 // pred_region
    _
  $region13: #{decoder_forward.3} parent=0 // pred_fallthru
    _
  %p14 = scmp.eq.s32.totalorder 0, 0
  // Predicated region
  $region14: #{decoder_forward.3} parent=0 // pred_check
    %p15 = pneg %p14
  $region15: #{decoder_forward.3} parent=0 // pred_check_branch
    %17 = sbr.rel (%p15) target = $region17
  $region16: #{decoder_forward.3} parent=0 // pred_region
    %18 = vst [vmem:[#allocation2] sm:$0xff] 0.0
    %19 = vst [vmem:[#allocation2 + $0x8] sm:$0xff] 0.0
    %20 = vst [vmem:[#allocation2 + $0x10] sm:$0xff] 0.0
    %21 = vst [vmem:[#allocation2 + $0x18] sm:$0xff] 0.0
    %22 = vst [vmem:[#allocation2 + $0x20] sm:$0xff] 0.0
    %23 = vst [vmem:[#allocation2 + $0x28] sm:$0xff] 0.0
  $region17: #{decoder_forward.3} parent=0 // pred_fallthru
    _
  %v24 = vld [vmem:[#allocation2] sm:$0xff]
  %v25 = vld [vmem:[#allocation2 + $0x8] sm:$0xff]
  %v26 = vld [vmem:[#allocation2 + $0x10] sm:$0xff]
  %v27 = vld [vmem:[#allocation2 + $0x18] sm:$0xff]
  %v28 = vld [vmem:[#allocation2 + $0x20] sm:$0xff]
  %v29 = vld [vmem:[#allocation2 + $0x28] sm:$0xff]
  %v30 = vld [vmem:[%s0] sm:$0xff]
  %v31 = vld [vmem:[%s0 + $0x8] sm:$0xff]
  %v32 = vld [vmem:[%s1] sm:$0xff]
  %v33 = vld [vmem:[%s1 + $0x8] sm:$0xff]
  %v34 = vld [vmem:[%s1 + $0x10] sm:$0xff]
  %v35 = vld [vmem:[%s1 + $0x18] sm:$0xff]
  %v36 = vld [vmem:[%s1 + $0x20] sm:$0xff]
  %v37 = vld [vmem:[%s1 + $0x28] sm:$0xff]
  %v38 = vld [vmem:[%s1 + $0x30] sm:$0xff]
  %v39 = vld [vmem:[%s1 + $0x38] sm:$0xff]
  %v40 = vld [vmem:[%s1 + $0x40] sm:$0xff]
  %v41 = vld [vmem:[%s1 + $0x48] sm:$0xff]
  %v42 = vld [vmem:[%s1 + $0x50] sm:$0xff]
  %v43 = vld [vmem:[%s1 + $0x58] sm:$0xff]
  %v44 = vld [vmem:[%s1 + $0x60] sm:$0xff]
  %v45 = vld [vmem:[%s1 + $0x68] sm:$0xff]
  %v46 = vld [vmem:[%s1 + $0x70] sm:$0xff]
  %v47 = vld [vmem:[%s1 + $0x78] sm:$0xff]
  %v48 = vld [vmem:[%s1 + $0x80] sm:$0xff]
  %v49 = vld [vmem:[%s1 + $0x88] sm:$0xff]
  %v50 = vld [vmem:[%s1 + $0x90] sm:$0xff]
  %v51 = vld [vmem:[%s1 + $0x98] sm:$0xff]
  %v52 = vld [vmem:[%s1 + $0xa0] sm:$0xff]
  %v53 = vld [vmem:[%s1 + $0xa8] sm:$0xff]
  %v54 = vld [vmem:[%s1 + $0xb0] sm:$0xff]
  %v55 = vld [vmem:[%s1 + $0xb8] sm:$0xff]
  %v56 = vld [vmem:[%s1 + $0xc0] sm:$0xff]
  %v57 = vld [vmem:[%s1 + $0xc8] sm:$0xff]
  %v58 = vld [vmem:[%s1 + $0xd0] sm:$0xff]
  %v59 = vld [vmem:[%s1 + $0xd8] sm:$0xff]
  %v60 = vld [vmem:[%s1 + $0xe0] sm:$0xff]
  %v61 = vld [vmem:[%s1 + $0xe8] sm:$0xff]
  %v62 = vld [vmem:[%s1 + $0xf0] sm:$0xff]
  %v63 = vld [vmem:[%s1 + $0xf8] sm:$0xff]
  %v64 = vld [vmem:[%s1 + $0x100] sm:$0xff]
  %v65 = vld [vmem:[%s1 + $0x108] sm:$0xff]
  %v66 = vld [vmem:[%s1 + $0x110] sm:$0xff]
  %v67 = vld [vmem:[%s1 + $0x118] sm:$0xff]
  %v68 = vld [vmem:[%s1 + $0x120] sm:$0xff]
  %v69 = vld [vmem:[%s1 + $0x128] sm:$0xff]
  %v70 = vld [vmem:[%s1 + $0x130] sm:$0xff]
  %v71 = vld [vmem:[%s1 + $0x138] sm:$0xff]
  %v72 = vld [vmem:[%s1 + $0x140] sm:$0xff]
  %v73 = vld [vmem:[%s1 + $0x148] sm:$0xff]
  %v74 = vld [vmem:[%s1 + $0x150] sm:$0xff]
  %v75 = vld [vmem:[%s1 + $0x158] sm:$0xff]
  %v76 = vld [vmem:[%s1 + $0x160] sm:$0xff]
  %v77 = vld [vmem:[%s1 + $0x168] sm:$0xff]
  %v78 = vld [vmem:[%s1 + $0x170] sm:$0xff]
  %v79 = vld [vmem:[%s1 + $0x178] sm:$0xff]
  %80 = vmatprep.subr.mxu0 %v78
  %81 = vmatpush1.msra.mxu0 %v77
  %82 = vmatprep.subr.mxu0 %v75
  %83 = vmatpush1.msra.mxu0 %v74
  %84 = vmatprep.subr.mxu0 %v72
  %85 = vmatpush1.msra.mxu0 %v71
  %86 = vmatprep.subr.mxu0 %v69
  %87 = vmatpush1.msra.mxu0 %v68
  %88 = vmatprep.subr.mxu0 %v66
  %89 = vmatpush1.msra.mxu0 %v65
  %90 = vmatprep.subr.mxu0 %v63
  %91 = vmatpush1.msra.mxu0 %v62
  %92 = vmatprep.subr.mxu0 %v60
  %93 = vmatpush1.msra.mxu0 %v59
  %94 = vmatprep.subr.mxu0 %v57
  %95 = vmatpush1.msra.mxu0 %v56
  %96 = vmatprep.subr.mxu0 %v54
  %97 = vmatpush1.msra.mxu0 %v53
  %98 = vmatprep.subr.mxu0 %v51
  %99 = vmatpush1.msra.mxu0 %v50
  %100 = vmatprep.subr.mxu0 %v48
  %101 = vmatpush1.msra.mxu0 %v47
  %102 = vmatprep.subr.mxu0 %v45
  %103 = vmatpush1.msra.mxu0 %v44
  %104 = vmatprep.subr.mxu0 %v42
  %105 = vmatpush1.msra.mxu0 %v41
  %106 = vmatprep.subr.mxu0 %v39
  %107 = vmatpush1.msra.mxu0 %v38
  %108 = vmatprep.subr.mxu0 %v36
  %109 = vmatpush1.msra.mxu0 %v35
  %110 = vmatprep.subr.mxu0 %v33
  %111 = vmatpush1.msra.mxu0 %v32
  %112 = vmatprep.subr.mxu0 0.0
  %113 = vmatpush2.msra.mxu0 0.0
  %114 = vmatprep.subr.mxu0 0.0
  %115 = vmatpush2.msra.mxu0 0.0
  %116 = vmatprep.subr.mxu0 0.0
  %117 = vmatpush2.msra.mxu0 0.0
  %118 = vmatprep.subr.mxu0 0.0
  %119 = vmatpush2.msra.mxu0 0.0
  %120 = vmatprep.subr.mxu0 0.0
  %121 = vmatpush2.msra.mxu0 0.0
  %122 = vmatprep.subr.mxu0 0.0
  %123 = vmatpush2.msra.mxu0 0.0
  %124 = vmatprep.subr.mxu0 0.0
  %125 = vmatpush2.msra.mxu0 0.0
  %126 = vmatprep.subr.mxu0 0.0
  %127 = vmatpush2.msra.mxu0 0.0
  %128 = vmatprep.subr.mxu0 0.0
  %129 = vmatpush2.msra.mxu0 0.0
  %130 = vmatprep.subr.mxu0 0.0
  %131 = vmatpush2.msra.mxu0 0.0
  %132 = vmatprep.subr.mxu0 0.0
  %133 = vmatpush2.msra.mxu0 0.0
  %134 = vmatprep.subr.mxu0 0.0
  %135 = vmatpush2.msra.mxu0 0.0
  %136 = vmatprep.subr.mxu0 0.0
  %137 = vmatpush2.msra.mxu0 0.0
  %138 = vmatprep.subr.mxu0 0.0
  %139 = vmatpush2.msra.mxu0 0.0
  %140 = vmatprep.subr.mxu0 0.0
  %141 = vmatpush2.msra.mxu0 0.0
  %142 = vmatprep.subr.mxu0 0.0
  %143 = vmatpush2.msra.mxu0 0.0
  %144 = vmatprep.mubr.f32.mxu0 0.0
  %145 = vmatmul.mubr.f32.gmra.mxu0 %v30
  %v146 = vpop.f32.mrf.mxu0
  %v147 = vadd.f32 0.0, %v146
  %v148 = vpop.f32.mrf.mxu0
  %v149 = vadd.f32 0.0, %v148
  %150 = vmatprep.mubr.f32.mxu0 0.0
  %151 = vmatmul.mubr.f32.gmra.mxu0 %v31
  %v152 = vpop.f32.mrf.mxu0
  %v153 = vadd.f32 0.0, %v152
  %v154 = vpop.f32.mrf.mxu0
  %v155 = vadd.f32 0.0, %v154
  %156 = vdwg.mxu0
  %157 = vmatprep.subr.mxu0 0.0
  %158 = vmatpush1.msra.mxu0 %v79
  %159 = vmatprep.subr.mxu0 0.0
  %160 = vmatpush1.msra.mxu0 %v76
  %161 = vmatprep.subr.mxu0 0.0
  %162 = vmatpush1.msra.mxu0 %v73
  %163 = vmatprep.subr.mxu0 0.0
  %164 = vmatpush1.msra.mxu0 %v70
  %165 = vmatprep.subr.mxu0 0.0
  %166 = vmatpush1.msra.mxu0 %v67
  %167 = vmatprep.subr.mxu0 0.0
  %168 = vmatpush1.msra.mxu0 %v64
  %169 = vmatprep.subr.mxu0 0.0
  %170 = vmatpush1.msra.mxu0 %v61
  %171 = vmatprep.subr.mxu0 0.0
  %172 = vmatpush1.msra.mxu0 %v58
  %173 = vmatprep.subr.mxu0 0.0
  %174 = vmatpush1.msra.mxu0 %v55
  %175 = vmatprep.subr.mxu0 0.0
  %176 = vmatpush1.msra.mxu0 %v52
  %177 = vmatprep.subr.mxu0 0.0
  %178 = vmatpush1.msra.mxu0 %v49
  %179 = vmatprep.subr.mxu0 0.0
  %180 = vmatpush1.msra.mxu0 %v46
  %181 = vmatprep.subr.mxu0 0.0
  %182 = vmatpush1.msra.mxu0 %v43
  %183 = vmatprep.subr.mxu0 0.0
  %184 = vmatpush1.msra.mxu0 %v40
  %185 = vmatprep.subr.mxu0 0.0
  %186 = vmatpush1.msra.mxu0 %v37
  %187 = vmatprep.subr.mxu0 0.0
  %188 = vmatpush1.msra.mxu0 %v34
  %189 = vmatprep.subr.mxu0 0.0
  %190 = vmatpush2.msra.mxu0 0.0
  %191 = vmatprep.subr.mxu0 0.0
  %192 = vmatpush2.msra.mxu0 0.0
  %193 = vmatprep.subr.mxu0 0.0
  %194 = vmatpush2.msra.mxu0 0.0
  %195 = vmatprep.subr.mxu0 0.0
  %196 = vmatpush2.msra.mxu0 0.0
  %197 = vmatprep.subr.mxu0 0.0
  %198 = vmatpush2.msra.mxu0 0.0
  %199 = vmatprep.subr.mxu0 0.0
  %200 = vmatpush2.msra.mxu0 0.0
  %201 = vmatprep.subr.mxu0 0.0
  %202 = vmatpush2.msra.mxu0 0.0
  %203 = vmatprep.subr.mxu0 0.0
  %204 = vmatpush2.msra.mxu0 0.0
  %205 = vmatprep.subr.mxu0 0.0
  %206 = vmatpush2.msra.mxu0 0.0
  %207 = vmatprep.subr.mxu0 0.0
  %208 = vmatpush2.msra.mxu0 0.0
  %209 = vmatprep.subr.mxu0 0.0
  %210 = vmatpush2.msra.mxu0 0.0
  %211 = vmatprep.subr.mxu0 0.0
  %212 = vmatpush2.msra.mxu0 0.0
  %213 = vmatprep.subr.mxu0 0.0
  %214 = vmatpush2.msra.mxu0 0.0
  %215 = vmatprep.subr.mxu0 0.0
  %216 = vmatpush2.msra.mxu0 0.0
  %217 = vmatprep.subr.mxu0 0.0
  %218 = vmatpush2.msra.mxu0 0.0
  %219 = vmatprep.subr.mxu0 0.0
  %220 = vmatpush2.msra.mxu0 0.0
  %221 = vmatprep.mubr.f32.mxu0 0.0
  %222 = vmatmul.mubr.f32.gmra.mxu0 %v30
  %v223 = vpop.f32.mrf.mxu0
  %v224 = vadd.f32 0.0, %v223
  %v225 = vpop.f32.mrf.mxu0
  %226 = vmatprep.mubr.f32.mxu0 0.0
  %227 = vmatmul.mubr.f32.gmra.mxu0 %v31
  %v228 = vpop.f32.mrf.mxu0
  %v229 = vadd.f32 0.0, %v228
  %v230 = vpop.f32.mrf.mxu0
  %231 = vdwg.mxu0
  %v232 = vadd.f32 %v24, %v147
  %v233 = vadd.f32 %v25, %v149
  %v234 = vadd.f32 %v26, %v224
  %v235 = vadd.f32 %v27, %v153
  %v236 = vadd.f32 %v28, %v155
  %v237 = vadd.f32 %v29, %v229
  %238 = vst [vmem:[#allocation2] sm:$0xff] %v232
  %239 = vst [vmem:[#allocation2 + $0x8] sm:$0xff] %v233
  %240 = vst [vmem:[#allocation2 + $0x10] sm:$0xff] %v234
  %241 = vst [vmem:[#allocation2 + $0x18] sm:$0xff] %v235
  %242 = vst [vmem:[#allocation2 + $0x20] sm:$0xff] %v236
  %243 = vst [vmem:[#allocation2 + $0x28] sm:$0xff] %v237
  // Predicated region
  $region18: #{decoder_forward.3} parent=0 // pred_check
    %p244 = pneg %p14
  $region19: #{decoder_forward.3} parent=0 // pred_check_branch
    %246 = sbr.rel (%p244) target = $region21
  $region20: #{decoder_forward.3} parent=0 // pred_region
    %v247 = vld [vmem:[#allocation2] sm:$0xff]
    %v248 = vld [vmem:[#allocation2 + $0x8] sm:$0xff]
    %v249 = vld [vmem:[#allocation2 + $0x10] sm:$0xff]
    %v250 = vld [vmem:[#allocation2 + $0x18] sm:$0xff]
    %v251 = vld [vmem:[#allocation2 + $0x20] sm:$0xff]
    %v252 = vld [vmem:[#allocation2 + $0x28] sm:$0xff]
    %v253 = vld [vmem:[%s2] sm:$0x7]
    %v255 = vlaneseq
    %v256 = vshrl.u32 %v255, 7
    %v257 = vsub.s32 0, %v256
    %v258 = vrot.slane %v253, %v257
    %v259 = vlaneseq
    %v260 = vshrl.u32 %v259, 7
    %v261 = vsub.s32 1, %v260
    %v262 = vrot.slane %v253, %v261
    %v263 = vlaneseq
    %v264 = vshrl.u32 %v263, 7
    %v265 = vsub.s32 2, %v264
    %v266 = vrot.slane %v253, %v265
    %v270 = vadd.f32 %v247, %v258
    %v271 = vadd.f32 %v248, %v262
    %v272 = vadd.f32 %v249, %v266
    %v273 = vadd.f32 %v250, %v258
    %v274 = vadd.f32 %v251, %v262
    %v275 = vadd.f32 %v252, %v266
    %276 = vst [vmem:[%s3] sm:$0xff] %v270
    %277 = vst [vmem:[%s3 + $0x8] sm:$0xff] %v271
    %278 = vst [vmem:[%s3 + $0x10] sm:$0xff] %v272
    %279 = vst [vmem:[%s3 + $0x18] sm:$0xff] %v273
    %280 = vst [vmem:[%s3 + $0x20] sm:$0xff] %v274
    %281 = vst [vmem:[%s3 + $0x28] sm:$0xff] %v275
  $region21: #{decoder_forward.3} parent=0 // pred_fallthru
    _
  // Predicated region
  $region22: #{decoder_forward.3} parent=0 // pred_check
    _
  $region23: #{decoder_forward.3} parent=0 // pred_check_branch
    %283 = sbr.rel (0) target = $region25
  $region24: #{decoder_forward.3} parent=0 // pred_region
    _
  $region25: #{decoder_forward.3} parent=0 // pred_fallthru
    _
  // Predicated region
  $region26: #{decoder_forward.3} parent=0 // pred_check
    _
  $region27: #{decoder_forward.3} parent=0 // pred_check_branch
    %285 = sbr.rel (0) target = $region29
  $region28: #{decoder_forward.3} parent=0 // pred_region
    _
  $region29: #{decoder_forward.3} parent=0 // pred_fallthru
    _

// kernel: decoder_forward.5
$region0: #{decoder_forward.5}
  #allocation0 [shape = 'u32[]', space=smem, size = 0x4, offset = 0x4, fixed_abs, tag = 'smem constant byte address 0x4 - core index']
  #allocation1 [shape = 'u32[144,128]{1,0:T(1,128)}', space=vmem, size = 0x12000, scoped, tag = 'internal scratch']
  #allocation2 [shape = 'f32[16,128]{1,0:T(8,128)}', space=vmem, size = 0x2000, scoped, tag = 'scratch operand']
  %s0 = inlined_call_operand.vmem [shape: f32[16,128], index: 0, kind: input, shape index: {}]
  %s1 = inlined_call_operand.vmem [shape: f32[128,128], index: 1, kind: input, shape index: {}]
  %s2 = inlined_call_operand.vmem [shape: f32[1,128], index: 2, kind: input, shape index: {}]
  %s3 = inlined_call_operand.vmem [shape: f32[16,128], index: 3, kind: output, shape index: {}]
  %s4 = sld [smem:[#allocation0]]
  $region30: #{decoder_forward.5} parent=0
    _
  %s6 = ssub.s32 1, %s4
  %s7 = scalar_select 0, %s6, %s4
  // Predicated region
  $region2: #{decoder_forward.5} parent=0 // pred_check
    _
  $region3: #{decoder_forward.5} parent=0 // pred_check_branch
    %9 = sbr.rel (0) target = $region5
  $region4: #{decoder_forward.5} parent=0 // pred_region
    _
  $region5: #{decoder_forward.5} parent=0 // pred_fallthru
    _
  // Predicated region
  $region6: #{decoder_forward.5} parent=0 // pred_check
    _
  $region7: #{decoder_forward.5} parent=0 // pred_check_branch
    %11 = sbr.rel (0) target = $region9
  $region8: #{decoder_forward.5} parent=0 // pred_region
    _
  $region9: #{decoder_forward.5} parent=0 // pred_fallthru
    _
  // Predicated region
  $region10: #{decoder_forward.5} parent=0 // pred_check
    _
  $region11: #{decoder_forward.5} parent=0 // pred_check_branch
    %13 = sbr.rel (0) target = $region13
  $region12: #{decoder_forward.5} parent=0 // pred_region
    _
  $region13: #{decoder_forward.5} parent=0 // pred_fallthru
    _
  %p14 = scmp.eq.s32.totalorder 0, 0
  // Predicated region
  $region14: #{decoder_forward.5} parent=0 // pred_check
    %p15 = pneg %p14
  $region15: #{decoder_forward.5} parent=0 // pred_check_branch
    %17 = sbr.rel (%p15) target = $region17
  $region16: #{decoder_forward.5} parent=0 // pred_region
    %18 = vst [vmem:[#allocation2] sm:$0xff] 0.0
    %19 = vst [vmem:[#allocation2 + $0x8] sm:$0xff] 0.0
  $region17: #{decoder_forward.5} parent=0 // pred_fallthru
    _
  %v20 = vld [vmem:[#allocation2] sm:$0xff]
  %v21 = vld [vmem:[#allocation2 + $0x8] sm:$0xff]
  %v22 = vld [vmem:[%s0] sm:$0xff]
  %v23 = vld [vmem:[%s0 + $0x8] sm:$0xff]
  %v24 = vld [vmem:[%s1] sm:$0xff]
  %v25 = vld [vmem:[%s1 + $0x8] sm:$0xff]
  %v26 = vld [vmem:[%s1 + $0x10] sm:$0xff]
  %v27 = vld [vmem:[%s1 + $0x18] sm:$0xff]
  %v28 = vld [vmem:[%s1 + $0x20] sm:$0xff]
  %v29 = vld [vmem:[%s1 + $0x28] sm:$0xff]
  %v30 = vld [vmem:[%s1 + $0x30] sm:$0xff]
  %v31 = vld [vmem:[%s1 + $0x38] sm:$0xff]
  %v32 = vld [vmem:[%s1 + $0x40] sm:$0xff]
  %v33 = vld [vmem:[%s1 + $0x48] sm:$0xff]
  %v34 = vld [vmem:[%s1 + $0x50] sm:$0xff]
  %v35 = vld [vmem:[%s1 + $0x58] sm:$0xff]
  %v36 = vld [vmem:[%s1 + $0x60] sm:$0xff]
  %v37 = vld [vmem:[%s1 + $0x68] sm:$0xff]
  %v38 = vld [vmem:[%s1 + $0x70] sm:$0xff]
  %v39 = vld [vmem:[%s1 + $0x78] sm:$0xff]
  %40 = vmatprep.subr.mxu0 0.0
  %41 = vmatpush1.msra.mxu0 %v39
  %42 = vmatprep.subr.mxu0 0.0
  %43 = vmatpush1.msra.mxu0 %v38
  %44 = vmatprep.subr.mxu0 0.0
  %45 = vmatpush1.msra.mxu0 %v37
  %46 = vmatprep.subr.mxu0 0.0
  %47 = vmatpush1.msra.mxu0 %v36
  %48 = vmatprep.subr.mxu0 0.0
  %49 = vmatpush1.msra.mxu0 %v35
  %50 = vmatprep.subr.mxu0 0.0
  %51 = vmatpush1.msra.mxu0 %v34
  %52 = vmatprep.subr.mxu0 0.0
  %53 = vmatpush1.msra.mxu0 %v33
  %54 = vmatprep.subr.mxu0 0.0
  %55 = vmatpush1.msra.mxu0 %v32
  %56 = vmatprep.subr.mxu0 0.0
  %57 = vmatpush1.msra.mxu0 %v31
  %58 = vmatprep.subr.mxu0 0.0
  %59 = vmatpush1.msra.mxu0 %v30
  %60 = vmatprep.subr.mxu0 0.0
  %61 = vmatpush1.msra.mxu0 %v29
  %62 = vmatprep.subr.mxu0 0.0
  %63 = vmatpush1.msra.mxu0 %v28
  %64 = vmatprep.subr.mxu0 0.0
  %65 = vmatpush1.msra.mxu0 %v27
  %66 = vmatprep.subr.mxu0 0.0
  %67 = vmatpush1.msra.mxu0 %v26
  %68 = vmatprep.subr.mxu0 0.0
  %69 = vmatpush1.msra.mxu0 %v25
  %70 = vmatprep.subr.mxu0 0.0
  %71 = vmatpush1.msra.mxu0 %v24
  %72 = vmatprep.subr.mxu0 0.0
  %73 = vmatpush2.msra.mxu0 0.0
  %74 = vmatprep.subr.mxu0 0.0
  %75 = vmatpush2.msra.mxu0 0.0
  %76 = vmatprep.subr.mxu0 0.0
  %77 = vmatpush2.msra.mxu0 0.0
  %78 = vmatprep.subr.mxu0 0.0
  %79 = vmatpush2.msra.mxu0 0.0
  %80 = vmatprep.subr.mxu0 0.0
  %81 = vmatpush2.msra.mxu0 0.0
  %82 = vmatprep.subr.mxu0 0.0
  %83 = vmatpush2.msra.mxu0 0.0
  %84 = vmatprep.subr.mxu0 0.0
  %85 = vmatpush2.msra.mxu0 0.0
  %86 = vmatprep.subr.mxu0 0.0
  %87 = vmatpush2.msra.mxu0 0.0
  %88 = vmatprep.subr.mxu0 0.0
  %89 = vmatpush2.msra.mxu0 0.0
  %90 = vmatprep.subr.mxu0 0.0
  %91 = vmatpush2.msra.mxu0 0.0
  %92 = vmatprep.subr.mxu0 0.0
  %93 = vmatpush2.msra.mxu0 0.0
  %94 = vmatprep.subr.mxu0 0.0
  %95 = vmatpush2.msra.mxu0 0.0
  %96 = vmatprep.subr.mxu0 0.0
  %97 = vmatpush2.msra.mxu0 0.0
  %98 = vmatprep.subr.mxu0 0.0
  %99 = vmatpush2.msra.mxu0 0.0
  %100 = vmatprep.subr.mxu0 0.0
  %101 = vmatpush2.msra.mxu0 0.0
  %102 = vmatprep.subr.mxu0 0.0
  %103 = vmatpush2.msra.mxu0 0.0
  %104 = vmatprep.mubr.f32.mxu0 0.0
  %105 = vmatmul.mubr.f32.gmra.mxu0 %v22
  %v106 = vpop.f32.mrf.mxu0
  %v107 = vadd.f32 0.0, %v106
  %v108 = vpop.f32.mrf.mxu0
  %109 = vmatprep.mubr.f32.mxu0 0.0
  %110 = vmatmul.mubr.f32.gmra.mxu0 %v23
  %v111 = vpop.f32.mrf.mxu0
  %v112 = vadd.f32 0.0, %v111
  %v113 = vpop.f32.mrf.mxu0
  %114 = vdwg.mxu0
  %v115 = vadd.f32 %v20, %v107
  %v116 = vadd.f32 %v21, %v112
  %117 = vst [vmem:[#allocation2] sm:$0xff] %v115
  %118 = vst [vmem:[#allocation2 + $0x8] sm:$0xff] %v116
  // Predicated region
  $region18: #{decoder_forward.5} parent=0 // pred_check
    %p119 = pneg %p14
  $region19: #{decoder_forward.5} parent=0 // pred_check_branch
    %121 = sbr.rel (%p119) target = $region21
  $region20: #{decoder_forward.5} parent=0 // pred_region
    %v122 = vld [vmem:[#allocation2] sm:$0xff]
    %v123 = vld [vmem:[#allocation2 + $0x8] sm:$0xff]
    %v124 = vld [vmem:[%s2] sm:$0x1]
    %v126 = vlaneseq
    %v127 = vshrl.u32 %v126, 7
    %v128 = vsub.s32 0, %v127
    %v129 = vrot.slane %v124, %v128
    %v131 = vadd.f32 %v122, %v129
    %v132 = vadd.f32 %v123, %v129
    %133 = vst [vmem:[%s3] sm:$0xff] %v131
    %134 = vst [vmem:[%s3 + $0x8] sm:$0xff] %v132
  $region21: #{decoder_forward.5} parent=0 // pred_fallthru
    _
  // Predicated region
  $region22: #{decoder_forward.5} parent=0 // pred_check
    _
  $region23: #{decoder_forward.5} parent=0 // pred_check_branch
    %136 = sbr.rel (0) target = $region25
  $region24: #{decoder_forward.5} parent=0 // pred_region
    _
  $region25: #{decoder_forward.5} parent=0 // pred_fallthru
    _
  // Predicated region
  $region26: #{decoder_forward.5} parent=0 // pred_check
    _
  $region27: #{decoder_forward.5} parent=0 // pred_check_branch
    %138 = sbr.rel (0) target = $region29
  $region28: #{decoder_forward.5} parent=0 // pred_region
    _
  $region29: #{decoder_forward.5} parent=0 // pred_fallthru
    _

// kernel: decoder_forward.4
$region0: #{decoder_forward.4}
  #allocation0 [shape = 'u32[]', space=smem, size = 0x4, offset = 0x4, fixed_abs, tag = 'smem constant byte address 0x4 - core index']
  #allocation1 [shape = 'u32[144,128]{1,0:T(1,128)}', space=vmem, size = 0x12000, scoped, tag = 'internal scratch']
  #allocation2 [shape = 'f32[8,128]{1,0:T(8,128)}', space=vmem, size = 0x1000, scoped, tag = 'scratch operand']
  %s0 = inlined_call_operand.vmem [shape: f32[8,8,384], index: 0, kind: input, shape index: {}]
  %s1 = inlined_call_operand.vmem [shape: f32[8,128], index: 1, kind: input, shape index: {}]
  %s2 = inlined_call_operand.vmem [shape: f32[128,256], index: 2, kind: input, shape index: {}]
  %s3 = inlined_call_operand.vmem [shape: f32[128,128], index: 3, kind: input, shape index: {}]
  %s4 = inlined_call_operand.vmem [shape: f32[1,128], index: 4, kind: input, shape index: {}]
  %s5 = inlined_call_operand.vmem [shape: f32[8,8,128], index: 5, kind: output, shape index: {}]
  %s6 = sld [smem:[#allocation0]]
  $region34: #{decoder_forward.4} parent=0
    _
  %s8 = ssub.s32 1, %s6
  %s9 = scalar_select 0, %s8, %s6
  // Predicated region
  $region2: #{decoder_forward.4} parent=0 // pred_check
    _
  $region3: #{decoder_forward.4} parent=0 // pred_check_branch
    %11 = sbr.rel (0) target = $region5
  $region4: #{decoder_forward.4} parent=0 // pred_region
    _
  $region5: #{decoder_forward.4} parent=0 // pred_fallthru
    _
  // Predicated region
  $region6: #{decoder_forward.4} parent=0 // pred_check
    _
  $region7: #{decoder_forward.4} parent=0 // pred_check_branch
    %13 = sbr.rel (0) target = $region9
  $region8: #{decoder_forward.4} parent=0 // pred_region
    _
  $region9: #{decoder_forward.4} parent=0 // pred_fallthru
    _
  // Predicated region
  $region10: #{decoder_forward.4} parent=0 // pred_check
    _
  $region11: #{decoder_forward.4} parent=0 // pred_check_branch
    %15 = sbr.rel (0) target = $region13
  $region12: #{decoder_forward.4} parent=0 // pred_region
    _
  $region13: #{decoder_forward.4} parent=0 // pred_fallthru
    _
  // Predicated region
  $region14: #{decoder_forward.4} parent=0 // pred_check
    _
  $region15: #{decoder_forward.4} parent=0 // pred_check_branch
    %17 = sbr.rel (0) target = $region17
  $region16: #{decoder_forward.4} parent=0 // pred_region
    _
  $region17: #{decoder_forward.4} parent=0 // pred_fallthru
    _
  // Predicated region
  $region18: #{decoder_forward.4} parent=0 // pred_check
    _
  $region19: #{decoder_forward.4} parent=0 // pred_check_branch
    %19 = sbr.rel (0) target = $region21
  $region20: #{decoder_forward.4} parent=0 // pred_region
    _
  $region21: #{decoder_forward.4} parent=0 // pred_fallthru
    _
  %p20 = scmp.eq.s32.totalorder 0, 0
  // Predicated region
  $region22: #{decoder_forward.4} parent=0 // pred_check
    %p21 = pneg %p20
  $region23: #{decoder_forward.4} parent=0 // pred_check_branch
    %23 = sbr.rel (%p21) target = $region25
  $region24: #{decoder_forward.4} parent=0 // pred_region
    %v24 = vld [vmem:[%s1] sm:$0xff]
    %25 = vst [vmem:[#allocation2] sm:$0xff] %v24
  $region25: #{decoder_forward.4} parent=0 // pred_fallthru
    _
  %v26 = vld [vmem:[%s2] sm:$0xff]
  %v27 = vld [vmem:[%s2 + $0x8] sm:$0xff]
  %v28 = vld [vmem:[%s2 + $0x10] sm:$0xff]
  %v29 = vld [vmem:[%s2 + $0x18] sm:$0xff]
  %v30 = vld [vmem:[%s2 + $0x20] sm:$0xff]
  %v31 = vld [vmem:[%s2 + $0x28] sm:$0xff]
  %v32 = vld [vmem:[%s2 + $0x30] sm:$0xff]
  %v33 = vld [vmem:[%s2 + $0x38] sm:$0xff]
  %v34 = vld [vmem:[%s2 + $0x40] sm:$0xff]
  %v35 = vld [vmem:[%s2 + $0x48] sm:$0xff]
  %v36 = vld [vmem:[%s2 + $0x50] sm:$0xff]
  %v37 = vld [vmem:[%s2 + $0x58] sm:$0xff]
  %v38 = vld [vmem:[%s2 + $0x60] sm:$0xff]
  %v39 = vld [vmem:[%s2 + $0x68] sm:$0xff]
  %v40 = vld [vmem:[%s2 + $0x70] sm:$0xff]
  %v41 = vld [vmem:[%s2 + $0x78] sm:$0xff]
  %v42 = vld [vmem:[%s2 + $0x80] sm:$0xff]
  %v43 = vld [vmem:[%s2 + $0x88] sm:$0xff]
  %v44 = vld [vmem:[%s2 + $0x90] sm:$0xff]
  %v45 = vld [vmem:[%s2 + $0x98] sm:$0xff]
  %v46 = vld [vmem:[%s2 + $0xa0] sm:$0xff]
  %v47 = vld [vmem:[%s2 + $0xa8] sm:$0xff]
  %v48 = vld [vmem:[%s2 + $0xb0] sm:$0xff]
  %v49 = vld [vmem:[%s2 + $0xb8] sm:$0xff]
  %v50 = vld [vmem:[%s2 + $0xc0] sm:$0xff]
  %v51 = vld [vmem:[%s2 + $0xc8] sm:$0xff]
  %v52 = vld [vmem:[%s2 + $0xd0] sm:$0xff]
  %v53 = vld [vmem:[%s2 + $0xd8] sm:$0xff]
  %v54 = vld [vmem:[%s2 + $0xe0] sm:$0xff]
  %v55 = vld [vmem:[%s2 + $0xe8] sm:$0xff]
  %v56 = vld [vmem:[%s2 + $0xf0] sm:$0xff]
  %v57 = vld [vmem:[%s2 + $0xf8] sm:$0xff]
  %v58 = vld [vmem:[%s3] sm:$0xff]
  %v59 = vld [vmem:[%s3 + $0x8] sm:$0xff]
  %v60 = vld [vmem:[%s3 + $0x10] sm:$0xff]
  %v61 = vld [vmem:[%s3 + $0x18] sm:$0xff]
  %v62 = vld [vmem:[%s3 + $0x20] sm:$0xff]
  %v63 = vld [vmem:[%s3 + $0x28] sm:$0xff]
  %v64 = vld [vmem:[%s3 + $0x30] sm:$0xff]
  %v65 = vld [vmem:[%s3 + $0x38] sm:$0xff]
  %v66 = vld [vmem:[%s3 + $0x40] sm:$0xff]
  %v67 = vld [vmem:[%s3 + $0x48] sm:$0xff]
  %v68 = vld [vmem:[%s3 + $0x50] sm:$0xff]
  %v69 = vld [vmem:[%s3 + $0x58] sm:$0xff]
  %v70 = vld [vmem:[%s3 + $0x60] sm:$0xff]
  %v71 = vld [vmem:[%s3 + $0x68] sm:$0xff]
  %v72 = vld [vmem:[%s3 + $0x70] sm:$0xff]
  %v73 = vld [vmem:[%s3 + $0x78] sm:$0xff]
  %v74 = vld [vmem:[%s4] sm:$0x1]
  %v76 = vlaneseq
  %v77 = vshrl.u32 %v76, 7
  %v78 = vsub.s32 0, %v77
  %v79 = vrot.slane %v74, %v78
  %v81 = vld [vmem:[#allocation2] sm:$0xff]
  %v82 = vld [vmem:[%s0] sm:$0xff]
  %v83 = vld [vmem:[%s0 + $0x8] sm:$0xff]
  %v84 = vld [vmem:[%s0 + $0x10] sm:$0xff]
  %85 = vmatprep.subr.mxu0 %v57
  %86 = vmatpush1.msra.mxu0 %v56
  %87 = vmatprep.subr.mxu0 %v55
  %88 = vmatpush1.msra.mxu0 %v54
  %89 = vmatprep.subr.mxu0 %v53
  %90 = vmatpush1.msra.mxu0 %v52
  %91 = vmatprep.subr.mxu0 %v51
  %92 = vmatpush1.msra.mxu0 %v50
  %93 = vmatprep.subr.mxu0 %v49
  %94 = vmatpush1.msra.mxu0 %v48
  %95 = vmatprep.subr.mxu0 %v47
  %96 = vmatpush1.msra.mxu0 %v46
  %97 = vmatprep.subr.mxu0 %v45
  %98 = vmatpush1.msra.mxu0 %v44
  %99 = vmatprep.subr.mxu0 %v43
  %100 = vmatpush1.msra.mxu0 %v42
  %101 = vmatprep.subr.mxu0 %v41
  %102 = vmatpush1.msra.mxu0 %v40
  %103 = vmatprep.subr.mxu0 %v39
  %104 = vmatpush1.msra.mxu0 %v38
  %105 = vmatprep.subr.mxu0 %v37
  %106 = vmatpush1.msra.mxu0 %v36
  %107 = vmatprep.subr.mxu0 %v35
  %108 = vmatpush1.msra.mxu0 %v34
  %109 = vmatprep.subr.mxu0 %v33
  %110 = vmatpush1.msra.mxu0 %v32
  %111 = vmatprep.subr.mxu0 %v31
  %112 = vmatpush1.msra.mxu0 %v30
  %113 = vmatprep.subr.mxu0 %v29
  %114 = vmatpush1.msra.mxu0 %v28
  %115 = vmatprep.subr.mxu0 %v27
  %116 = vmatpush1.msra.mxu0 %v26
  %117 = vmatprep.subr.mxu0 0.0
  %118 = vmatpush2.msra.mxu0 0.0
  %119 = vmatprep.subr.mxu0 0.0
  %120 = vmatpush2.msra.mxu0 0.0
  %121 = vmatprep.subr.mxu0 0.0
  %122 = vmatpush2.msra.mxu0 0.0
  %123 = vmatprep.subr.mxu0 0.0
  %124 = vmatpush2.msra.mxu0 0.0
  %125 = vmatprep.subr.mxu0 0.0
  %126 = vmatpush2.msra.mxu0 0.0
  %127 = vmatprep.subr.mxu0 0.0
  %128 = vmatpush2.msra.mxu0 0.0
  %129 = vmatprep.subr.mxu0 0.0
  %130 = vmatpush2.msra.mxu0 0.0
  %131 = vmatprep.subr.mxu0 0.0
  %132 = vmatpush2.msra.mxu0 0.0
  %133 = vmatprep.subr.mxu0 0.0
  %134 = vmatpush2.msra.mxu0 0.0
  %135 = vmatprep.subr.mxu0 0.0
  %136 = vmatpush2.msra.mxu0 0.0
  %137 = vmatprep.subr.mxu0 0.0
  %138 = vmatpush2.msra.mxu0 0.0
  %139 = vmatprep.subr.mxu0 0.0
  %140 = vmatpush2.msra.mxu0 0.0
  %141 = vmatprep.subr.mxu0 0.0
  %142 = vmatpush2.msra.mxu0 0.0
  %143 = vmatprep.subr.mxu0 0.0
  %144 = vmatpush2.msra.mxu0 0.0
  %145 = vmatprep.subr.mxu0 0.0
  %146 = vmatpush2.msra.mxu0 0.0
  %147 = vmatprep.subr.mxu0 0.0
  %148 = vmatpush2.msra.mxu0 0.0
  %149 = vmatprep.mubr.f32.mxu0 0.0
  %150 = vmatmul.mubr.f32.gmra.mxu0 %v81
  %v151 = vpop.f32.mrf.mxu0
  %v152 = vadd.f32 0.0, %v151
  %v153 = vpop.f32.mrf.mxu0
  %v154 = vadd.f32 0.0, %v153
  %155 = vdwg.mxu0
  %v156 = vadd.f32 %v82, %v152
  %v157 = vxor.u32 %v156, 2147483648
  %v158 = vmul.f32 %v157, 1.442695
  %v159 = vpow.pop %v158
  %v160 = vadd.f32 %v159, 1.0
  %v161 = vrcp.pop %v160
  %v162 = vmul.f32 1.0, %v161
  %v163 = vadd.f32 %v83, %v154
  %v164 = vxor.u32 %v163, 2147483648
  %v165 = vmul.f32 %v164, 1.442695
  %v166 = vpow.pop %v165
  %v167 = vadd.f32 %v166, 1.0
  %v168 = vrcp.pop %v167
  %v169 = vmul.f32 1.0, %v168
  %170 = vmatprep.subr.mxu0 0.0
  %171 = vmatpush1.msra.mxu0 %v73
  %172 = vmatprep.subr.mxu0 0.0
  %173 = vmatpush1.msra.mxu0 %v72
  %174 = vmatprep.subr.mxu0 0.0
  %175 = vmatpush1.msra.mxu0 %v71
  %176 = vmatprep.subr.mxu0 0.0
  %177 = vmatpush1.msra.mxu0 %v70
  %178 = vmatprep.subr.mxu0 0.0
  %179 = vmatpush1.msra.mxu0 %v69
  %180 = vmatprep.subr.mxu0 0.0
  %181 = vmatpush1.msra.mxu0 %v68
  %182 = vmatprep.subr.mxu0 0.0
  %183 = vmatpush1.msra.mxu0 %v67
  %184 = vmatprep.subr.mxu0 0.0
  %185 = vmatpush1.msra.mxu0 %v66
  %186 = vmatprep.subr.mxu0 0.0
  %187 = vmatpush1.msra.mxu0 %v65
  %188 = vmatprep.subr.mxu0 0.0
  %189 = vmatpush1.msra.mxu0 %v64
  %190 = vmatprep.subr.mxu0 0.0
  %191 = vmatpush1.msra.mxu0 %v63
  %192 = vmatprep.subr.mxu0 0.0
  %193 = vmatpush1.msra.mxu0 %v62
  %194 = vmatprep.subr.mxu0 0.0
  %195 = vmatpush1.msra.mxu0 %v61
  %196 = vmatprep.subr.mxu0 0.0
  %197 = vmatpush1.msra.mxu0 %v60
  %198 = vmatprep.subr.mxu0 0.0
  %199 = vmatpush1.msra.mxu0 %v59
  %200 = vmatprep.subr.mxu0 0.0
  %201 = vmatpush1.msra.mxu0 %v58
  %202 = vmatprep.subr.mxu0 0.0
  %203 = vmatpush2.msra.mxu0 0.0
  %204 = vmatprep.subr.mxu0 0.0
  %205 = vmatpush2.msra.mxu0 0.0
  %206 = vmatprep.subr.mxu0 0.0
  %207 = vmatpush2.msra.mxu0 0.0
  %208 = vmatprep.subr.mxu0 0.0
  %209 = vmatpush2.msra.mxu0 0.0
  %210 = vmatprep.subr.mxu0 0.0
  %211 = vmatpush2.msra.mxu0 0.0
  %212 = vmatprep.subr.mxu0 0.0
  %213 = vmatpush2.msra.mxu0 0.0
  %214 = vmatprep.subr.mxu0 0.0
  %215 = vmatpush2.msra.mxu0 0.0
  %216 = vmatprep.subr.mxu0 0.0
  %217 = vmatpush2.msra.mxu0 0.0
  %218 = vmatprep.subr.mxu0 0.0
  %219 = vmatpush2.msra.mxu0 0.0
  %220 = vmatprep.subr.mxu0 0.0
  %221 = vmatpush2.msra.mxu0 0.0
  %222 = vmatprep.subr.mxu0 0.0
  %223 = vmatpush2.msra.mxu0 0.0
  %224 = vmatprep.subr.mxu0 0.0
  %225 = vmatpush2.msra.mxu0 0.0
  %226 = vmatprep.subr.mxu0 0.0
  %227 = vmatpush2.msra.mxu0 0.0
  %228 = vmatprep.subr.mxu0 0.0
  %229 = vmatpush2.msra.mxu0 0.0
  %230 = vmatprep.subr.mxu0 0.0
  %231 = vmatpush2.msra.mxu0 0.0
  %232 = vmatprep.subr.mxu0 0.0
  %233 = vmatpush2.msra.mxu0 0.0
  %234 = vmatprep.mubr.f32.mxu0 0.0
  %235 = vmatmul.mubr.f32.gmra.mxu0 %v81
  %v236 = vpop.f32.mrf.mxu0
  %v237 = vadd.f32 %v79, %v236
  %v238 = vpop.f32.mrf.mxu0
  %239 = vdwg.mxu0
  %v240 = vmul.f32 %v162, %v237
  %v241 = vadd.f32 %v84, %v240
  %v242 = vtanh.pop %v241
  %v243 = vsub.f32 %v81, %v242
  %v244 = vmul.f32 %v169, %v243
  %v245 = vadd.f32 %v242, %v244
  %246 = vst [vmem:[%s5] sm:$0xff] %v245
  %s247 = scalar_lea.vmem %s0, 24
  %v248 = vld [vmem:[%s247] sm:$0xff]
  %v249 = vld [vmem:[%s247 + $0x8] sm:$0xff]
  %v250 = vld [vmem:[%s247 + $0x10] sm:$0xff]
  %251 = vmatprep.subr.mxu0 %v57
  %252 = vmatpush1.msra.mxu0 %v56
  %253 = vmatprep.subr.mxu0 %v55
  %254 = vmatpush1.msra.mxu0 %v54
  %255 = vmatprep.subr.mxu0 %v53
  %256 = vmatpush1.msra.mxu0 %v52
  %257 = vmatprep.subr.mxu0 %v51
  %258 = vmatpush1.msra.mxu0 %v50
  %259 = vmatprep.subr.mxu0 %v49
  %260 = vmatpush1.msra.mxu0 %v48
  %261 = vmatprep.subr.mxu0 %v47
  %262 = vmatpush1.msra.mxu0 %v46
  %263 = vmatprep.subr.mxu0 %v45
  %264 = vmatpush1.msra.mxu0 %v44
  %265 = vmatprep.subr.mxu0 %v43
  %266 = vmatpush1.msra.mxu0 %v42
  %267 = vmatprep.subr.mxu0 %v41
  %268 = vmatpush1.msra.mxu0 %v40
  %269 = vmatprep.subr.mxu0 %v39
  %270 = vmatpush1.msra.mxu0 %v38
  %271 = vmatprep.subr.mxu0 %v37
  %272 = vmatpush1.msra.mxu0 %v36
  %273 = vmatprep.subr.mxu0 %v35
  %274 = vmatpush1.msra.mxu0 %v34
  %275 = vmatprep.subr.mxu0 %v33
  %276 = vmatpush1.msra.mxu0 %v32
  %277 = vmatprep.subr.mxu0 %v31
  %278 = vmatpush1.msra.mxu0 %v30
  %279 = vmatprep.subr.mxu0 %v29
  %280 = vmatpush1.msra.mxu0 %v28
  %281 = vmatprep.subr.mxu0 %v27
  %282 = vmatpush1.msra.mxu0 %v26
  %283 = vmatprep.subr.mxu0 0.0
  %284 = vmatpush2.msra.mxu0 0.0
  %285 = vmatprep.subr.mxu0 0.0
  %286 = vmatpush2.msra.mxu0 0.0
  %287 = vmatprep.subr.mxu0 0.0
  %288 = vmatpush2.msra.mxu0 0.0
  %289 = vmatprep.subr.mxu0 0.0
  %290 = vmatpush2.msra.mxu0 0.0
  %291 = vmatprep.subr.mxu0 0.0
  %292 = vmatpush2.msra.mxu0 0.0
  %293 = vmatprep.subr.mxu0 0.0
  %294 = vmatpush2.msra.mxu0 0.0
  %295 = vmatprep.subr.mxu0 0.0
  %296 = vmatpush2.msra.mxu0 0.0
  %297 = vmatprep.subr.mxu0 0.0
  %298 = vmatpush2.msra.mxu0 0.0
  %299 = vmatprep.subr.mxu0 0.0
  %300 = vmatpush2.msra.mxu0 0.0
  %301 = vmatprep.subr.mxu0 0.0
  %302 = vmatpush2.msra.mxu0 0.0
  %303 = vmatprep.subr.mxu0 0.0
  %304 = vmatpush2.msra.mxu0 0.0
  %305 = vmatprep.subr.mxu0 0.0
  %306 = vmatpush2.msra.mxu0 0.0
  %307 = vmatprep.subr.mxu0 0.0
  %308 = vmatpush2.msra.mxu0 0.0
  %309 = vmatprep.subr.mxu0 0.0
  %310 = vmatpush2.msra.mxu0 0.0
  %311 = vmatprep.subr.mxu0 0.0
  %312 = vmatpush2.msra.mxu0 0.0
  %313 = vmatprep.subr.mxu0 0.0
  %314 = vmatpush2.msra.mxu0 0.0
  %315 = vmatprep.mubr.f32.mxu0 0.0
  %316 = vmatmul.mubr.f32.gmra.mxu0 %v245
  %v317 = vpop.f32.mrf.mxu0
  %v318 = vadd.f32 0.0, %v317
  %v319 = vpop.f32.mrf.mxu0
  %v320 = vadd.f32 0.0, %v319
  %321 = vdwg.mxu0
  %v322 = vadd.f32 %v248, %v318
  %v323 = vxor.u32 %v322, 2147483648
  %v324 = vmul.f32 %v323, 1.442695
  %v325 = vpow.pop %v324
  %v326 = vadd.f32 %v325, 1.0
  %v327 = vrcp.pop %v326
  %v328 = vmul.f32 1.0, %v327
  %v329 = vadd.f32 %v249, %v320
  %v330 = vxor.u32 %v329, 2147483648
  %v331 = vmul.f32 %v330, 1.442695
  %v332 = vpow.pop %v331
  %v333 = vadd.f32 %v332, 1.0
  %v334 = vrcp.pop %v333
  %v335 = vmul.f32 1.0, %v334
  %336 = vmatprep.subr.mxu0 0.0
  %337 = vmatpush1.msra.mxu0 %v73
  %338 = vmatprep.subr.mxu0 0.0
  %339 = vmatpush1.msra.mxu0 %v72
  %340 = vmatprep.subr.mxu0 0.0
  %341 = vmatpush1.msra.mxu0 %v71
  %342 = vmatprep.subr.mxu0 0.0
  %343 = vmatpush1.msra.mxu0 %v70
  %344 = vmatprep.subr.mxu0 0.0
  %345 = vmatpush1.msra.mxu0 %v69
  %346 = vmatprep.subr.mxu0 0.0
  %347 = vmatpush1.msra.mxu0 %v68
  %348 = vmatprep.subr.mxu0 0.0
  %349 = vmatpush1.msra.mxu0 %v67
  %350 = vmatprep.subr.mxu0 0.0
  %351 = vmatpush1.msra.mxu0 %v66
  %352 = vmatprep.subr.mxu0 0.0
  %353 = vmatpush1.msra.mxu0 %v65
  %354 = vmatprep.subr.mxu0 0.0
  %355 = vmatpush1.msra.mxu0 %v64
  %356 = vmatprep.subr.mxu0 0.0
  %357 = vmatpush1.msra.mxu0 %v63
  %358 = vmatprep.subr.mxu0 0.0
  %359 = vmatpush1.msra.mxu0 %v62
  %360 = vmatprep.subr.mxu0 0.0
  %361 = vmatpush1.msra.mxu0 %v61
  %362 = vmatprep.subr.mxu0 0.0
  %363 = vmatpush1.msra.mxu0 %v60
  %364 = vmatprep.subr.mxu0 0.0
  %365 = vmatpush1.msra.mxu0 %v59
  %366 = vmatprep.subr.mxu0 0.0
  %367 = vmatpush1.msra.mxu0 %v58
  %368 = vmatprep.subr.mxu0 0.0
  %369 = vmatpush2.msra.mxu0 0.0
  %370 = vmatprep.subr.mxu0 0.0
  %371 = vmatpush2.msra.mxu0 0.0
  %372 = vmatprep.subr.mxu0 0.0
  %373 = vmatpush2.msra.mxu0 0.0
  %374 = vmatprep.subr.mxu0 0.0
  %375 = vmatpush2.msra.mxu0 0.0
  %376 = vmatprep.subr.mxu0 0.0
  %377 = vmatpush2.msra.mxu0 0.0
  %378 = vmatprep.subr.mxu0 0.0
  %379 = vmatpush2.msra.mxu0 0.0
  %380 = vmatprep.subr.mxu0 0.0
  %381 = vmatpush2.msra.mxu0 0.0
  %382 = vmatprep.subr.mxu0 0.0
  %383 = vmatpush2.msra.mxu0 0.0
  %384 = vmatprep.subr.mxu0 0.0
  %385 = vmatpush2.msra.mxu0 0.0
  %386 = vmatprep.subr.mxu0 0.0
  %387 = vmatpush2.msra.mxu0 0.0
  %388 = vmatprep.subr.mxu0 0.0
  %389 = vmatpush2.msra.mxu0 0.0
  %390 = vmatprep.subr.mxu0 0.0
  %391 = vmatpush2.msra.mxu0 0.0
  %392 = vmatprep.subr.mxu0 0.0
  %393 = vmatpush2.msra.mxu0 0.0
  %394 = vmatprep.subr.mxu0 0.0
  %395 = vmatpush2.msra.mxu0 0.0
  %396 = vmatprep.subr.mxu0 0.0
  %397 = vmatpush2.msra.mxu0 0.0
  %398 = vmatprep.subr.mxu0 0.0
  %399 = vmatpush2.msra.mxu0 0.0
  %400 = vmatprep.mubr.f32.mxu0 0.0
  %401 = vmatmul.mubr.f32.gmra.mxu0 %v245
  %v402 = vpop.f32.mrf.mxu0
  %v403 = vadd.f32 %v79, %v402
  %v404 = vpop.f32.mrf.mxu0
  %405 = vdwg.mxu0
  %v406 = vmul.f32 %v328, %v403
  %v407 = vadd.f32 %v250, %v406
  %v408 = vtanh.pop %v407
  %v409 = vsub.f32 %v245, %v408
  %v410 = vmul.f32 %v335, %v409
  %v411 = vadd.f32 %v408, %v410
  %s412 = scalar_lea.vmem %s5, 8
  %413 = vst [vmem:[%s412] sm:$0xff] %v411
  %s414 = scalar_lea.vmem %s0, 48
  %v415 = vld [vmem:[%s414] sm:$0xff]
  %v416 = vld [vmem:[%s414 + $0x8] sm:$0xff]
  %v417 = vld [vmem:[%s414 + $0x10] sm:$0xff]
  %418 = vmatprep.subr.mxu0 %v57
  %419 = vmatpush1.msra.mxu0 %v56
  %420 = vmatprep.subr.mxu0 %v55
  %421 = vmatpush1.msra.mxu0 %v54
  %422 = vmatprep.subr.mxu0 %v53
  %423 = vmatpush1.msra.mxu0 %v52
  %424 = vmatprep.subr.mxu0 %v51
  %425 = vmatpush1.msra.mxu0 %v50
  %426 = vmatprep.subr.mxu0 %v49
  %427 = vmatpush1.msra.mxu0 %v48
  %428 = vmatprep.subr.mxu0 %v47
  %429 = vmatpush1.msra.mxu0 %v46
  %430 = vmatprep.subr.mxu0 %v45
  %431 = vmatpush1.msra.mxu0 %v44
  %432 = vmatprep.subr.mxu0 %v43
  %433 = vmatpush1.msra.mxu0 %v42
  %434 = vmatprep.subr.mxu0 %v41
  %435 = vmatpush1.msra.mxu0 %v40
  %436 = vmatprep.subr.mxu0 %v39
  %437 = vmatpush1.msra.mxu0 %v38
  %438 = vmatprep.subr.mxu0 %v37
  %439 = vmatpush1.msra.mxu0 %v36
  %440 = vmatprep.subr.mxu0 %v35
  %441 = vmatpush1.msra.mxu0 %v34
  %442 = vmatprep.subr.mxu0 %v33
  %443 = vmatpush1.msra.mxu0 %v32
  %444 = vmatprep.subr.mxu0 %v31
  %445 = vmatpush1.msra.mxu0 %v30
  %446 = vmatprep.subr.mxu0 %v29
  %447 = vmatpush1.msra.mxu0 %v28
  %448 = vmatprep.subr.mxu0 %v27
  %449 = vmatpush1.msra.mxu0 %v26
  %450 = vmatprep.subr.mxu0 0.0
  %451 = vmatpush2.msra.mxu0 0.0
  %452 = vmatprep.subr.mxu0 0.0
  %453 = vmatpush2.msra.mxu0 0.0
  %454 = vmatprep.subr.mxu0 0.0
  %455 = vmatpush2.msra.mxu0 0.0
  %456 = vmatprep.subr.mxu0 0.0
  %457 = vmatpush2.msra.mxu0 0.0
  %458 = vmatprep.subr.mxu0 0.0
  %459 = vmatpush2.msra.mxu0 0.0
  %460 = vmatprep.subr.mxu0 0.0
  %461 = vmatpush2.msra.mxu0 0.0
  %462 = vmatprep.subr.mxu0 0.0
  %463 = vmatpush2.msra.mxu0 0.0
  %464 = vmatprep.subr.mxu0 0.0
  %465 = vmatpush2.msra.mxu0 0.0
  %466 = vmatprep.subr.mxu0 0.0
  %467 = vmatpush2.msra.mxu0 0.0
  %468 = vmatprep.subr.mxu0 0.0
  %469 = vmatpush2.msra.mxu0 0.0
  %470 = vmatprep.subr.mxu0 0.0
  %471 = vmatpush2.msra.mxu0 0.0
  %472 = vmatprep.subr.mxu0 0.0
  %473 = vmatpush2.msra.mxu0 0.0
  %474 = vmatprep.subr.mxu0 0.0
  %475 = vmatpush2.msra.mxu0 0.0
  %476 = vmatprep.subr.mxu0 0.0
  %477 = vmatpush2.msra.mxu0 0.0
  %478 = vmatprep.subr.mxu0 0.0
  %479 = vmatpush2.msra.mxu0 0.0
  %480 = vmatprep.subr.mxu0 0.0
  %481 = vmatpush2.msra.mxu0 0.0
  %482 = vmatprep.mubr.f32.mxu0 0.0
  %483 = vmatmul.mubr.f32.gmra.mxu0 %v411
  %v484 = vpop.f32.mrf.mxu0
  %v485 = vadd.f32 0.0, %v484
  %v486 = vpop.f32.mrf.mxu0
  %v487 = vadd.f32 0.0, %v486
  %488 = vdwg.mxu0
  %v489 = vadd.f32 %v415, %v485
  %v490 = vxor.u32 %v489, 2147483648
  %v491 = vmul.f32 %v490, 1.442695
  %v492 = vpow.pop %v491
  %v493 = vadd.f32 %v492, 1.0
  %v494 = vrcp.pop %v493
  %v495 = vmul.f32 1.0, %v494
  %v496 = vadd.f32 %v416, %v487
  %v497 = vxor.u32 %v496, 2147483648
  %v498 = vmul.f32 %v497, 1.442695
  %v499 = vpow.pop %v498
  %v500 = vadd.f32 %v499, 1.0
  %v501 = vrcp.pop %v500
  %v502 = vmul.f32 1.0, %v501
  %503 = vmatprep.subr.mxu0 0.0
  %504 = vmatpush1.msra.mxu0 %v73
  %505 = vmatprep.subr.mxu0 0.0
  %506 = vmatpush1.msra.mxu0 %v72
  %507 = vmatprep.subr.mxu0 0.0
  %508 = vmatpush1.msra.mxu0 %v71
  %509 = vmatprep.subr.mxu0 0.0
  %510 = vmatpush1.msra.mxu0 %v70
  %511 = vmatprep.subr.mxu0 0.0
  %512 = vmatpush1.msra.mxu0 %v69
  %513 = vmatprep.subr.mxu0 0.0
  %514 = vmatpush1.msra.mxu0 %v68
  %515 = vmatprep.subr.mxu0 0.0
  %516 = vmatpush1.msra.mxu0 %v67
  %517 = vmatprep.subr.mxu0 0.0
  %518 = vmatpush1.msra.mxu0 %v66
  %519 = vmatprep.subr.mxu0 0.0
  %520 = vmatpush1.msra.mxu0 %v65
  %521 = vmatprep.subr.mxu0 0.0
  %522 = vmatpush1.msra.mxu0 %v64
  %523 = vmatprep.subr.mxu0 0.0
  %524 = vmatpush1.msra.mxu0 %v63
  %525 = vmatprep.subr.mxu0 0.0
  %526 = vmatpush1.msra.mxu0 %v62
  %527 = vmatprep.subr.mxu0 0.0
  %528 = vmatpush1.msra.mxu0 %v61
  %529 = vmatprep.subr.mxu0 0.0
  %530 = vmatpush1.msra.mxu0 %v60
  %531 = vmatprep.subr.mxu0 0.0
  %532 = vmatpush1.msra.mxu0 %v59
  %533 = vmatprep.subr.mxu0 0.0
  %534 = vmatpush1.msra.mxu0 %v58
  %535 = vmatprep.subr.mxu0 0.0
  %536 = vmatpush2.msra.mxu0 0.0
  %537 = vmatprep.subr.mxu0 0.0
  %538 = vmatpush2.msra.mxu0 0.0
  %539 = vmatprep.subr.mxu0 0.0
  %540 = vmatpush2.msra.mxu0 0.0
  %541 = vmatprep.subr.mxu0 0.0
  %542 = vmatpush2.msra.mxu0 0.0
  %543 = vmatprep.subr.mxu0 0.0
  %544 = vmatpush2.msra.mxu0 0.0
  %545 = vmatprep.subr.mxu0 0.0
  %546 = vmatpush2.msra.mxu0 0.0
  %547 = vmatprep.subr.mxu0 0.0
  %548 = vmatpush2.msra.mxu0 0.0
  %549 = vmatprep.subr.mxu0 0.0
  %550 = vmatpush2.msra.mxu0 0.0
  %551 = vmatprep.subr.mxu0 0.0
  %552 = vmatpush2.msra.mxu0 0.0
  %553 = vmatprep.subr.mxu0 0.0
  %554 = vmatpush2.msra.mxu0 0.0
  %555 = vmatprep.subr.mxu0 0.0
  %556 = vmatpush2.msra.mxu0 0.0
  %557 = vmatprep.subr.mxu0 0.0
  %558 = vmatpush2.msra.mxu0 0.0
  %559 = vmatprep.subr.mxu0 0.0
  %560 = vmatpush2.msra.mxu0 0.0
  %561 = vmatprep.subr.mxu0 0.0
  %562 = vmatpush2.msra.mxu0 0.0
  %563 = vmatprep.subr.mxu0 0.0
  %564 = vmatpush2.msra.mxu0 0.0
  %565 = vmatprep.subr.mxu0 0.0
  %566 = vmatpush2.msra.mxu0 0.0
  %567 = vmatprep.mubr.f32.mxu0 0.0
  %568 = vmatmul.mubr.f32.gmra.mxu0 %v411
  %v569 = vpop.f32.mrf.mxu0
  %v570 = vadd.f32 %v79, %v569
  %v571 = vpop.f32.mrf.mxu0
  %572 = vdwg.mxu0
  %v573 = vmul.f32 %v495, %v570
  %v574 = vadd.f32 %v417, %v573
  %v575 = vtanh.pop %v574
  %v576 = vsub.f32 %v411, %v575
  %v577 = vmul.f32 %v502, %v576
  %v578 = vadd.f32 %v575, %v577
  %s579 = scalar_lea.vmem %s5, 16
  %580 = vst [vmem:[%s579] sm:$0xff] %v578
  %s581 = scalar_lea.vmem %s0, 72
  %v582 = vld [vmem:[%s581] sm:$0xff]
  %v583 = vld [vmem:[%s581 + $0x8] sm:$0xff]
  %v584 = vld [vmem:[%s581 + $0x10] sm:$0xff]
  %585 = vmatprep.subr.mxu0 %v57
  %586 = vmatpush1.msra.mxu0 %v56
  %587 = vmatprep.subr.mxu0 %v55
  %588 = vmatpush1.msra.mxu0 %v54
  %589 = vmatprep.subr.mxu0 %v53
  %590 = vmatpush1.msra.mxu0 %v52
  %591 = vmatprep.subr.mxu0 %v51
  %592 = vmatpush1.msra.mxu0 %v50
  %593 = vmatprep.subr.mxu0 %v49
  %594 = vmatpush1.msra.mxu0 %v48
  %595 = vmatprep.subr.mxu0 %v47
  %596 = vmatpush1.msra.mxu0 %v46
  %597 = vmatprep.subr.mxu0 %v45
  %598 = vmatpush1.msra.mxu0 %v44
  %599 = vmatprep.subr.mxu0 %v43
  %600 = vmatpush1.msra.mxu0 %v42
  %601 = vmatprep.subr.mxu0 %v41
  %602 = vmatpush1.msra.mxu0 %v40
  %603 = vmatprep.subr.mxu0 %v39
  %604 = vmatpush1.msra.mxu0 %v38
  %605 = vmatprep.subr.mxu0 %v37
  %606 = vmatpush1.msra.mxu0 %v36
  %607 = vmatprep.subr.mxu0 %v35
  %608 = vmatpush1.msra.mxu0 %v34
  %609 = vmatprep.subr.mxu0 %v33
  %610 = vmatpush1.msra.mxu0 %v32
  %611 = vmatprep.subr.mxu0 %v31
  %612 = vmatpush1.msra.mxu0 %v30
  %613 = vmatprep.subr.mxu0 %v29
  %614 = vmatpush1.msra.mxu0 %v28
  %615 = vmatprep.subr.mxu0 %v27
  %616 = vmatpush1.msra.mxu0 %v26
  %617 = vmatprep.subr.mxu0 0.0
  %618 = vmatpush2.msra.mxu0 0.0
  %619 = vmatprep.subr.mxu0 0.0
  %620 = vmatpush2.msra.mxu0 0.0
  %621 = vmatprep.subr.mxu0 0.0
  %622 = vmatpush2.msra.mxu0 0.0
  %623 = vmatprep.subr.mxu0 0.0
  %624 = vmatpush2.msra.mxu0 0.0
  %625 = vmatprep.subr.mxu0 0.0
  %626 = vmatpush2.msra.mxu0 0.0
  %627 = vmatprep.subr.mxu0 0.0
  %628 = vmatpush2.msra.mxu0 0.0
  %629 = vmatprep.subr.mxu0 0.0
  %630 = vmatpush2.msra.mxu0 0.0
  %631 = vmatprep.subr.mxu0 0.0
  %632 = vmatpush2.msra.mxu0 0.0
  %633 = vmatprep.subr.mxu0 0.0
  %634 = vmatpush2.msra.mxu0 0.0
  %635 = vmatprep.subr.mxu0 0.0
  %636 = vmatpush2.msra.mxu0 0.0
  %637 = vmatprep.subr.mxu0 0.0
  %638 = vmatpush2.msra.mxu0 0.0
  %639 = vmatprep.subr.mxu0 0.0
  %640 = vmatpush2.msra.mxu0 0.0
  %641 = vmatprep.subr.mxu0 0.0
  %642 = vmatpush2.msra.mxu0 0.0
  %643 = vmatprep.subr.mxu0 0.0
  %644 = vmatpush2.msra.mxu0 0.0
  %645 = vmatprep.subr.mxu0 0.0
  %646 = vmatpush2.msra.mxu0 0.0
  %647 = vmatprep.subr.mxu0 0.0
  %648 = vmatpush2.msra.mxu0 0.0
  %649 = vmatprep.mubr.f32.mxu0 0.0
  %650 = vmatmul.mubr.f32.gmra.mxu0 %v578
  %v651 = vpop.f32.mrf.mxu0
  %v652 = vadd.f32 0.0, %v651
  %v653 = vpop.f32.mrf.mxu0
  %v654 = vadd.f32 0.0, %v653
  %655 = vdwg.mxu0
  %v656 = vadd.f32 %v582, %v652
  %v657 = vxor.u32 %v656, 2147483648
  %v658 = vmul.f32 %v657, 1.442695
  %v659 = vpow.pop %v658
  %v660 = vadd.f32 %v659, 1.0
  %v661 = vrcp.pop %v660
  %v662 = vmul.f32 1.0, %v661
  %v663 = vadd.f32 %v583, %v654
  %v664 = vxor.u32 %v663, 2147483648
  %v665 = vmul.f32 %v664, 1.442695
  %v666 = vpow.pop %v665
  %v667 = vadd.f32 %v666, 1.0
  %v668 = vrcp.pop %v667
  %v669 = vmul.f32 1.0, %v668
  %670 = vmatprep.subr.mxu0 0.0
  %671 = vmatpush1.msra.mxu0 %v73
  %672 = vmatprep.subr.mxu0 0.0
  %673 = vmatpush1.msra.mxu0 %v72
  %674 = vmatprep.subr.mxu0 0.0
  %675 = vmatpush1.msra.mxu0 %v71
  %676 = vmatprep.subr.mxu0 0.0
  %677 = vmatpush1.msra.mxu0 %v70
  %678 = vmatprep.subr.mxu0 0.0
  %679 = vmatpush1.msra.mxu0 %v69
  %680 = vmatprep.subr.mxu0 0.0
  %681 = vmatpush1.msra.mxu0 %v68
  %682 = vmatprep.subr.mxu0 0.0
  %683 = vmatpush1.msra.mxu0 %v67
  %684 = vmatprep.subr.mxu0 0.0
  %685 = vmatpush1.msra.mxu0 %v66
  %686 = vmatprep.subr.mxu0 0.0
  %687 = vmatpush1.msra.mxu0 %v65
  %688 = vmatprep.subr.mxu0 0.0
  %689 = vmatpush1.msra.mxu0 %v64
  %690 = vmatprep.subr.mxu0 0.0
  %691 = vmatpush1.msra.mxu0 %v63
  %692 = vmatprep.subr.mxu0 0.0
  %693 = vmatpush1.msra.mxu0 %v62
  %694 = vmatprep.subr.mxu0 0.0
  %695 = vmatpush1.msra.mxu0 %v61
  %696 = vmatprep.subr.mxu0 0.0
  %697 = vmatpush1.msra.mxu0 %v60
  %698 = vmatprep.subr.mxu0 0.0
  %699 = vmatpush1.msra.mxu0 %v59
  %700 = vmatprep.subr.mxu0 0.0
  %701 = vmatpush1.msra.mxu0 %v58
  %702 = vmatprep.subr.mxu0 0.0
  %703 = vmatpush2.msra.mxu0 0.0
  %704 = vmatprep.subr.mxu0 0.0
  %705 = vmatpush2.msra.mxu0 0.0
  %706 = vmatprep.subr.mxu0 0.0
  %707 = vmatpush2.msra.mxu0 0.0
  %708 = vmatprep.subr.mxu0 0.0
  %709 = vmatpush2.msra.mxu0 0.0
  %710 = vmatprep.subr.mxu0 0.0
  %711 = vmatpush2.msra.mxu0 0.0
  %712 = vmatprep.subr.mxu0 0.0
  %713 = vmatpush2.msra.mxu0 0.0
  %714 = vmatprep.subr.mxu0 0.0
  %715 = vmatpush2.msra.mxu0 0.0
  %716 = vmatprep.subr.mxu0 0.0
  %717 = vmatpush2.msra.mxu0 0.0
  %718 = vmatprep.subr.mxu0 0.0
  %719 = vmatpush2.msra.mxu0 0.0
  %720 = vmatprep.subr.mxu0 0.0
  %721 = vmatpush2.msra.mxu0 0.0
  %722 = vmatprep.subr.mxu0 0.0
  %723 = vmatpush2.msra.mxu0 0.0
  %724 = vmatprep.subr.mxu0 0.0
  %725 = vmatpush2.msra.mxu0 0.0
  %726 = vmatprep.subr.mxu0 0.0
  %727 = vmatpush2.msra.mxu0 0.0
  %728 = vmatprep.subr.mxu0 0.0
  %729 = vmatpush2.msra.mxu0 0.0
  %730 = vmatprep.subr.mxu0 0.0
  %731 = vmatpush2.msra.mxu0 0.0
  %732 = vmatprep.subr.mxu0 0.0
  %733 = vmatpush2.msra.mxu0 0.0
  %734 = vmatprep.mubr.f32.mxu0 0.0
  %735 = vmatmul.mubr.f32.gmra.mxu0 %v578
  %v736 = vpop.f32.mrf.mxu0
  %v737 = vadd.f32 %v79, %v736
  %v738 = vpop.f32.mrf.mxu0
  %739 = vdwg.mxu0
  %v740 = vmul.f32 %v662, %v737
  %v741 = vadd.f32 %v584, %v740
  %v742 = vtanh.pop %v741
  %v743 = vsub.f32 %v578, %v742
  %v744 = vmul.f32 %v669, %v743
  %v745 = vadd.f32 %v742, %v744
  %s746 = scalar_lea.vmem %s5, 24
  %747 = vst [vmem:[%s746] sm:$0xff] %v745
  %s748 = scalar_lea.vmem %s0, 96
  %v749 = vld [vmem:[%s748] sm:$0xff]
  %v750 = vld [vmem:[%s748 + $0x8] sm:$0xff]
  %v751 = vld [vmem:[%s748 + $0x10] sm:$0xff]
  %752 = vmatprep.subr.mxu0 %v57
  %753 = vmatpush1.msra.mxu0 %v56
  %754 = vmatprep.subr.mxu0 %v55
  %755 = vmatpush1.msra.mxu0 %v54
  %756 = vmatprep.subr.mxu0 %v53
  %757 = vmatpush1.msra.mxu0 %v52
  %758 = vmatprep.subr.mxu0 %v51
  %759 = vmatpush1.msra.mxu0 %v50
  %760 = vmatprep.subr.mxu0 %v49
  %761 = vmatpush1.msra.mxu0 %v48
  %762 = vmatprep.subr.mxu0 %v47
  %763 = vmatpush1.msra.mxu0 %v46
  %764 = vmatprep.subr.mxu0 %v45
  %765 = vmatpush1.msra.mxu0 %v44
  %766 = vmatprep.subr.mxu0 %v43
  %767 = vmatpush1.msra.mxu0 %v42
  %768 = vmatprep.subr.mxu0 %v41
  %769 = vmatpush1.msra.mxu0 %v40
  %770 = vmatprep.subr.mxu0 %v39
  %771 = vmatpush1.msra.mxu0 %v38
  %772 = vmatprep.subr.mxu0 %v37
  %773 = vmatpush1.msra.mxu0 %v36
  %774 = vmatprep.subr.mxu0 %v35
  %775 = vmatpush1.msra.mxu0 %v34
  %776 = vmatprep.subr.mxu0 %v33
  %777 = vmatpush1.msra.mxu0 %v32
  %778 = vmatprep.subr.mxu0 %v31
  %779 = vmatpush1.msra.mxu0 %v30
  %780 = vmatprep.subr.mxu0 %v29
  %781 = vmatpush1.msra.mxu0 %v28
  %782 = vmatprep.subr.mxu0 %v27
  %783 = vmatpush1.msra.mxu0 %v26
  %784 = vmatprep.subr.mxu0 0.0
  %785 = vmatpush2.msra.mxu0 0.0
  %786 = vmatprep.subr.mxu0 0.0
  %787 = vmatpush2.msra.mxu0 0.0
  %788 = vmatprep.subr.mxu0 0.0
  %789 = vmatpush2.msra.mxu0 0.0
  %790 = vmatprep.subr.mxu0 0.0
  %791 = vmatpush2.msra.mxu0 0.0
  %792 = vmatprep.subr.mxu0 0.0
  %793 = vmatpush2.msra.mxu0 0.0
  %794 = vmatprep.subr.mxu0 0.0
  %795 = vmatpush2.msra.mxu0 0.0
  %796 = vmatprep.subr.mxu0 0.0
  %797 = vmatpush2.msra.mxu0 0.0
  %798 = vmatprep.subr.mxu0 0.0
  %799 = vmatpush2.msra.mxu0 0.0
  %800 = vmatprep.subr.mxu0 0.0
  %801 = vmatpush2.msra.mxu0 0.0
  %802 = vmatprep.subr.mxu0 0.0
  %803 = vmatpush2.msra.mxu0 0.0
  %804 = vmatprep.subr.mxu0 0.0
  %805 = vmatpush2.msra.mxu0 0.0
  %806 = vmatprep.subr.mxu0 0.0
  %807 = vmatpush2.msra.mxu0 0.0
  %808 = vmatprep.subr.mxu0 0.0
  %809 = vmatpush2.msra.mxu0 0.0
  %810 = vmatprep.subr.mxu0 0.0
  %811 = vmatpush2.msra.mxu0 0.0
  %812 = vmatprep.subr.mxu0 0.0
  %813 = vmatpush2.msra.mxu0 0.0
  %814 = vmatprep.subr.mxu0 0.0
  %815 = vmatpush2.msra.mxu0 0.0
  %816 = vmatprep.mubr.f32.mxu0 0.0
  %817 = vmatmul.mubr.f32.gmra.mxu0 %v745
  %v818 = vpop.f32.mrf.mxu0
  %v819 = vadd.f32 0.0, %v818
  %v820 = vpop.f32.mrf.mxu0
  %v821 = vadd.f32 0.0, %v820
  %822 = vdwg.mxu0
  %v823 = vadd.f32 %v749, %v819
  %v824 = vxor.u32 %v823, 2147483648
  %v825 = vmul.f32 %v824, 1.442695
  %v826 = vpow.pop %v825
  %v827 = vadd.f32 %v826, 1.0
  %v828 = vrcp.pop %v827
  %v829 = vmul.f32 1.0, %v828
  %v830 = vadd.f32 %v750, %v821
  %v831 = vxor.u32 %v830, 2147483648
  %v832 = vmul.f32 %v831, 1.442695
  %v833 = vpow.pop %v832
  %v834 = vadd.f32 %v833, 1.0
  %v835 = vrcp.pop %v834
  %v836 = vmul.f32 1.0, %v835
  %837 = vmatprep.subr.mxu0 0.0
  %838 = vmatpush1.msra.mxu0 %v73
  %839 = vmatprep.subr.mxu0 0.0
  %840 = vmatpush1.msra.mxu0 %v72
  %841 = vmatprep.subr.mxu0 0.0
  %842 = vmatpush1.msra.mxu0 %v71
  %843 = vmatprep.subr.mxu0 0.0
  %844 = vmatpush1.msra.mxu0 %v70
  %845 = vmatprep.subr.mxu0 0.0
  %846 = vmatpush1.msra.mxu0 %v69
  %847 = vmatprep.subr.mxu0 0.0
  %848 = vmatpush1.msra.mxu0 %v68
  %849 = vmatprep.subr.mxu0 0.0
  %850 = vmatpush1.msra.mxu0 %v67
  %851 = vmatprep.subr.mxu0 0.0
  %852 = vmatpush1.msra.mxu0 %v66
  %853 = vmatprep.subr.mxu0 0.0
  %854 = vmatpush1.msra.mxu0 %v65
  %855 = vmatprep.subr.mxu0 0.0
  %856 = vmatpush1.msra.mxu0 %v64
  %857 = vmatprep.subr.mxu0 0.0
  %858 = vmatpush1.msra.mxu0 %v63
  %859 = vmatprep.subr.mxu0 0.0
  %860 = vmatpush1.msra.mxu0 %v62
  %861 = vmatprep.subr.mxu0 0.0
  %862 = vmatpush1.msra.mxu0 %v61
  %863 = vmatprep.subr.mxu0 0.0
  %864 = vmatpush1.msra.mxu0 %v60
  %865 = vmatprep.subr.mxu0 0.0
  %866 = vmatpush1.msra.mxu0 %v59
  %867 = vmatprep.subr.mxu0 0.0
  %868 = vmatpush1.msra.mxu0 %v58
  %869 = vmatprep.subr.mxu0 0.0
  %870 = vmatpush2.msra.mxu0 0.0
  %871 = vmatprep.subr.mxu0 0.0
  %872 = vmatpush2.msra.mxu0 0.0
  %873 = vmatprep.subr.mxu0 0.0
  %874 = vmatpush2.msra.mxu0 0.0
  %875 = vmatprep.subr.mxu0 0.0
  %876 = vmatpush2.msra.mxu0 0.0
  %877 = vmatprep.subr.mxu0 0.0
  %878 = vmatpush2.msra.mxu0 0.0
  %879 = vmatprep.subr.mxu0 0.0
  %880 = vmatpush2.msra.mxu0 0.0
  %881 = vmatprep.subr.mxu0 0.0
  %882 = vmatpush2.msra.mxu0 0.0
  %883 = vmatprep.subr.mxu0 0.0
  %884 = vmatpush2.msra.mxu0 0.0
  %885 = vmatprep.subr.mxu0 0.0
  %886 = vmatpush2.msra.mxu0 0.0
  %887 = vmatprep.subr.mxu0 0.0
  %888 = vmatpush2.msra.mxu0 0.0
  %889 = vmatprep.subr.mxu0 0.0
  %890 = vmatpush2.msra.mxu0 0.0
  %891 = vmatprep.subr.mxu0 0.0
  %892 = vmatpush2.msra.mxu0 0.0
  %893 = vmatprep.subr.mxu0 0.0
  %894 = vmatpush2.msra.mxu0 0.0
  %895 = vmatprep.subr.mxu0 0.0
  %896 = vmatpush2.msra.mxu0 0.0
  %897 = vmatprep.subr.mxu0 0.0
  %898 = vmatpush2.msra.mxu0 0.0
  %899 = vmatprep.subr.mxu0 0.0
  %900 = vmatpush2.msra.mxu0 0.0
  %901 = vmatprep.mubr.f32.mxu0 0.0
  %902 = vmatmul.mubr.f32.gmra.mxu0 %v745
  %v903 = vpop.f32.mrf.mxu0
  %v904 = vadd.f32 %v79, %v903
  %v905 = vpop.f32.mrf.mxu0
  %906 = vdwg.mxu0
  %v907 = vmul.f32 %v829, %v904
  %v908 = vadd.f32 %v751, %v907
  %v909 = vtanh.pop %v908
  %v910 = vsub.f32 %v745, %v909
  %v911 = vmul.f32 %v836, %v910
  %v912 = vadd.f32 %v909, %v911
  %s913 = scalar_lea.vmem %s5, 32
  %914 = vst [vmem:[%s913] sm:$0xff] %v912
  %s915 = scalar_lea.vmem %s0, 120
  %v916 = vld [vmem:[%s915] sm:$0xff]
  %v917 = vld [vmem:[%s915 + $0x8] sm:$0xff]
  %v918 = vld [vmem:[%s915 + $0x10] sm:$0xff]
  %919 = vmatprep.subr.mxu0 %v57
  %920 = vmatpush1.msra.mxu0 %v56
  %921 = vmatprep.subr.mxu0 %v55
  %922 = vmatpush1.msra.mxu0 %v54
  %923 = vmatprep.subr.mxu0 %v53
  %924 = vmatpush1.msra.mxu0 %v52
  %925 = vmatprep.subr.mxu0 %v51
  %926 = vmatpush1.msra.mxu0 %v50
  %927 = vmatprep.subr.mxu0 %v49
  %928 = vmatpush1.msra.mxu0 %v48
  %929 = vmatprep.subr.mxu0 %v47
  %930 = vmatpush1.msra.mxu0 %v46
  %931 = vmatprep.subr.mxu0 %v45
  %932 = vmatpush1.msra.mxu0 %v44
  %933 = vmatprep.subr.mxu0 %v43
  %934 = vmatpush1.msra.mxu0 %v42
  %935 = vmatprep.subr.mxu0 %v41
  %936 = vmatpush1.msra.mxu0 %v40
  %937 = vmatprep.subr.mxu0 %v39
  %938 = vmatpush1.msra.mxu0 %v38
  %939 = vmatprep.subr.mxu0 %v37
  %940 = vmatpush1.msra.mxu0 %v36
  %941 = vmatprep.subr.mxu0 %v35
  %942 = vmatpush1.msra.mxu0 %v34
  %943 = vmatprep.subr.mxu0 %v33
  %944 = vmatpush1.msra.mxu0 %v32
  %945 = vmatprep.subr.mxu0 %v31
  %946 = vmatpush1.msra.mxu0 %v30
  %947 = vmatprep.subr.mxu0 %v29
  %948 = vmatpush1.msra.mxu0 %v28
  %949 = vmatprep.subr.mxu0 %v27
  %950 = vmatpush1.msra.mxu0 %v26
  %951 = vmatprep.subr.mxu0 0.0
  %952 = vmatpush2.msra.mxu0 0.0
  %953 = vmatprep.subr.mxu0 0.0
  %954 = vmatpush2.msra.mxu0 0.0
  %955 = vmatprep.subr.mxu0 0.0
  %956 = vmatpush2.msra.mxu0 0.0
  %957 = vmatprep.subr.mxu0 0.0
  %958 = vmatpush2.msra.mxu0 0.0
  %959 = vmatprep.subr.mxu0 0.0
  %960 = vmatpush2.msra.mxu0 0.0
  %961 = vmatprep.subr.mxu0 0.0
  %962 = vmatpush2.msra.mxu0 0.0
  %963 = vmatprep.subr.mxu0 0.0
  %964 = vmatpush2.msra.mxu0 0.0
  %965 = vmatprep.subr.mxu0 0.0
  %966 = vmatpush2.msra.mxu0 0.0
  %967 = vmatprep.subr.mxu0 0.0
  %968 = vmatpush2.msra.mxu0 0.0
  %969 = vmatprep.subr.mxu0 0.0
  %970 = vmatpush2.msra.mxu0 0.0
  %971 = vmatprep.subr.mxu0 0.0
  %972 = vmatpush2.msra.mxu0 0.0
  %973 = vmatprep.subr.mxu0 0.0
  %974 = vmatpush2.msra.mxu0 0.0
  %975 = vmatprep.subr.mxu0 0.0
  %976 = vmatpush2.msra.mxu0 0.0
  %977 = vmatprep.subr.mxu0 0.0
  %978 = vmatpush2.msra.mxu0 0.0
  %979 = vmatprep.subr.mxu0 0.0
  %980 = vmatpush2.msra.mxu0 0.0
  %981 = vmatprep.subr.mxu0 0.0
  %982 = vmatpush2.msra.mxu0 0.0
  %983 = vmatprep.mubr.f32.mxu0 0.0
  %984 = vmatmul.mubr.f32.gmra.mxu0 %v912
  %v985 = vpop.f32.mrf.mxu0
  %v986 = vadd.f32 0.0, %v985
  %v987 = vpop.f32.mrf.mxu0
  %v988 = vadd.f32 0.0, %v987
  %989 = vdwg.mxu0
  %v990 = vadd.f32 %v916, %v986
  %v991 = vxor.u32 %v990, 2147483648
  %v992 = vmul.f32 %v991, 1.442695
  %v993 = vpow.pop %v992
  %v994 = vadd.f32 %v993, 1.0
  %v995 = vrcp.pop %v994
  %v996 = vmul.f32 1.0, %v995
  %v997 = vadd.f32 %v917, %v988
  %v998 = vxor.u32 %v997, 2147483648
  %v999 = vmul.f32 %v998, 1.442695
  %v1000 = vpow.pop %v999
  %v1001 = vadd.f32 %v1000, 1.0
  %v1002 = vrcp.pop %v1001
  %v1003 = vmul.f32 1.0, %v1002
  %1004 = vmatprep.subr.mxu0 0.0
  %1005 = vmatpush1.msra.mxu0 %v73
  %1006 = vmatprep.subr.mxu0 0.0
  %1007 = vmatpush1.msra.mxu0 %v72
  %1008 = vmatprep.subr.mxu0 0.0
  %1009 = vmatpush1.msra.mxu0 %v71
  %1010 = vmatprep.subr.mxu0 0.0
  %1011 = vmatpush1.msra.mxu0 %v70
  %1012 = vmatprep.subr.mxu0 0.0
  %1013 = vmatpush1.msra.mxu0 %v69
  %1014 = vmatprep.subr.mxu0 0.0
  %1015 = vmatpush1.msra.mxu0 %v68
  %1016 = vmatprep.subr.mxu0 0.0
  %1017 = vmatpush1.msra.mxu0 %v67
  %1018 = vmatprep.subr.mxu0 0.0
  %1019 = vmatpush1.msra.mxu0 %v66
  %1020 = vmatprep.subr.mxu0 0.0
  %1021 = vmatpush1.msra.mxu0 %v65
  %1022 = vmatprep.subr.mxu0 0.0
  %1023 = vmatpush1.msra.mxu0 %v64
  %1024 = vmatprep.subr.mxu0 0.0
  %1025 = vmatpush1.msra.mxu0 %v63
  %1026 = vmatprep.subr.mxu0 0.0
  %1027 = vmatpush1.msra.mxu0 %v62
  %1028 = vmatprep.subr.mxu0 0.0
  %1029 = vmatpush1.msra.mxu0 %v61
  %1030 = vmatprep.subr.mxu0 0.0
  %1031 = vmatpush1.msra.mxu0 %v60
  %1032 = vmatprep.subr.mxu0 0.0
  %1033 = vmatpush1.msra.mxu0 %v59
  %1034 = vmatprep.subr.mxu0 0.0
  %1035 = vmatpush1.msra.mxu0 %v58
  %1036 = vmatprep.subr.mxu0 0.0
  %1037 = vmatpush2.msra.mxu0 0.0
  %1038 = vmatprep.subr.mxu0 0.0
  %1039 = vmatpush2.msra.mxu0 0.0
  %1040 = vmatprep.subr.mxu0 0.0
  %1041 = vmatpush2.msra.mxu0 0.0
  %1042 = vmatprep.subr.mxu0 0.0
  %1043 = vmatpush2.msra.mxu0 0.0
  %1044 = vmatprep.subr.mxu0 0.0
  %1045 = vmatpush2.msra.mxu0 0.0
  %1046 = vmatprep.subr.mxu0 0.0
  %1047 = vmatpush2.msra.mxu0 0.0
  %1048 = vmatprep.subr.mxu0 0.0
  %1049 = vmatpush2.msra.mxu0 0.0
  %1050 = vmatprep.subr.mxu0 0.0
  %1051 = vmatpush2.msra.mxu0 0.0
  %1052 = vmatprep.subr.mxu0 0.0
  %1053 = vmatpush2.msra.mxu0 0.0
  %1054 = vmatprep.subr.mxu0 0.0
  %1055 = vmatpush2.msra.mxu0 0.0
  %1056 = vmatprep.subr.mxu0 0.0
  %1057 = vmatpush2.msra.mxu0 0.0
  %1058 = vmatprep.subr.mxu0 0.0
  %1059 = vmatpush2.msra.mxu0 0.0
  %1060 = vmatprep.subr.mxu0 0.0
  %1061 = vmatpush2.msra.mxu0 0.0
  %1062 = vmatprep.subr.mxu0 0.0
  %1063 = vmatpush2.msra.mxu0 0.0
  %1064 = vmatprep.subr.mxu0 0.0
  %1065 = vmatpush2.msra.mxu0 0.0
  %1066 = vmatprep.subr.mxu0 0.0
  %1067 = vmatpush2.msra.mxu0 0.0
  %1068 = vmatprep.mubr.f32.mxu0 0.0
  %1069 = vmatmul.mubr.f32.gmra.mxu0 %v912
  %v1070 = vpop.f32.mrf.mxu0
  %v1071 = vadd.f32 %v79, %v1070
  %v1072 = vpop.f32.mrf.mxu0
  %1073 = vdwg.mxu0
  %v1074 = vmul.f32 %v996, %v1071
  %v1075 = vadd.f32 %v918, %v1074
  %v1076 = vtanh.pop %v1075
  %v1077 = vsub.f32 %v912, %v1076
  %v1078 = vmul.f32 %v1003, %v1077
  %v1079 = vadd.f32 %v1076, %v1078
  %s1080 = scalar_lea.vmem %s5, 40
  %1081 = vst [vmem:[%s1080] sm:$0xff] %v1079
  %s1082 = scalar_lea.vmem %s0, 144
  %v1083 = vld [vmem:[%s1082] sm:$0xff]
  %v1084 = vld [vmem:[%s1082 + $0x8] sm:$0xff]
  %v1085 = vld [vmem:[%s1082 + $0x10] sm:$0xff]
  %1086 = vmatprep.subr.mxu0 %v57
  %1087 = vmatpush1.msra.mxu0 %v56
  %1088 = vmatprep.subr.mxu0 %v55
  %1089 = vmatpush1.msra.mxu0 %v54
  %1090 = vmatprep.subr.mxu0 %v53
  %1091 = vmatpush1.msra.mxu0 %v52
  %1092 = vmatprep.subr.mxu0 %v51
  %1093 = vmatpush1.msra.mxu0 %v50
  %1094 = vmatprep.subr.mxu0 %v49
  %1095 = vmatpush1.msra.mxu0 %v48
  %1096 = vmatprep.subr.mxu0 %v47
  %1097 = vmatpush1.msra.mxu0 %v46
  %1098 = vmatprep.subr.mxu0 %v45
  %1099 = vmatpush1.msra.mxu0 %v44
  %1100 = vmatprep.subr.mxu0 %v43
  %1101 = vmatpush1.msra.mxu0 %v42
  %1102 = vmatprep.subr.mxu0 %v41
  %1103 = vmatpush1.msra.mxu0 %v40
  %1104 = vmatprep.subr.mxu0 %v39
  %1105 = vmatpush1.msra.mxu0 %v38
  %1106 = vmatprep.subr.mxu0 %v37
  %1107 = vmatpush1.msra.mxu0 %v36
  %1108 = vmatprep.subr.mxu0 %v35
  %1109 = vmatpush1.msra.mxu0 %v34
  %1110 = vmatprep.subr.mxu0 %v33
  %1111 = vmatpush1.msra.mxu0 %v32
  %1112 = vmatprep.subr.mxu0 %v31
  %1113 = vmatpush1.msra.mxu0 %v30
  %1114 = vmatprep.subr.mxu0 %v29
  %1115 = vmatpush1.msra.mxu0 %v28
  %1116 = vmatprep.subr.mxu0 %v27
  %1117 = vmatpush1.msra.mxu0 %v26
  %1118 = vmatprep.subr.mxu0 0.0
  %1119 = vmatpush2.msra.mxu0 0.0
  %1120 = vmatprep.subr.mxu0 0.0
  %1121 = vmatpush2.msra.mxu0 0.0
  %1122 = vmatprep.subr.mxu0 0.0
  %1123 = vmatpush2.msra.mxu0 0.0
  %1124 = vmatprep.subr.mxu0 0.0
  %1125 = vmatpush2.msra.mxu0 0.0
  %1126 = vmatprep.subr.mxu0 0.0
  %1127 = vmatpush2.msra.mxu0 0.0
  %1128 = vmatprep.subr.mxu0 0.0
  %1129 = vmatpush2.msra.mxu0 0.0
  %1130 = vmatprep.subr.mxu0 0.0
  %1131 = vmatpush2.msra.mxu0 0.0
  %1132 = vmatprep.subr.mxu0 0.0
  %1133 = vmatpush2.msra.mxu0 0.0
  %1134 = vmatprep.subr.mxu0 0.0
  %1135 = vmatpush2.msra.mxu0 0.0
  %1136 = vmatprep.subr.mxu0 0.0
  %1137 = vmatpush2.msra.mxu0 0.0
  %1138 = vmatprep.subr.mxu0 0.0
  %1139 = vmatpush2.msra.mxu0 0.0
  %1140 = vmatprep.subr.mxu0 0.0
  %1141 = vmatpush2.msra.mxu0 0.0
  %1142 = vmatprep.subr.mxu0 0.0
  %1143 = vmatpush2.msra.mxu0 0.0
  %1144 = vmatprep.subr.mxu0 0.0
  %1145 = vmatpush2.msra.mxu0 0.0
  %1146 = vmatprep.subr.mxu0 0.0
  %1147 = vmatpush2.msra.mxu0 0.0
  %1148 = vmatprep.subr.mxu0 0.0
  %1149 = vmatpush2.msra.mxu0 0.0
  %1150 = vmatprep.mubr.f32.mxu0 0.0
  %1151 = vmatmul.mubr.f32.gmra.mxu0 %v1079
  %v1152 = vpop.f32.mrf.mxu0
  %v1153 = vadd.f32 0.0, %v1152
  %v1154 = vpop.f32.mrf.mxu0
  %v1155 = vadd.f32 0.0, %v1154
  %1156 = vdwg.mxu0
  %v1157 = vadd.f32 %v1083, %v1153
  %v1158 = vxor.u32 %v1157, 2147483648
  %v1159 = vmul.f32 %v1158, 1.442695
  %v1160 = vpow.pop %v1159
  %v1161 = vadd.f32 %v1160, 1.0
  %v1162 = vrcp.pop %v1161
  %v1163 = vmul.f32 1.0, %v1162
  %v1164 = vadd.f32 %v1084, %v1155
  %v1165 = vxor.u32 %v1164, 2147483648
  %v1166 = vmul.f32 %v1165, 1.442695
  %v1167 = vpow.pop %v1166
  %v1168 = vadd.f32 %v1167, 1.0
  %v1169 = vrcp.pop %v1168
  %v1170 = vmul.f32 1.0, %v1169
  %1171 = vmatprep.subr.mxu0 0.0
  %1172 = vmatpush1.msra.mxu0 %v73
  %1173 = vmatprep.subr.mxu0 0.0
  %1174 = vmatpush1.msra.mxu0 %v72
  %1175 = vmatprep.subr.mxu0 0.0
  %1176 = vmatpush1.msra.mxu0 %v71
  %1177 = vmatprep.subr.mxu0 0.0
  %1178 = vmatpush1.msra.mxu0 %v70
  %1179 = vmatprep.subr.mxu0 0.0
  %1180 = vmatpush1.msra.mxu0 %v69
  %1181 = vmatprep.subr.mxu0 0.0
  %1182 = vmatpush1.msra.mxu0 %v68
  %1183 = vmatprep.subr.mxu0 0.0
  %1184 = vmatpush1.msra.mxu0 %v67
  %1185 = vmatprep.subr.mxu0 0.0
  %1186 = vmatpush1.msra.mxu0 %v66
  %1187 = vmatprep.subr.mxu0 0.0
  %1188 = vmatpush1.msra.mxu0 %v65
  %1189 = vmatprep.subr.mxu0 0.0
  %1190 = vmatpush1.msra.mxu0 %v64
  %1191 = vmatprep.subr.mxu0 0.0
  %1192 = vmatpush1.msra.mxu0 %v63
  %1193 = vmatprep.subr.mxu0 0.0
  %1194 = vmatpush1.msra.mxu0 %v62
  %1195 = vmatprep.subr.mxu0 0.0
  %1196 = vmatpush1.msra.mxu0 %v61
  %1197 = vmatprep.subr.mxu0 0.0
  %1198 = vmatpush1.msra.mxu0 %v60
  %1199 = vmatprep.subr.mxu0 0.0
  %1200 = vmatpush1.msra.mxu0 %v59
  %1201 = vmatprep.subr.mxu0 0.0
  %1202 = vmatpush1.msra.mxu0 %v58
  %1203 = vmatprep.subr.mxu0 0.0
  %1204 = vmatpush2.msra.mxu0 0.0
  %1205 = vmatprep.subr.mxu0 0.0
  %1206 = vmatpush2.msra.mxu0 0.0
  %1207 = vmatprep.subr.mxu0 0.0
  %1208 = vmatpush2.msra.mxu0 0.0
  %1209 = vmatprep.subr.mxu0 0.0
  %1210 = vmatpush2.msra.mxu0 0.0
  %1211 = vmatprep.subr.mxu0 0.0
  %1212 = vmatpush2.msra.mxu0 0.0
  %1213 = vmatprep.subr.mxu0 0.0
  %1214 = vmatpush2.msra.mxu0 0.0
  %1215 = vmatprep.subr.mxu0 0.0
  %1216 = vmatpush2.msra.mxu0 0.0
  %1217 = vmatprep.subr.mxu0 0.0
  %1218 = vmatpush2.msra.mxu0 0.0
  %1219 = vmatprep.subr.mxu0 0.0
  %1220 = vmatpush2.msra.mxu0 0.0
  %1221 = vmatprep.subr.mxu0 0.0
  %1222 = vmatpush2.msra.mxu0 0.0
  %1223 = vmatprep.subr.mxu0 0.0
  %1224 = vmatpush2.msra.mxu0 0.0
  %1225 = vmatprep.subr.mxu0 0.0
  %1226 = vmatpush2.msra.mxu0 0.0
  %1227 = vmatprep.subr.mxu0 0.0
  %1228 = vmatpush2.msra.mxu0 0.0
  %1229 = vmatprep.subr.mxu0 0.0
  %1230 = vmatpush2.msra.mxu0 0.0
  %1231 = vmatprep.subr.mxu0 0.0
  %1232 = vmatpush2.msra.mxu0 0.0
  %1233 = vmatprep.subr.mxu0 0.0
  %1234 = vmatpush2.msra.mxu0 0.0
  %1235 = vmatprep.mubr.f32.mxu0 0.0
  %1236 = vmatmul.mubr.f32.gmra.mxu0 %v1079
  %v1237 = vpop.f32.mrf.mxu0
  %v1238 = vadd.f32 %v79, %v1237
  %v1239 = vpop.f32.mrf.mxu0
  %1240 = vdwg.mxu0
  %v1241 = vmul.f32 %v1163, %v1238
  %v1242 = vadd.f32 %v1085, %v1241
  %v1243 = vtanh.pop %v1242
  %v1244 = vsub.f32 %v1079, %v1243
  %v1245 = vmul.f32 %v1170, %v1244
  %v1246 = vadd.f32 %v1243, %v1245
  %s1247 = scalar_lea.vmem %s5, 48
  %1248 = vst [vmem:[%s1247] sm:$0xff] %v1246
  %s1249 = scalar_lea.vmem %s0, 168
  %v1250 = vld [vmem:[%s1249] sm:$0xff]
  %v1251 = vld [vmem:[%s1249 + $0x8] sm:$0xff]
  %v1252 = vld [vmem:[%s1249 + $0x10] sm:$0xff]
  %1253 = vmatprep.subr.mxu0 %v57
  %1254 = vmatpush1.msra.mxu0 %v56
  %1255 = vmatprep.subr.mxu0 %v55
  %1256 = vmatpush1.msra.mxu0 %v54
  %1257 = vmatprep.subr.mxu0 %v53
  %1258 = vmatpush1.msra.mxu0 %v52
  %1259 = vmatprep.subr.mxu0 %v51
  %1260 = vmatpush1.msra.mxu0 %v50
  %1261 = vmatprep.subr.mxu0 %v49
  %1262 = vmatpush1.msra.mxu0 %v48
  %1263 = vmatprep.subr.mxu0 %v47
  %1264 = vmatpush1.msra.mxu0 %v46
  %1265 = vmatprep.subr.mxu0 %v45
  %1266 = vmatpush1.msra.mxu0 %v44
  %1267 = vmatprep.subr.mxu0 %v43
  %1268 = vmatpush1.msra.mxu0 %v42
  %1269 = vmatprep.subr.mxu0 %v41
  %1270 = vmatpush1.msra.mxu0 %v40
  %1271 = vmatprep.subr.mxu0 %v39
  %1272 = vmatpush1.msra.mxu0 %v38
  %1273 = vmatprep.subr.mxu0 %v37
  %1274 = vmatpush1.msra.mxu0 %v36
  %1275 = vmatprep.subr.mxu0 %v35
  %1276 = vmatpush1.msra.mxu0 %v34
  %1277 = vmatprep.subr.mxu0 %v33
  %1278 = vmatpush1.msra.mxu0 %v32
  %1279 = vmatprep.subr.mxu0 %v31
  %1280 = vmatpush1.msra.mxu0 %v30
  %1281 = vmatprep.subr.mxu0 %v29
  %1282 = vmatpush1.msra.mxu0 %v28
  %1283 = vmatprep.subr.mxu0 %v27
  %1284 = vmatpush1.msra.mxu0 %v26
  %1285 = vmatprep.subr.mxu0 0.0
  %1286 = vmatpush2.msra.mxu0 0.0
  %1287 = vmatprep.subr.mxu0 0.0
  %1288 = vmatpush2.msra.mxu0 0.0
  %1289 = vmatprep.subr.mxu0 0.0
  %1290 = vmatpush2.msra.mxu0 0.0
  %1291 = vmatprep.subr.mxu0 0.0
  %1292 = vmatpush2.msra.mxu0 0.0
  %1293 = vmatprep.subr.mxu0 0.0
  %1294 = vmatpush2.msra.mxu0 0.0
  %1295 = vmatprep.subr.mxu0 0.0
  %1296 = vmatpush2.msra.mxu0 0.0
  %1297 = vmatprep.subr.mxu0 0.0
  %1298 = vmatpush2.msra.mxu0 0.0
  %1299 = vmatprep.subr.mxu0 0.0
  %1300 = vmatpush2.msra.mxu0 0.0
  %1301 = vmatprep.subr.mxu0 0.0
  %1302 = vmatpush2.msra.mxu0 0.0
  %1303 = vmatprep.subr.mxu0 0.0
  %1304 = vmatpush2.msra.mxu0 0.0
  %1305 = vmatprep.subr.mxu0 0.0
  %1306 = vmatpush2.msra.mxu0 0.0
  %1307 = vmatprep.subr.mxu0 0.0
  %1308 = vmatpush2.msra.mxu0 0.0
  %1309 = vmatprep.subr.mxu0 0.0
  %1310 = vmatpush2.msra.mxu0 0.0
  %1311 = vmatprep.subr.mxu0 0.0
  %1312 = vmatpush2.msra.mxu0 0.0
  %1313 = vmatprep.subr.mxu0 0.0
  %1314 = vmatpush2.msra.mxu0 0.0
  %1315 = vmatprep.subr.mxu0 0.0
  %1316 = vmatpush2.msra.mxu0 0.0
  %1317 = vmatprep.mubr.f32.mxu0 0.0
  %1318 = vmatmul.mubr.f32.gmra.mxu0 %v1246
  %v1319 = vpop.f32.mrf.mxu0
  %v1320 = vadd.f32 0.0, %v1319
  %v1321 = vpop.f32.mrf.mxu0
  %v1322 = vadd.f32 0.0, %v1321
  %1323 = vdwg.mxu0
  %v1324 = vadd.f32 %v1250, %v1320
  %v1325 = vxor.u32 %v1324, 2147483648
  %v1326 = vmul.f32 %v1325, 1.442695
  %v1327 = vpow.pop %v1326
  %v1328 = vadd.f32 %v1327, 1.0
  %v1329 = vrcp.pop %v1328
  %v1330 = vmul.f32 1.0, %v1329
  %v1331 = vadd.f32 %v1251, %v1322
  %v1332 = vxor.u32 %v1331, 2147483648
  %v1333 = vmul.f32 %v1332, 1.442695
  %v1334 = vpow.pop %v1333
  %v1335 = vadd.f32 %v1334, 1.0
  %v1336 = vrcp.pop %v1335
  %v1337 = vmul.f32 1.0, %v1336
  %1338 = vmatprep.subr.mxu0 0.0
  %1339 = vmatpush1.msra.mxu0 %v73
  %1340 = vmatprep.subr.mxu0 0.0
  %1341 = vmatpush1.msra.mxu0 %v72
  %1342 = vmatprep.subr.mxu0 0.0
  %1343 = vmatpush1.msra.mxu0 %v71
  %1344 = vmatprep.subr.mxu0 0.0
  %1345 = vmatpush1.msra.mxu0 %v70
  %1346 = vmatprep.subr.mxu0 0.0
  %1347 = vmatpush1.msra.mxu0 %v69
  %1348 = vmatprep.subr.mxu0 0.0
  %1349 = vmatpush1.msra.mxu0 %v68
  %1350 = vmatprep.subr.mxu0 0.0
  %1351 = vmatpush1.msra.mxu0 %v67
  %1352 = vmatprep.subr.mxu0 0.0
  %1353 = vmatpush1.msra.mxu0 %v66
  %1354 = vmatprep.subr.mxu0 0.0
  %1355 = vmatpush1.msra.mxu0 %v65
  %1356 = vmatprep.subr.mxu0 0.0
  %1357 = vmatpush1.msra.mxu0 %v64
  %1358 = vmatprep.subr.mxu0 0.0
  %1359 = vmatpush1.msra.mxu0 %v63
  %1360 = vmatprep.subr.mxu0 0.0
  %1361 = vmatpush1.msra.mxu0 %v62
  %1362 = vmatprep.subr.mxu0 0.0
  %1363 = vmatpush1.msra.mxu0 %v61
  %1364 = vmatprep.subr.mxu0 0.0
  %1365 = vmatpush1.msra.mxu0 %v60
  %1366 = vmatprep.subr.mxu0 0.0
  %1367 = vmatpush1.msra.mxu0 %v59
  %1368 = vmatprep.subr.mxu0 0.0
  %1369 = vmatpush1.msra.mxu0 %v58
  %1370 = vmatprep.subr.mxu0 0.0
  %1371 = vmatpush2.msra.mxu0 0.0
  %1372 = vmatprep.subr.mxu0 0.0
  %1373 = vmatpush2.msra.mxu0 0.0
  %1374 = vmatprep.subr.mxu0 0.0
  %1375 = vmatpush2.msra.mxu0 0.0
  %1376 = vmatprep.subr.mxu0 0.0
  %1377 = vmatpush2.msra.mxu0 0.0
  %1378 = vmatprep.subr.mxu0 0.0
  %1379 = vmatpush2.msra.mxu0 0.0
  %1380 = vmatprep.subr.mxu0 0.0
  %1381 = vmatpush2.msra.mxu0 0.0
  %1382 = vmatprep.subr.mxu0 0.0
  %1383 = vmatpush2.msra.mxu0 0.0
  %1384 = vmatprep.subr.mxu0 0.0
  %1385 = vmatpush2.msra.mxu0 0.0
  %1386 = vmatprep.subr.mxu0 0.0
  %1387 = vmatpush2.msra.mxu0 0.0
  %1388 = vmatprep.subr.mxu0 0.0
  %1389 = vmatpush2.msra.mxu0 0.0
  %1390 = vmatprep.subr.mxu0 0.0
  %1391 = vmatpush2.msra.mxu0 0.0
  %1392 = vmatprep.subr.mxu0 0.0
  %1393 = vmatpush2.msra.mxu0 0.0
  %1394 = vmatprep.subr.mxu0 0.0
  %1395 = vmatpush2.msra.mxu0 0.0
  %1396 = vmatprep.subr.mxu0 0.0
  %1397 = vmatpush2.msra.mxu0 0.0
  %1398 = vmatprep.subr.mxu0 0.0
  %1399 = vmatpush2.msra.mxu0 0.0
  %1400 = vmatprep.subr.mxu0 0.0
  %1401 = vmatpush2.msra.mxu0 0.0
  %1402 = vmatprep.mubr.f32.mxu0 0.0
  %1403 = vmatmul.mubr.f32.gmra.mxu0 %v1246
  %v1404 = vpop.f32.mrf.mxu0
  %v1405 = vadd.f32 %v79, %v1404
  %v1406 = vpop.f32.mrf.mxu0
  %1407 = vdwg.mxu0
  %v1408 = vmul.f32 %v1330, %v1405
  %v1409 = vadd.f32 %v1252, %v1408
  %v1410 = vtanh.pop %v1409
  %v1411 = vsub.f32 %v1246, %v1410
  %v1412 = vmul.f32 %v1337, %v1411
  %v1413 = vadd.f32 %v1410, %v1412
  %s1414 = scalar_lea.vmem %s5, 56
  %1415 = vst [vmem:[%s1414] sm:$0xff] %v1413
  %1416 = vst [vmem:[#allocation2] sm:$0xff] %v1413
  // Predicated region
  $region26: #{decoder_forward.4} parent=0 // pred_check
    _
  $region27: #{decoder_forward.4} parent=0 // pred_check_branch
    %1418 = sbr.rel (0) target = $region29
  $region28: #{decoder_forward.4} parent=0 // pred_region
    _
  $region29: #{decoder_forward.4} parent=0 // pred_fallthru
    _
  // Predicated region
  $region30: #{decoder_forward.4} parent=0 // pred_check
    _
  $region31: #{decoder_forward.4} parent=0 // pred_check_branch
    %1420 = sbr.rel (0) target = $region33
  $region32: #{decoder_forward.4} parent=0 // pred_region
    _
  $region33: #{decoder_forward.4} parent=0 // pred_fallthru
    _

</llo_original>
